<compile_context>
chip_gen: v7x
topology: tpu7x:2x2x1
jax: 0.10.0
libtpu: 0.0.40
codegen_flags: <defaults>
</compile_context>

<pallas_src>
import functools

import jax
import jax.numpy as jnp
import numpy as np
from jax.experimental import pallas as pl
from jax.experimental.pallas import tpu as pltpu

_CHUNK = 1024   # points per inner step: 8 sublane-rows x 128 lanes
_LANES = 128


def _freq_bands(multires, log_sampling=True):
    max_freq = multires - 1
    if log_sampling:
        bands = 2.0 ** np.linspace(0.0, max_freq, num=multires)
    else:
        bands = np.linspace(2.0 ** 0.0, 2.0 ** max_freq, num=multires)
    return tuple(float(f) for f in bands)


def _round_up(a, b):
    return ((a + b - 1) // b) * b


def _cdiv(a, b):
    return -(-a // b)


def _pe_kernel(x_ref, o_ref, scr_ref, *, freqs, direct, include_input):
    # x_ref  : (D, block)         input coordinates, points on lanes
    # o_ref  : (block, F)         final point-major output tile (F = n_terms * D)
    # scr_ref: (SR, _CHUNK) f32   feature-major staging for one 1024-point chunk
    D, block = x_ref.shape
    F = o_ref.shape[1]
    SR = scr_ref.shape[0]
    n_chunks = block // _CHUNK
    n_groups = _CHUNK // _LANES
    odt = o_ref.dtype

    # Rows F..SR are never written by phase 1; give them defined values once so
    # the (sliced-away) padding columns of the transposed tile are harmless.
    if SR > F:
        scr_ref[F:SR, :] = jnp.zeros((SR - F, _CHUNK), jnp.float32)

    @pl.loop(0, n_chunks)
    def _chunk(ci):
        start = pl.multiple_of(ci * _CHUNK, _CHUNK)
        x = x_ref[:, pl.ds(start, _CHUNK)].astype(jnp.float32)   # (D, _CHUNK)

        # ---- phase 1: feature-major compute into the staging buffer ---------
        row = 0
        if include_input:
            scr_ref[0:D, :] = x
            row = D
        s = c = None
        for k, f in enumerate(freqs):
            if direct[k]:
                z = x * f
                s = jnp.sin(z)
                c = jnp.cos(z)
            else:
                # band k is exactly 2x band k-1: double-angle recurrence
                # (3 VPU ops instead of 2 transcendental evaluations).
                s, c = 2.0 * (s * c), 1.0 - 2.0 * (s * s)
            scr_ref[row:row + D, :] = s
            scr_ref[row + D:row + 2 * D, :] = c
            row += 2 * D

        # ---- phase 2: transpose each 128-point group to point-major ---------
        for g in range(n_groups):
            m = scr_ref[:, g * _LANES:(g + 1) * _LANES]   # (SR, 128)
            mt = jnp.transpose(m)                         # (128, SR) on the XLU
            dst = pl.multiple_of(start + g * _LANES, _LANES)
            o_ref[pl.ds(dst, _LANES), :] = mt[:, :F].astype(odt)


def positional_encoding(x, multires, include_input=True, log_sampling=True,
                        lane_tile=8192, sincos_resync=4, out_dtype=None):
    """NeRF positional encoding. x: [N, D] float. Returns [N, D*(include_input + 2*multires)].

    sincos_resync: every `sincos_resync`-th band uses a direct sin/cos; bands in
      between use the double-angle recurrence (only when consecutive bands are
      exactly 2x apart, i.e. log_sampling).  1 -> every band direct (reference-
      faithful), None -> recurrence only (fastest, error grows ~2x per octave).
    out_dtype: output dtype (default x.dtype); bf16 halves the dominant HBM
      write traffic, compute stays f32.
    """
    N, D = x.shape
    freqs = _freq_bands(multires, log_sampling)
    n_terms = (1 if include_input else 0) + 2 * len(freqs)
    F = n_terms * D
    out_dtype = np.dtype(x.dtype if out_dtype is None else out_dtype)
    in_dtype = np.dtype(x.dtype)

    # Which bands get a direct sin/cos evaluation.
    direct = []
    for k in range(len(freqs)):
        exact_double = k > 0 and freqs[k] == 2.0 * freqs[k - 1]
        resync = (sincos_resync is not None) and (k % max(int(sincos_resync), 1) == 0)
        direct.append(k == 0 or (not exact_double) or resync)
    direct = tuple(direct)

    # ---- block sizing -------------------------------------------------------
    lane_tile = max(_CHUNK, _round_up(int(lane_tile), _CHUNK))
    min_blocks = 2 if N >= 2 * _CHUNK else 1      # keep both v7x TensorCores busy
    n_blocks = max(min_blocks, _cdiv(N, lane_tile))
    block = min(lane_tile, _round_up(_cdiv(N, n_blocks), _CHUNK))
    assert block % _CHUNK == 0
    n_blocks = _cdiv(N, block)
    n_pad = n_blocks * block

    # Lane-dense input layout: coordinates on sublanes, points on lanes.
    xT = x.T
    if n_pad != N:
        xT = jnp.pad(xT, ((0, 0), (0, n_pad - N)))

    SR = _round_up(F, 8)
    kernel = functools.partial(_pe_kernel, freqs=freqs, direct=direct,
                               include_input=include_input)

    # VMEM footprint (double-buffered in/out tiles + staging scratch); only raise
    # the scoped-VMEM limit when a big lane_tile actually needs it (the default
    # block stays below v5e's 16 MiB default).
    in_tile = _round_up(D, 8) * block * in_dtype.itemsize
    out_tile = block * _round_up(F, _LANES) * out_dtype.itemsize
    vmem_est = 2 * in_tile + 2 * out_tile + SR * _CHUNK * 4
    compiler_kwargs = dict(dimension_semantics=("parallel",))
    if vmem_est > 15 * 1024 * 1024:
        compiler_kwargs["vmem_limit_bytes"] = min(int(vmem_est * 1.3), 64 * 1024 * 1024)

    n_direct = int(sum(direct))
    cost = pl.CostEstimate(
        flops=int(n_pad * D * (8 * len(freqs) + 2)),
        transcendentals=int(2 * n_direct * D * n_pad),
        bytes_accessed=int(D * n_pad * in_dtype.itemsize + n_pad * F * out_dtype.itemsize),
    )

    out = pl.pallas_call(
        kernel,
        out_shape=jax.ShapeDtypeStruct((n_pad, F), out_dtype),
        grid_spec=pltpu.PrefetchScalarGridSpec(
            num_scalar_prefetch=0,
            grid=(n_blocks,),
            in_specs=[pl.BlockSpec((D, block), lambda i: (0, i))],
            out_specs=pl.BlockSpec((block, F), lambda i: (i, 0)),
            scratch_shapes=[pltpu.VMEM((SR, _CHUNK), jnp.float32)],
        ),
        compiler_params=pltpu.CompilerParams(**compiler_kwargs),
        cost_estimate=cost,
    )(xT)

    if n_pad != N:
        out = out[:N]   # fuses into the consumer under jit
    return out


def positional_encoding_ref(x, multires, include_input=True, log_sampling=True):
    freqs = _freq_bands(multires, log_sampling)
    parts = [x] if include_input else []
    for f in freqs:
        parts.append(jnp.sin(x * f))
        parts.append(jnp.cos(x * f))
    return jnp.concatenate(parts, axis=-1)


if __name__ == "__main__":
    multires = 10
    input_dims = 3
    expected_F = input_dims * (1 + 2 * multires)

    key = jax.random.PRNGKey(0)

    # Case 1: N not a multiple of the 1024-point chunk (exercises padding + final
    # slice), default hybrid numerics (direct sin/cos every 4 bands).
    N1 = 2000
    x1 = jax.random.normal(key, (N1, input_dims), dtype=jnp.float32)
    ref1 = positional_encoding_ref(x1, multires)
    out1 = jax.block_until_ready(positional_encoding(x1, multires))
    assert out1.shape == (N1, expected_F), out1.shape
    np.testing.assert_allclose(np.asarray(out1), np.asarray(ref1), rtol=0, atol=5e-4)

    # Case 2: fully direct path (reference-faithful), N a multiple of the chunk,
    # 2-step "parallel" grid.
    N2 = 4096
    x2 = jax.random.normal(jax.random.PRNGKey(1), (N2, input_dims), dtype=jnp.float32)
    ref2 = positional_encoding_ref(x2, multires)
    out2 = jax.block_until_ready(positional_encoding(x2, multires, sincos_resync=1))
    assert out2.shape == (N2, expected_F), out2.shape
    np.testing.assert_allclose(np.asarray(out2), np.asarray(ref2), rtol=1e-5, atol=1e-5)

    # Case 3: bf16 output (halves the dominant HBM write traffic; compute stays f32).
    out3 = jax.block_until_ready(
        positional_encoding(x1, multires, out_dtype=jnp.bfloat16))
    assert out3.shape == (N1, expected_F) and out3.dtype == jnp.bfloat16
    np.testing.assert_allclose(np.asarray(out3).astype(np.float32), np.asarray(ref1),
                               rtol=0, atol=3e-2)

    print("KERNEL_OK")
</pallas_src>

<mosaic_0001>
module attributes {stable_mosaic.version = 11 : i64} {
  func.func @_pe_kernel(%arg0: i32, %arg1: memref<3x2048xf32, #tpu.memory_space<vmem>>, %arg2: memref<2048x63xf32, #tpu.memory_space<vmem>>, %arg3: memref<64x1024xf32, #tpu.memory_space<vmem>>) attributes {dimension_semantics = [#tpu.dimension_semantics<parallel>], iteration_bounds = array<i64: 1>, scalar_prefetch = 0 : i64, scratch_operands = 1 : i64, tpu.core_type = #tpu.core_type<tc>, window_params = [{transform_indices = @transform_0, window_bounds = array<i64: 3, 2048>}, {transform_indices = @transform_1, window_bounds = array<i64: 2048, 63>}]} {
    %cst = arith.constant 0.000000e+00 : f32
    %0 = vector.broadcast %cst : f32 to vector<1x1024xf32>
    %c63 = arith.constant 63 : index
    %c0 = arith.constant 0 : index
    %1 = vector.load %arg3[%c63, %c0] : memref<64x1024xf32, #tpu.memory_space<vmem>>, vector<1x1024xf32>
    tpu.vector_store %arg3[%c63, %c0], %0 {strides = array<i32>} : memref<64x1024xf32, #tpu.memory_space<vmem>>, vector<1x1024xf32>,
    %c0_i32 = arith.constant 0 : i32
    %c2_i32 = arith.constant 2 : i32
    %2 = arith.addi %c0_i32, %c2_i32 : i32
    %c1_i32 = arith.constant 1 : i32
    scf.for %arg4 = %c0_i32 to %2 step %c1_i32  : i32 {
      %c1_i32_1 = arith.constant 1 : i32
      %3 = arith.muli %arg4, %c1_i32_1 : i32
      %c0_i32_2 = arith.constant 0 : i32
      %4 = arith.addi %c0_i32_2, %3 : i32
      %c1024_i32 = arith.constant 1024 : i32
      %5 = arith.muli %4, %c1024_i32 : i32
      %6 = tpu.assume_multiple %5, 1024 : i32
      %c0_3 = arith.constant 0 : index
      %7 = arith.index_cast %6 : i32 to index
      %8 = vector.load %arg1[%c0_3, %7] : memref<3x2048xf32, #tpu.memory_space<vmem>>, vector<3x1024xf32>
      %c0_4 = arith.constant 0 : index
      %c0_5 = arith.constant 0 : index
      %9 = vector.load %arg3[%c0_4, %c0_5] : memref<64x1024xf32, #tpu.memory_space<vmem>>, vector<3x1024xf32>
      tpu.vector_store %arg3[%c0_4, %c0_5], %8 {strides = array<i32>} : memref<64x1024xf32, #tpu.memory_space<vmem>>, vector<3x1024xf32>,
      %cst_6 = arith.constant 1.000000e+00 : f32
      %10 = vector.broadcast %cst_6 : f32 to vector<3x1024xf32>
      %11 = arith.mulf %8, %10 : vector<3x1024xf32>
      %12 = math.sin %11 : vector<3x1024xf32>
      %13 = math.cos %11 : vector<3x1024xf32>
      %c3 = arith.constant 3 : index
      %c0_7 = arith.constant 0 : index
      %14 = vector.load %arg3[%c3, %c0_7] : memref<64x1024xf32, #tpu.memory_space<vmem>>, vector<3x1024xf32>
      tpu.vector_store %arg3[%c3, %c0_7], %12 {strides = array<i32>} : memref<64x1024xf32, #tpu.memory_space<vmem>>, vector<3x1024xf32>,
      %c6 = arith.constant 6 : index
      %c0_8 = arith.constant 0 : index
      %15 = vector.load %arg3[%c6, %c0_8] : memref<64x1024xf32, #tpu.memory_space<vmem>>, vector<3x1024xf32>
      tpu.vector_store %arg3[%c6, %c0_8], %13 {strides = array<i32>} : memref<64x1024xf32, #tpu.memory_space<vmem>>, vector<3x1024xf32>,
      %16 = arith.mulf %12, %13 : vector<3x1024xf32>
      %cst_9 = arith.constant 2.000000e+00 : f32
      %17 = vector.broadcast %cst_9 : f32 to vector<3x1024xf32>
      %18 = arith.mulf %17, %16 : vector<3x1024xf32>
      %19 = arith.mulf %12, %12 : vector<3x1024xf32>
      %cst_10 = arith.constant 2.000000e+00 : f32
      %20 = vector.broadcast %cst_10 : f32 to vector<3x1024xf32>
      %21 = arith.mulf %20, %19 : vector<3x1024xf32>
      %cst_11 = arith.constant 1.000000e+00 : f32
      %22 = vector.broadcast %cst_11 : f32 to vector<3x1024xf32>
      %23 = arith.subf %22, %21 : vector<3x1024xf32>
      %c9 = arith.constant 9 : index
      %c0_12 = arith.constant 0 : index
      %24 = vector.load %arg3[%c9, %c0_12] : memref<64x1024xf32, #tpu.memory_space<vmem>>, vector<3x1024xf32>
      tpu.vector_store %arg3[%c9, %c0_12], %18 {strides = array<i32>} : memref<64x1024xf32, #tpu.memory_space<vmem>>, vector<3x1024xf32>,
      %c12 = arith.constant 12 : index
      %c0_13 = arith.constant 0 : index
      %25 = vector.load %arg3[%c12, %c0_13] : memref<64x1024xf32, #tpu.memory_space<vmem>>, vector<3x1024xf32>
      tpu.vector_store %arg3[%c12, %c0_13], %23 {strides = array<i32>} : memref<64x1024xf32, #tpu.memory_space<vmem>>, vector<3x1024xf32>,
      %26 = arith.mulf %18, %23 : vector<3x1024xf32>
      %cst_14 = arith.constant 2.000000e+00 : f32
      %27 = vector.broadcast %cst_14 : f32 to vector<3x1024xf32>
      %28 = arith.mulf %27, %26 : vector<3x1024xf32>
      %29 = arith.mulf %18, %18 : vector<3x1024xf32>
      %cst_15 = arith.constant 2.000000e+00 : f32
      %30 = vector.broadcast %cst_15 : f32 to vector<3x1024xf32>
      %31 = arith.mulf %30, %29 : vector<3x1024xf32>
      %cst_16 = arith.constant 1.000000e+00 : f32
      %32 = vector.broadcast %cst_16 : f32 to vector<3x1024xf32>
      %33 = arith.subf %32, %31 : vector<3x1024xf32>
      %c15 = arith.constant 15 : index
      %c0_17 = arith.constant 0 : index
      %34 = vector.load %arg3[%c15, %c0_17] : memref<64x1024xf32, #tpu.memory_space<vmem>>, vector<3x1024xf32>
      tpu.vector_store %arg3[%c15, %c0_17], %28 {strides = array<i32>} : memref<64x1024xf32, #tpu.memory_space<vmem>>, vector<3x1024xf32>,
      %c18 = arith.constant 18 : index
      %c0_18 = arith.constant 0 : index
      %35 = vector.load %arg3[%c18, %c0_18] : memref<64x1024xf32, #tpu.memory_space<vmem>>, vector<3x1024xf32>
      tpu.vector_store %arg3[%c18, %c0_18], %33 {strides = array<i32>} : memref<64x1024xf32, #tpu.memory_space<vmem>>, vector<3x1024xf32>,
      %36 = arith.mulf %28, %33 : vector<3x1024xf32>
      %cst_19 = arith.constant 2.000000e+00 : f32
      %37 = vector.broadcast %cst_19 : f32 to vector<3x1024xf32>
      %38 = arith.mulf %37, %36 : vector<3x1024xf32>
      %39 = arith.mulf %28, %28 : vector<3x1024xf32>
      %cst_20 = arith.constant 2.000000e+00 : f32
      %40 = vector.broadcast %cst_20 : f32 to vector<3x1024xf32>
      %41 = arith.mulf %40, %39 : vector<3x1024xf32>
      %cst_21 = arith.constant 1.000000e+00 : f32
      %42 = vector.broadcast %cst_21 : f32 to vector<3x1024xf32>
      %43 = arith.subf %42, %41 : vector<3x1024xf32>
      %c21 = arith.constant 21 : index
      %c0_22 = arith.constant 0 : index
      %44 = vector.load %arg3[%c21, %c0_22] : memref<64x1024xf32, #tpu.memory_space<vmem>>, vector<3x1024xf32>
      tpu.vector_store %arg3[%c21, %c0_22], %38 {strides = array<i32>} : memref<64x1024xf32, #tpu.memory_space<vmem>>, vector<3x1024xf32>,
      %c24 = arith.constant 24 : index
      %c0_23 = arith.constant 0 : index
      %45 = vector.load %arg3[%c24, %c0_23] : memref<64x1024xf32, #tpu.memory_space<vmem>>, vector<3x1024xf32>
      tpu.vector_store %arg3[%c24, %c0_23], %43 {strides = array<i32>} : memref<64x1024xf32, #tpu.memory_space<vmem>>, vector<3x1024xf32>,
      %cst_24 = arith.constant 1.600000e+01 : f32
      %46 = vector.broadcast %cst_24 : f32 to vector<3x1024xf32>
      %47 = arith.mulf %8, %46 : vector<3x1024xf32>
      %48 = math.sin %47 : vector<3x1024xf32>
      %49 = math.cos %47 : vector<3x1024xf32>
      %c27 = arith.constant 27 : index
      %c0_25 = arith.constant 0 : index
      %50 = vector.load %arg3[%c27, %c0_25] : memref<64x1024xf32, #tpu.memory_space<vmem>>, vector<3x1024xf32>
      tpu.vector_store %arg3[%c27, %c0_25], %48 {strides = array<i32>} : memref<64x1024xf32, #tpu.memory_space<vmem>>, vector<3x1024xf32>,
      %c30 = arith.constant 30 : index
      %c0_26 = arith.constant 0 : index
      %51 = vector.load %arg3[%c30, %c0_26] : memref<64x1024xf32, #tpu.memory_space<vmem>>, vector<3x1024xf32>
      tpu.vector_store %arg3[%c30, %c0_26], %49 {strides = array<i32>} : memref<64x1024xf32, #tpu.memory_space<vmem>>, vector<3x1024xf32>,
      %52 = arith.mulf %48, %49 : vector<3x1024xf32>
      %cst_27 = arith.constant 2.000000e+00 : f32
      %53 = vector.broadcast %cst_27 : f32 to vector<3x1024xf32>
      %54 = arith.mulf %53, %52 : vector<3x1024xf32>
      %55 = arith.mulf %48, %48 : vector<3x1024xf32>
      %cst_28 = arith.constant 2.000000e+00 : f32
      %56 = vector.broadcast %cst_28 : f32 to vector<3x1024xf32>
      %57 = arith.mulf %56, %55 : vector<3x1024xf32>
      %cst_29 = arith.constant 1.000000e+00 : f32
      %58 = vector.broadcast %cst_29 : f32 to vector<3x1024xf32>
      %59 = arith.subf %58, %57 : vector<3x1024xf32>
      %c33 = arith.constant 33 : index
      %c0_30 = arith.constant 0 : index
      %60 = vector.load %arg3[%c33, %c0_30] : memref<64x1024xf32, #tpu.memory_space<vmem>>, vector<3x1024xf32>
      tpu.vector_store %arg3[%c33, %c0_30], %54 {strides = array<i32>} : memref<64x1024xf32, #tpu.memory_space<vmem>>, vector<3x1024xf32>,
      %c36 = arith.constant 36 : index
      %c0_31 = arith.constant 0 : index
      %61 = vector.load %arg3[%c36, %c0_31] : memref<64x1024xf32, #tpu.memory_space<vmem>>, vector<3x1024xf32>
      tpu.vector_store %arg3[%c36, %c0_31], %59 {strides = array<i32>} : memref<64x1024xf32, #tpu.memory_space<vmem>>, vector<3x1024xf32>,
      %62 = arith.mulf %54, %59 : vector<3x1024xf32>
      %cst_32 = arith.constant 2.000000e+00 : f32
      %63 = vector.broadcast %cst_32 : f32 to vector<3x1024xf32>
      %64 = arith.mulf %63, %62 : vector<3x1024xf32>
      %65 = arith.mulf %54, %54 : vector<3x1024xf32>
      %cst_33 = arith.constant 2.000000e+00 : f32
      %66 = vector.broadcast %cst_33 : f32 to vector<3x1024xf32>
      %67 = arith.mulf %66, %65 : vector<3x1024xf32>
      %cst_34 = arith.constant 1.000000e+00 : f32
      %68 = vector.broadcast %cst_34 : f32 to vector<3x1024xf32>
      %69 = arith.subf %68, %67 : vector<3x1024xf32>
      %c39 = arith.constant 39 : index
      %c0_35 = arith.constant 0 : index
      %70 = vector.load %arg3[%c39, %c0_35] : memref<64x1024xf32, #tpu.memory_space<vmem>>, vector<3x1024xf32>
      tpu.vector_store %arg3[%c39, %c0_35], %64 {strides = array<i32>} : memref<64x1024xf32, #tpu.memory_space<vmem>>, vector<3x1024xf32>,
      %c42 = arith.constant 42 : index
      %c0_36 = arith.constant 0 : index
      %71 = vector.load %arg3[%c42, %c0_36] : memref<64x1024xf32, #tpu.memory_space<vmem>>, vector<3x1024xf32>
      tpu.vector_store %arg3[%c42, %c0_36], %69 {strides = array<i32>} : memref<64x1024xf32, #tpu.memory_space<vmem>>, vector<3x1024xf32>,
      %72 = arith.mulf %64, %69 : vector<3x1024xf32>
      %cst_37 = arith.constant 2.000000e+00 : f32
      %73 = vector.broadcast %cst_37 : f32 to vector<3x1024xf32>
      %74 = arith.mulf %73, %72 : vector<3x1024xf32>
      %75 = arith.mulf %64, %64 : vector<3x1024xf32>
      %cst_38 = arith.constant 2.000000e+00 : f32
      %76 = vector.broadcast %cst_38 : f32 to vector<3x1024xf32>
      %77 = arith.mulf %76, %75 : vector<3x1024xf32>
      %cst_39 = arith.constant 1.000000e+00 : f32
      %78 = vector.broadcast %cst_39 : f32 to vector<3x1024xf32>
      %79 = arith.subf %78, %77 : vector<3x1024xf32>
      %c45 = arith.constant 45 : index
      %c0_40 = arith.constant 0 : index
      %80 = vector.load %arg3[%c45, %c0_40] : memref<64x1024xf32, #tpu.memory_space<vmem>>, vector<3x1024xf32>
      tpu.vector_store %arg3[%c45, %c0_40], %74 {strides = array<i32>} : memref<64x1024xf32, #tpu.memory_space<vmem>>, vector<3x1024xf32>,
      %c48 = arith.constant 48 : index
      %c0_41 = arith.constant 0 : index
      %81 = vector.load %arg3[%c48, %c0_41] : memref<64x1024xf32, #tpu.memory_space<vmem>>, vector<3x1024xf32>
      tpu.vector_store %arg3[%c48, %c0_41], %79 {strides = array<i32>} : memref<64x1024xf32, #tpu.memory_space<vmem>>, vector<3x1024xf32>,
      %cst_42 = arith.constant 2.560000e+02 : f32
      %82 = vector.broadcast %cst_42 : f32 to vector<3x1024xf32>
      %83 = arith.mulf %8, %82 : vector<3x1024xf32>
      %84 = math.sin %83 : vector<3x1024xf32>
      %85 = math.cos %83 : vector<3x1024xf32>
      %c51 = arith.constant 51 : index
      %c0_43 = arith.constant 0 : index
      %86 = vector.load %arg3[%c51, %c0_43] : memref<64x1024xf32, #tpu.memory_space<vmem>>, vector<3x1024xf32>
      tpu.vector_store %arg3[%c51, %c0_43], %84 {strides = array<i32>} : memref<64x1024xf32, #tpu.memory_space<vmem>>, vector<3x1024xf32>,
      %c54 = arith.constant 54 : index
      %c0_44 = arith.constant 0 : index
      %87 = vector.load %arg3[%c54, %c0_44] : memref<64x1024xf32, #tpu.memory_space<vmem>>, vector<3x1024xf32>
      tpu.vector_store %arg3[%c54, %c0_44], %85 {strides = array<i32>} : memref<64x1024xf32, #tpu.memory_space<vmem>>, vector<3x1024xf32>,
      %88 = arith.mulf %84, %85 : vector<3x1024xf32>
      %cst_45 = arith.constant 2.000000e+00 : f32
      %89 = vector.broadcast %cst_45 : f32 to vector<3x1024xf32>
      %90 = arith.mulf %89, %88 : vector<3x1024xf32>
      %91 = arith.mulf %84, %84 : vector<3x1024xf32>
      %cst_46 = arith.constant 2.000000e+00 : f32
      %92 = vector.broadcast %cst_46 : f32 to vector<3x1024xf32>
      %93 = arith.mulf %92, %91 : vector<3x1024xf32>
      %cst_47 = arith.constant 1.000000e+00 : f32
      %94 = vector.broadcast %cst_47 : f32 to vector<3x1024xf32>
      %95 = arith.subf %94, %93 : vector<3x1024xf32>
      %c57 = arith.constant 57 : index
      %c0_48 = arith.constant 0 : index
      %96 = vector.load %arg3[%c57, %c0_48] : memref<64x1024xf32, #tpu.memory_space<vmem>>, vector<3x1024xf32>
      tpu.vector_store %arg3[%c57, %c0_48], %90 {strides = array<i32>} : memref<64x1024xf32, #tpu.memory_space<vmem>>, vector<3x1024xf32>,
      %c60 = arith.constant 60 : index
      %c0_49 = arith.constant 0 : index
      %97 = vector.load %arg3[%c60, %c0_49] : memref<64x1024xf32, #tpu.memory_space<vmem>>, vector<3x1024xf32>
      tpu.vector_store %arg3[%c60, %c0_49], %95 {strides = array<i32>} : memref<64x1024xf32, #tpu.memory_space<vmem>>, vector<3x1024xf32>,
      %c0_50 = arith.constant 0 : index
      %c0_51 = arith.constant 0 : index
      %98 = vector.load %arg3[%c0_50, %c0_51] : memref<64x1024xf32, #tpu.memory_space<vmem>>, vector<64x128xf32>
      %99 = tpu.transpose %98, [1, 0] : vector<64x128xf32> -> vector<128x64xf32>
      %c0_i32_52 = arith.constant 0 : i32
      %100 = arith.addi %6, %c0_i32_52 : i32
      %101 = tpu.assume_multiple %100, 128 : i32
      %102 = vector.extract_strided_slice %99 {offsets = [0, 0], sizes = [128, 63], strides = [1, 1]} : vector<128x64xf32> to vector<128x63xf32>
      %103 = arith.index_cast %101 : i32 to index
      %c0_53 = arith.constant 0 : index
      %104 = vector.load %arg2[%103, %c0_53] : memref<2048x63xf32, #tpu.memory_space<vmem>>, vector<128x63xf32>
      tpu.vector_store %arg2[%103, %c0_53], %102 {strides = array<i32>} : memref<2048x63xf32, #tpu.memory_space<vmem>>, vector<128x63xf32>,
      %c0_54 = arith.constant 0 : index
      %c128 = arith.constant 128 : index
      %105 = vector.load %arg3[%c0_54, %c128] : memref<64x1024xf32, #tpu.memory_space<vmem>>, vector<64x128xf32>
      %106 = tpu.transpose %105, [1, 0] : vector<64x128xf32> -> vector<128x64xf32>
      %c128_i32 = arith.constant 128 : i32
      %107 = arith.addi %6, %c128_i32 : i32
      %108 = tpu.assume_multiple %107, 128 : i32
      %109 = vector.extract_strided_slice %106 {offsets = [0, 0], sizes = [128, 63], strides = [1, 1]} : vector<128x64xf32> to vector<128x63xf32>
      %110 = arith.index_cast %108 : i32 to index
      %c0_55 = arith.constant 0 : index
      %111 = vector.load %arg2[%110, %c0_55] : memref<2048x63xf32, #tpu.memory_space<vmem>>, vector<128x63xf32>
      tpu.vector_store %arg2[%110, %c0_55], %109 {strides = array<i32>} : memref<2048x63xf32, #tpu.memory_space<vmem>>, vector<128x63xf32>,
      %c0_56 = arith.constant 0 : index
      %c256 = arith.constant 256 : index
      %112 = vector.load %arg3[%c0_56, %c256] : memref<64x1024xf32, #tpu.memory_space<vmem>>, vector<64x128xf32>
      %113 = tpu.transpose %112, [1, 0] : vector<64x128xf32> -> vector<128x64xf32>
      %c256_i32 = arith.constant 256 : i32
      %114 = arith.addi %6, %c256_i32 : i32
      %115 = tpu.assume_multiple %114, 128 : i32
      %116 = vector.extract_strided_slice %113 {offsets = [0, 0], sizes = [128, 63], strides = [1, 1]} : vector<128x64xf32> to vector<128x63xf32>
      %117 = arith.index_cast %115 : i32 to index
      %c0_57 = arith.constant 0 : index
      %118 = vector.load %arg2[%117, %c0_57] : memref<2048x63xf32, #tpu.memory_space<vmem>>, vector<128x63xf32>
      tpu.vector_store %arg2[%117, %c0_57], %116 {strides = array<i32>} : memref<2048x63xf32, #tpu.memory_space<vmem>>, vector<128x63xf32>,
      %c0_58 = arith.constant 0 : index
      %c384 = arith.constant 384 : index
      %119 = vector.load %arg3[%c0_58, %c384] : memref<64x1024xf32, #tpu.memory_space<vmem>>, vector<64x128xf32>
      %120 = tpu.transpose %119, [1, 0] : vector<64x128xf32> -> vector<128x64xf32>
      %c384_i32 = arith.constant 384 : i32
      %121 = arith.addi %6, %c384_i32 : i32
      %122 = tpu.assume_multiple %121, 128 : i32
      %123 = vector.extract_strided_slice %120 {offsets = [0, 0], sizes = [128, 63], strides = [1, 1]} : vector<128x64xf32> to vector<128x63xf32>
      %124 = arith.index_cast %122 : i32 to index
      %c0_59 = arith.constant 0 : index
      %125 = vector.load %arg2[%124, %c0_59] : memref<2048x63xf32, #tpu.memory_space<vmem>>, vector<128x63xf32>
      tpu.vector_store %arg2[%124, %c0_59], %123 {strides = array<i32>} : memref<2048x63xf32, #tpu.memory_space<vmem>>, vector<128x63xf32>,
      %c0_60 = arith.constant 0 : index
      %c512 = arith.constant 512 : index
      %126 = vector.load %arg3[%c0_60, %c512] : memref<64x1024xf32, #tpu.memory_space<vmem>>, vector<64x128xf32>
      %127 = tpu.transpose %126, [1, 0] : vector<64x128xf32> -> vector<128x64xf32>
      %c512_i32 = arith.constant 512 : i32
      %128 = arith.addi %6, %c512_i32 : i32
      %129 = tpu.assume_multiple %128, 128 : i32
      %130 = vector.extract_strided_slice %127 {offsets = [0, 0], sizes = [128, 63], strides = [1, 1]} : vector<128x64xf32> to vector<128x63xf32>
      %131 = arith.index_cast %129 : i32 to index
      %c0_61 = arith.constant 0 : index
      %132 = vector.load %arg2[%131, %c0_61] : memref<2048x63xf32, #tpu.memory_space<vmem>>, vector<128x63xf32>
      tpu.vector_store %arg2[%131, %c0_61], %130 {strides = array<i32>} : memref<2048x63xf32, #tpu.memory_space<vmem>>, vector<128x63xf32>,
      %c0_62 = arith.constant 0 : index
      %c640 = arith.constant 640 : index
      %133 = vector.load %arg3[%c0_62, %c640] : memref<64x1024xf32, #tpu.memory_space<vmem>>, vector<64x128xf32>
      %134 = tpu.transpose %133, [1, 0] : vector<64x128xf32> -> vector<128x64xf32>
      %c640_i32 = arith.constant 640 : i32
      %135 = arith.addi %6, %c640_i32 : i32
      %136 = tpu.assume_multiple %135, 128 : i32
      %137 = vector.extract_strided_slice %134 {offsets = [0, 0], sizes = [128, 63], strides = [1, 1]} : vector<128x64xf32> to vector<128x63xf32>
      %138 = arith.index_cast %136 : i32 to index
      %c0_63 = arith.constant 0 : index
      %139 = vector.load %arg2[%138, %c0_63] : memref<2048x63xf32, #tpu.memory_space<vmem>>, vector<128x63xf32>
      tpu.vector_store %arg2[%138, %c0_63], %137 {strides = array<i32>} : memref<2048x63xf32, #tpu.memory_space<vmem>>, vector<128x63xf32>,
      %c0_64 = arith.constant 0 : index
      %c768 = arith.constant 768 : index
      %140 = vector.load %arg3[%c0_64, %c768] : memref<64x1024xf32, #tpu.memory_space<vmem>>, vector<64x128xf32>
      %141 = tpu.transpose %140, [1, 0] : vector<64x128xf32> -> vector<128x64xf32>
      %c768_i32 = arith.constant 768 : i32
      %142 = arith.addi %6, %c768_i32 : i32
      %143 = tpu.assume_multiple %142, 128 : i32
      %144 = vector.extract_strided_slice %141 {offsets = [0, 0], sizes = [128, 63], strides = [1, 1]} : vector<128x64xf32> to vector<128x63xf32>
      %145 = arith.index_cast %143 : i32 to index
      %c0_65 = arith.constant 0 : index
      %146 = vector.load %arg2[%145, %c0_65] : memref<2048x63xf32, #tpu.memory_space<vmem>>, vector<128x63xf32>
      tpu.vector_store %arg2[%145, %c0_65], %144 {strides = array<i32>} : memref<2048x63xf32, #tpu.memory_space<vmem>>, vector<128x63xf32>,
      %c0_66 = arith.constant 0 : index
      %c896 = arith.constant 896 : index
      %147 = vector.load %arg3[%c0_66, %c896] : memref<64x1024xf32, #tpu.memory_space<vmem>>, vector<64x128xf32>
      %148 = tpu.transpose %147, [1, 0] : vector<64x128xf32> -> vector<128x64xf32>
      %c896_i32 = arith.constant 896 : i32
      %149 = arith.addi %6, %c896_i32 : i32
      %150 = tpu.assume_multiple %149, 128 : i32
      %151 = vector.extract_strided_slice %148 {offsets = [0, 0], sizes = [128, 63], strides = [1, 1]} : vector<128x64xf32> to vector<128x63xf32>
      %152 = arith.index_cast %150 : i32 to index
      %c0_67 = arith.constant 0 : index
      %153 = vector.load %arg2[%152, %c0_67] : memref<2048x63xf32, #tpu.memory_space<vmem>>, vector<128x63xf32>
      tpu.vector_store %arg2[%152, %c0_67], %151 {strides = array<i32>} : memref<2048x63xf32, #tpu.memory_space<vmem>>, vector<128x63xf32>,
    }
    %c2_i32_0 = arith.constant 2 : i32
    return
  }
  func.func @transform_0(%arg0: i32) -> (i32, i32) {
    %c0_i32 = arith.constant 0 : i32
    %c0_i32_0 = arith.constant 0 : i32
    return %c0_i32, %arg0 : i32, i32
  }
  func.func @transform_1(%arg0: i32) -> (i32, i32) {
    %c0_i32 = arith.constant 0 : i32
    %c0_i32_0 = arith.constant 0 : i32
    return %arg0, %c0_i32 : i32, i32
  }
}

</mosaic_0001>

<llo_original>
// kernel: tpu_custom_call.1
$region0: #{tpu_custom_call.1}
  #allocation0 [shape = 'u32[]', space=smem, size = 0x4, offset = 0x4, fixed_abs, tag = 'smem constant byte address 0x4 - core index']
  #allocation1 [shape = 'u32[144,128]{1,0:T(1,128)}', space=vmem, size = 0x12000, scoped, tag = 'internal scratch']
  #allocation2 [shape = 'f32[64,1024]{1,0:T(8,128)}', space=vmem, size = 0x40000, scoped, tag = 'scratch operand']
  %s0 = inlined_call_operand.hbm [shape: f32[3,2048], index: 0, kind: input, shape index: {}]
  %s1 = inlined_call_operand.vmem [shape: f32[2048,63], index: 1, kind: output, shape index: {}]
  %s2 = sld [smem:[#allocation0]]
  $region25: #{tpu_custom_call.1} parent=0
    _
  %s4 = ssub.s32 1, %s2
  %s5 = scalar_select 0, %s4, %s2
  $region1: #{tpu_custom_call.1} parent=0
    #allocation3 [shape = 'u8[32768]{0}', space=vmem, size = 0x8000, scoped, tag = 'input window, operand 0, single buffered']
    #allocation4 [shape = 's32[1]{0}', space=sflag, size = 0x4, scoped, tag = 'scoped memory for tpu_custom_call.1']
    %6 = vsyncpa [#allocation4], 0
    // Predicated region
    $region2: #{tpu_custom_call.1} parent=1 // pred_check
      _
    $region3: #{tpu_custom_call.1} parent=1 // pred_check_branch
      %8 = sbr.rel (0) target = $region5
    $region4: #{tpu_custom_call.1} parent=1 // pred_region
      %s10 = ssub.s32 1024, 1024
      %11 = vsyncadd [#allocation4], %s10
      %s13 = sshll.u32 [#allocation3], 4
      %s14 = int_to_ptr.vmem [resolvable:$true] %s13
      %16 = dma.hbm_to_vmem [thread:$0]  %s0, 1024, %s14, [#allocation4]
    $region5: #{tpu_custom_call.1} parent=1 // pred_fallthru
      _
    // Predicated region
    $region6: #{tpu_custom_call.1} parent=1 // pred_check
      _
    $region7: #{tpu_custom_call.1} parent=1 // pred_check_branch
      %18 = sbr.rel (0) target = $region9
    $region8: #{tpu_custom_call.1} parent=1 // pred_region
      %19 = dma.done [#allocation4], 1024
    $region9: #{tpu_custom_call.1} parent=1 // pred_fallthru
      _
    %s20 = scalar_lea.vmem [#allocation2], 455
    %21 = vst [vmem:[%s20] ss:$8 sm:$0xf] 0.0
    %22 = vst [vmem:[%s20] ss:$8 sm:$0xf0] 0.0
    loop: start=0, step=1, limit=2
    $region10: #{tpu_custom_call.1} parent=1 // loop_pre_header
      _
    $region11: #{tpu_custom_call.1} parent=1 // loop_header
      %s24 = sphi 0, %s28
      %p25 = scmp.ge.s32.totalorder %s24, 2
    $region12: #{tpu_custom_call.1} parent=1 // loop_header_branch
      %27 = sbr.rel (%p25) target = $region16
    $region13: #{tpu_custom_call.1} parent=1 // loop_body
      %s29 = smul.u32 %s24, 1024
      %s30 = sshra.s32 %s29, 7
      %s31 = sand.u32 %s29, 127
      %s32 = smul.addr %s30, 4
      %s33 = scalar_lea.vmem [#allocation3], %s32
      %v34 = vld [vmem:[%s33] sm:$0x77]
      %v35 = vld [vmem:[%s33 + $0x8] sm:$0x77]
      %v36 = vld [vmem:[%s33 + $0x10] sm:$0x77]
      %v37 = vld [vmem:[%s33 + $0x18] sm:$0x77]
      %v42 = vcombine.high %v34, %v34
      %v43 = vcombine.high %v35, %v35
      %v44 = vcombine.high %v36, %v36
      %v45 = vcombine.high %v37, %v37
      %50 = vst [vmem:[#allocation2] sm:$0x7] %v34
      %51 = vst [vmem:[#allocation2 + $0x8] sm:$0x7] %v42
      %52 = vst [vmem:[#allocation2 + $0x10] sm:$0x7] %v35
      %53 = vst [vmem:[#allocation2 + $0x18] sm:$0x7] %v43
      %54 = vst [vmem:[#allocation2 + $0x20] sm:$0x7] %v36
      %55 = vst [vmem:[#allocation2 + $0x28] sm:$0x7] %v44
      %56 = vst [vmem:[#allocation2 + $0x30] sm:$0x7] %v37
      %57 = vst [vmem:[#allocation2 + $0x38] sm:$0x7] %v45
      %v58 = vand.u32 2147483647, %v34
      %vm59 = vcmp.le.f32.partialorder %v58, 0.7853982
      %vm60 = vcmp.lt.s32.totalorder %v34, 0
      %v61 = vand.u32 %v34, 2139095040
      %v62 = vshrl.u32 %v61, 23
      %v63 = vsub.s32 %v62, 127
      %v64 = vand.u32 2147483647, %v34
      %v65 = vand.u32 %v64, 8388607
      %v66 = vor.u32 %v65, 8388608
      %v67 = vsub.s32 0, %v66
      %v68 = vadd.s32 %v63, 1
      %vm69 = vcmp.gt.s32.totalorder %v68, 0
      %v70 = vsel %vm69, %v68, 0
      %v71 = vshrl.u32 %v70, 5
      %v72 = vand.u32 %v70, 31
      %v73 = vsub.s32 32, %v72
      %v74 = vshrl.u32 683565275, %v73
      %v75 = vshll.u32 683565275, %v72
      %v76 = vshrl.u32 2475754826, %v73
      %v77 = vor.u32 %v75, %v76
      %v78 = vshll.u32 2475754826, %v72
      %v79 = vshrl.u32 2131351028, %v73
      %v80 = vor.u32 %v78, %v79
      %v81 = vshll.u32 2131351028, %v72
      %v82 = vshrl.u32 2102212464, %v73
      %v83 = vor.u32 %v81, %v82
      %v84 = vshll.u32 2102212464, %v72
      %v85 = vshrl.u32 920167782, %v73
      %v86 = vor.u32 %v84, %v85
      %v87 = vshll.u32 920167782, %v72
      %v88 = vshrl.u32 1326507024, %v73
      %v89 = vor.u32 %v87, %v88
      %vm90 = vcmp.lt.s32.totalorder %v71, 1
      %vm91 = vcmp.lt.s32.totalorder %v71, 2
      %vm92 = vcmp.lt.s32.totalorder %v71, 3
      %vm93 = vcmp.lt.s32.totalorder %v71, 4
      %v94 = vsel %vm90, %v74, %v77
      %v95 = vsel %vm93, %v83, 2102212464
      %v96 = vsel %vm92, %v80, %v95
      %v97 = vsel %vm91, %v94, %v96
      %v98 = vsel %vm90, %v77, %v80
      %v99 = vsel %vm93, %v86, 920167782
      %v100 = vsel %vm92, %v83, %v99
      %v101 = vsel %vm91, %v98, %v100
      %v102 = vsel %vm90, %v80, %v83
      %v103 = vsel %vm93, %v89, 1326507024
      %v104 = vsel %vm92, %v86, %v103
      %v105 = vsel %vm91, %v102, %v104
      %v106 = vshll.u32 %v66, 8
      %v107 = vmul.u32.u64.compose %v106, %v105
      %v108 = vextract.low.u32 %v107
      %v109 = vextract.high.u32 %v107
      %v110 = vmul.u32.u64.compose %v106, %v101
      %v111 = vextract.low.u32 %v110
      %v112 = vextract.high.u32 %v110
      %v113 = vmul.u32 %v106, %v97
      %v114 = vadd.s32 %v109, %v111
      %vm115 = vc.u32 %v109, %v111
      %v116 = vadd.s32 %v112, 1
      %v117 = vsel %vm115, %v116, %v112
      %v118 = vadd.s32 %v113, %v117
      %v119 = vadd.s32 %v118, 536870912
      %v120 = vshrl.u32 %v119, 30
      %v121 = vshll.u32 %v120, 30
      %v122 = vsub.s32 %v118, %v121
      %vm123 = vcmp.lt.s32.totalorder %v122, 0
      %v124 = vsub.s32 0, %v122
      %v125 = vsel %vm123, %v124, %v122
      %v126 = vclz %v125
      %v127 = vsub.s32 %v126, 2
      %vm128 = vcmp.gt.s32.totalorder 0, %v127
      %v129 = vsel %vm128, 0, %v127
      %v130 = vsub.s32 32, %v129
      %v131 = vshll.u32 %v122, %v129
      %v132 = vshrl.u32 %v114, %v130
      %v133 = vor.u32 %v131, %v132
      %v134 = vsub.s32 4294967266, %v129
      %v135 = vadd.s32 %v134, 127
      %v136 = vshll.u32 %v135, 23
      %v137 = vor.u32 4788187, %v136
      %v138 = vand.u32 2147483647, %v137
      %v140 = vcvt.s32.f32 %v133
      %v141 = vmul.f32 %v140, %v138
      %v142 = vxor.u32 %v141, 2147483648
      %v143 = vsel %vm60, %v142, %v141
      %v144 = vsub.s32 4, %v120
      %v145 = vsel %vm60, %v144, %v120
      %v146 = vsel %vm59, %v34, %v143
      %v147 = vsel %vm59, 0, %v145
      %v148 = vcosq.f32.pop %v146
      %v149 = vsinq.f32.pop %v146
      %vm150 = vweird.f32 %v34
      %v151 = vadd.s32 %v147, 3
      %v152 = vand.u32 %v151, 3
      %vm153 = vcmp.lt.s32.totalorder %v152, 2
      %vm154 = vcmp.eq.s32.totalorder %v152, 0
      %v155 = vxor.u32 %v149, 2147483648
      %v156 = vsel %vm154, %v148, %v155
      %vm157 = vcmp.eq.s32.totalorder %v152, 2
      %v158 = vxor.u32 %v148, 2147483648
      %v159 = vsel %vm157, %v158, %v149
      %v160 = vsel %vm153, %v156, %v159
      %v161 = vsel %vm150, nan, %v160
      %v162 = vand.u32 2147483647, %v35
      %vm163 = vcmp.le.f32.partialorder %v162, 0.7853982
      %vm164 = vcmp.lt.s32.totalorder %v35, 0
      %v165 = vand.u32 %v35, 2139095040
      %v166 = vshrl.u32 %v165, 23
      %v167 = vsub.s32 %v166, 127
      %v168 = vand.u32 2147483647, %v35
      %v169 = vand.u32 %v168, 8388607
      %v170 = vor.u32 %v169, 8388608
      %v171 = vsub.s32 0, %v170
      %v172 = vadd.s32 %v167, 1
      %vm173 = vcmp.gt.s32.totalorder %v172, 0
      %v174 = vsel %vm173, %v172, 0
      %v175 = vshrl.u32 %v174, 5
      %v176 = vand.u32 %v174, 31
      %v177 = vsub.s32 32, %v176
      %v178 = vshrl.u32 683565275, %v177
      %v179 = vshll.u32 683565275, %v176
      %v180 = vshrl.u32 2475754826, %v177
      %v181 = vor.u32 %v179, %v180
      %v182 = vshll.u32 2475754826, %v176
      %v183 = vshrl.u32 2131351028, %v177
      %v184 = vor.u32 %v182, %v183
      %v185 = vshll.u32 2131351028, %v176
      %v186 = vshrl.u32 2102212464, %v177
      %v187 = vor.u32 %v185, %v186
      %v188 = vshll.u32 2102212464, %v176
      %v189 = vshrl.u32 920167782, %v177
      %v190 = vor.u32 %v188, %v189
      %v191 = vshll.u32 920167782, %v176
      %v192 = vshrl.u32 1326507024, %v177
      %v193 = vor.u32 %v191, %v192
      %vm194 = vcmp.lt.s32.totalorder %v175, 1
      %vm195 = vcmp.lt.s32.totalorder %v175, 2
      %vm196 = vcmp.lt.s32.totalorder %v175, 3
      %vm197 = vcmp.lt.s32.totalorder %v175, 4
      %v198 = vsel %vm194, %v178, %v181
      %v199 = vsel %vm197, %v187, 2102212464
      %v200 = vsel %vm196, %v184, %v199
      %v201 = vsel %vm195, %v198, %v200
      %v202 = vsel %vm194, %v181, %v184
      %v203 = vsel %vm197, %v190, 920167782
      %v204 = vsel %vm196, %v187, %v203
      %v205 = vsel %vm195, %v202, %v204
      %v206 = vsel %vm194, %v184, %v187
      %v207 = vsel %vm197, %v193, 1326507024
      %v208 = vsel %vm196, %v190, %v207
      %v209 = vsel %vm195, %v206, %v208
      %v210 = vshll.u32 %v170, 8
      %v211 = vmul.u32.u64.compose %v210, %v209
      %v212 = vextract.low.u32 %v211
      %v213 = vextract.high.u32 %v211
      %v214 = vmul.u32.u64.compose %v210, %v205
      %v215 = vextract.low.u32 %v214
      %v216 = vextract.high.u32 %v214
      %v217 = vmul.u32 %v210, %v201
      %v218 = vadd.s32 %v213, %v215
      %vm219 = vc.u32 %v213, %v215
      %v220 = vadd.s32 %v216, 1
      %v221 = vsel %vm219, %v220, %v216
      %v222 = vadd.s32 %v217, %v221
      %v223 = vadd.s32 %v222, 536870912
      %v224 = vshrl.u32 %v223, 30
      %v225 = vshll.u32 %v224, 30
      %v226 = vsub.s32 %v222, %v225
      %vm227 = vcmp.lt.s32.totalorder %v226, 0
      %v228 = vsub.s32 0, %v226
      %v229 = vsel %vm227, %v228, %v226
      %v230 = vclz %v229
      %v231 = vsub.s32 %v230, 2
      %vm232 = vcmp.gt.s32.totalorder 0, %v231
      %v233 = vsel %vm232, 0, %v231
      %v234 = vsub.s32 32, %v233
      %v235 = vshll.u32 %v226, %v233
      %v236 = vshrl.u32 %v218, %v234
      %v237 = vor.u32 %v235, %v236
      %v238 = vsub.s32 4294967266, %v233
      %v239 = vadd.s32 %v238, 127
      %v240 = vshll.u32 %v239, 23
      %v241 = vor.u32 4788187, %v240
      %v242 = vand.u32 2147483647, %v241
      %v244 = vcvt.s32.f32 %v237
      %v245 = vmul.f32 %v244, %v242
      %v246 = vxor.u32 %v245, 2147483648
      %v247 = vsel %vm164, %v246, %v245
      %v248 = vsub.s32 4, %v224
      %v249 = vsel %vm164, %v248, %v224
      %v250 = vsel %vm163, %v35, %v247
      %v251 = vsel %vm163, 0, %v249
      %v252 = vcosq.f32.pop %v250
      %v253 = vsinq.f32.pop %v250
      %vm254 = vweird.f32 %v35
      %v255 = vadd.s32 %v251, 3
      %v256 = vand.u32 %v255, 3
      %vm257 = vcmp.lt.s32.totalorder %v256, 2
      %vm258 = vcmp.eq.s32.totalorder %v256, 0
      %v259 = vxor.u32 %v253, 2147483648
      %v260 = vsel %vm258, %v252, %v259
      %vm261 = vcmp.eq.s32.totalorder %v256, 2
      %v262 = vxor.u32 %v252, 2147483648
      %v263 = vsel %vm261, %v262, %v253
      %v264 = vsel %vm257, %v260, %v263
      %v265 = vsel %vm254, nan, %v264
      %v266 = vand.u32 2147483647, %v36
      %vm267 = vcmp.le.f32.partialorder %v266, 0.7853982
      %vm268 = vcmp.lt.s32.totalorder %v36, 0
      %v269 = vand.u32 %v36, 2139095040
      %v270 = vshrl.u32 %v269, 23
      %v271 = vsub.s32 %v270, 127
      %v272 = vand.u32 2147483647, %v36
      %v273 = vand.u32 %v272, 8388607
      %v274 = vor.u32 %v273, 8388608
      %v275 = vsub.s32 0, %v274
      %v276 = vadd.s32 %v271, 1
      %vm277 = vcmp.gt.s32.totalorder %v276, 0
      %v278 = vsel %vm277, %v276, 0
      %v279 = vshrl.u32 %v278, 5
      %v280 = vand.u32 %v278, 31
      %v281 = vsub.s32 32, %v280
      %v282 = vshrl.u32 683565275, %v281
      %v283 = vshll.u32 683565275, %v280
      %v284 = vshrl.u32 2475754826, %v281
      %v285 = vor.u32 %v283, %v284
      %v286 = vshll.u32 2475754826, %v280
      %v287 = vshrl.u32 2131351028, %v281
      %v288 = vor.u32 %v286, %v287
      %v289 = vshll.u32 2131351028, %v280
      %v290 = vshrl.u32 2102212464, %v281
      %v291 = vor.u32 %v289, %v290
      %v292 = vshll.u32 2102212464, %v280
      %v293 = vshrl.u32 920167782, %v281
      %v294 = vor.u32 %v292, %v293
      %v295 = vshll.u32 920167782, %v280
      %v296 = vshrl.u32 1326507024, %v281
      %v297 = vor.u32 %v295, %v296
      %vm298 = vcmp.lt.s32.totalorder %v279, 1
      %vm299 = vcmp.lt.s32.totalorder %v279, 2
      %vm300 = vcmp.lt.s32.totalorder %v279, 3
      %vm301 = vcmp.lt.s32.totalorder %v279, 4
      %v302 = vsel %vm298, %v282, %v285
      %v303 = vsel %vm301, %v291, 2102212464
      %v304 = vsel %vm300, %v288, %v303
      %v305 = vsel %vm299, %v302, %v304
      %v306 = vsel %vm298, %v285, %v288
      %v307 = vsel %vm301, %v294, 920167782
      %v308 = vsel %vm300, %v291, %v307
      %v309 = vsel %vm299, %v306, %v308
      %v310 = vsel %vm298, %v288, %v291
      %v311 = vsel %vm301, %v297, 1326507024
      %v312 = vsel %vm300, %v294, %v311
      %v313 = vsel %vm299, %v310, %v312
      %v314 = vshll.u32 %v274, 8
      %v315 = vmul.u32.u64.compose %v314, %v313
      %v316 = vextract.low.u32 %v315
      %v317 = vextract.high.u32 %v315
      %v318 = vmul.u32.u64.compose %v314, %v309
      %v319 = vextract.low.u32 %v318
      %v320 = vextract.high.u32 %v318
      %v321 = vmul.u32 %v314, %v305
      %v322 = vadd.s32 %v317, %v319
      %vm323 = vc.u32 %v317, %v319
      %v324 = vadd.s32 %v320, 1
      %v325 = vsel %vm323, %v324, %v320
      %v326 = vadd.s32 %v321, %v325
      %v327 = vadd.s32 %v326, 536870912
      %v328 = vshrl.u32 %v327, 30
      %v329 = vshll.u32 %v328, 30
      %v330 = vsub.s32 %v326, %v329
      %vm331 = vcmp.lt.s32.totalorder %v330, 0
      %v332 = vsub.s32 0, %v330
      %v333 = vsel %vm331, %v332, %v330
      %v334 = vclz %v333
      %v335 = vsub.s32 %v334, 2
      %vm336 = vcmp.gt.s32.totalorder 0, %v335
      %v337 = vsel %vm336, 0, %v335
      %v338 = vsub.s32 32, %v337
      %v339 = vshll.u32 %v330, %v337
      %v340 = vshrl.u32 %v322, %v338
      %v341 = vor.u32 %v339, %v340
      %v342 = vsub.s32 4294967266, %v337
      %v343 = vadd.s32 %v342, 127
      %v344 = vshll.u32 %v343, 23
      %v345 = vor.u32 4788187, %v344
      %v346 = vand.u32 2147483647, %v345
      %v348 = vcvt.s32.f32 %v341
      %v349 = vmul.f32 %v348, %v346
      %v350 = vxor.u32 %v349, 2147483648
      %v351 = vsel %vm268, %v350, %v349
      %v352 = vsub.s32 4, %v328
      %v353 = vsel %vm268, %v352, %v328
      %v354 = vsel %vm267, %v36, %v351
      %v355 = vsel %vm267, 0, %v353
      %v356 = vcosq.f32.pop %v354
      %v357 = vsinq.f32.pop %v354
      %vm358 = vweird.f32 %v36
      %v359 = vadd.s32 %v355, 3
      %v360 = vand.u32 %v359, 3
      %vm361 = vcmp.lt.s32.totalorder %v360, 2
      %vm362 = vcmp.eq.s32.totalorder %v360, 0
      %v363 = vxor.u32 %v357, 2147483648
      %v364 = vsel %vm362, %v356, %v363
      %vm365 = vcmp.eq.s32.totalorder %v360, 2
      %v366 = vxor.u32 %v356, 2147483648
      %v367 = vsel %vm365, %v366, %v357
      %v368 = vsel %vm361, %v364, %v367
      %v369 = vsel %vm358, nan, %v368
      %v370 = vand.u32 2147483647, %v37
      %vm371 = vcmp.le.f32.partialorder %v370, 0.7853982
      %vm372 = vcmp.lt.s32.totalorder %v37, 0
      %v373 = vand.u32 %v37, 2139095040
      %v374 = vshrl.u32 %v373, 23
      %v375 = vsub.s32 %v374, 127
      %v376 = vand.u32 2147483647, %v37
      %v377 = vand.u32 %v376, 8388607
      %v378 = vor.u32 %v377, 8388608
      %v379 = vsub.s32 0, %v378
      %v380 = vadd.s32 %v375, 1
      %vm381 = vcmp.gt.s32.totalorder %v380, 0
      %v382 = vsel %vm381, %v380, 0
      %v383 = vshrl.u32 %v382, 5
      %v384 = vand.u32 %v382, 31
      %v385 = vsub.s32 32, %v384
      %v386 = vshrl.u32 683565275, %v385
      %v387 = vshll.u32 683565275, %v384
      %v388 = vshrl.u32 2475754826, %v385
      %v389 = vor.u32 %v387, %v388
      %v390 = vshll.u32 2475754826, %v384
      %v391 = vshrl.u32 2131351028, %v385
      %v392 = vor.u32 %v390, %v391
      %v393 = vshll.u32 2131351028, %v384
      %v394 = vshrl.u32 2102212464, %v385
      %v395 = vor.u32 %v393, %v394
      %v396 = vshll.u32 2102212464, %v384
      %v397 = vshrl.u32 920167782, %v385
      %v398 = vor.u32 %v396, %v397
      %v399 = vshll.u32 920167782, %v384
      %v400 = vshrl.u32 1326507024, %v385
      %v401 = vor.u32 %v399, %v400
      %vm402 = vcmp.lt.s32.totalorder %v383, 1
      %vm403 = vcmp.lt.s32.totalorder %v383, 2
      %vm404 = vcmp.lt.s32.totalorder %v383, 3
      %vm405 = vcmp.lt.s32.totalorder %v383, 4
      %v406 = vsel %vm402, %v386, %v389
      %v407 = vsel %vm405, %v395, 2102212464
      %v408 = vsel %vm404, %v392, %v407
      %v409 = vsel %vm403, %v406, %v408
      %v410 = vsel %vm402, %v389, %v392
      %v411 = vsel %vm405, %v398, 920167782
      %v412 = vsel %vm404, %v395, %v411
      %v413 = vsel %vm403, %v410, %v412
      %v414 = vsel %vm402, %v392, %v395
      %v415 = vsel %vm405, %v401, 1326507024
      %v416 = vsel %vm404, %v398, %v415
      %v417 = vsel %vm403, %v414, %v416
      %v418 = vshll.u32 %v378, 8
      %v419 = vmul.u32.u64.compose %v418, %v417
      %v420 = vextract.low.u32 %v419
      %v421 = vextract.high.u32 %v419
      %v422 = vmul.u32.u64.compose %v418, %v413
      %v423 = vextract.low.u32 %v422
      %v424 = vextract.high.u32 %v422
      %v425 = vmul.u32 %v418, %v409
      %v426 = vadd.s32 %v421, %v423
      %vm427 = vc.u32 %v421, %v423
      %v428 = vadd.s32 %v424, 1
      %v429 = vsel %vm427, %v428, %v424
      %v430 = vadd.s32 %v425, %v429
      %v431 = vadd.s32 %v430, 536870912
      %v432 = vshrl.u32 %v431, 30
      %v433 = vshll.u32 %v432, 30
      %v434 = vsub.s32 %v430, %v433
      %vm435 = vcmp.lt.s32.totalorder %v434, 0
      %v436 = vsub.s32 0, %v434
      %v437 = vsel %vm435, %v436, %v434
      %v438 = vclz %v437
      %v439 = vsub.s32 %v438, 2
      %vm440 = vcmp.gt.s32.totalorder 0, %v439
      %v441 = vsel %vm440, 0, %v439
      %v442 = vsub.s32 32, %v441
      %v443 = vshll.u32 %v434, %v441
      %v444 = vshrl.u32 %v426, %v442
      %v445 = vor.u32 %v443, %v444
      %v446 = vsub.s32 4294967266, %v441
      %v447 = vadd.s32 %v446, 127
      %v448 = vshll.u32 %v447, 23
      %v449 = vor.u32 4788187, %v448
      %v450 = vand.u32 2147483647, %v449
      %v452 = vcvt.s32.f32 %v445
      %v453 = vmul.f32 %v452, %v450
      %v454 = vxor.u32 %v453, 2147483648
      %v455 = vsel %vm372, %v454, %v453
      %v456 = vsub.s32 4, %v432
      %v457 = vsel %vm372, %v456, %v432
      %v458 = vsel %vm371, %v37, %v455
      %v459 = vsel %vm371, 0, %v457
      %v460 = vcosq.f32.pop %v458
      %v461 = vsinq.f32.pop %v458
      %vm462 = vweird.f32 %v37
      %v463 = vadd.s32 %v459, 3
      %v464 = vand.u32 %v463, 3
      %vm465 = vcmp.lt.s32.totalorder %v464, 2
      %vm466 = vcmp.eq.s32.totalorder %v464, 0
      %v467 = vxor.u32 %v461, 2147483648
      %v468 = vsel %vm466, %v460, %v467
      %vm469 = vcmp.eq.s32.totalorder %v464, 2
      %v470 = vxor.u32 %v460, 2147483648
      %v471 = vsel %vm469, %v470, %v461
      %v472 = vsel %vm465, %v468, %v471
      %v473 = vsel %vm462, nan, %v472
      %v474 = vand.u32 2147483647, %v34
      %vm475 = vcmp.le.f32.partialorder %v474, 0.7853982
      %vm476 = vcmp.lt.s32.totalorder %v34, 0
      %v477 = vand.u32 %v34, 2139095040
      %v478 = vshrl.u32 %v477, 23
      %v479 = vsub.s32 %v478, 127
      %v480 = vand.u32 2147483647, %v34
      %v481 = vand.u32 %v480, 8388607
      %v482 = vor.u32 %v481, 8388608
      %v483 = vsub.s32 0, %v482
      %v484 = vadd.s32 %v479, 1
      %vm485 = vcmp.gt.s32.totalorder %v484, 0
      %v486 = vsel %vm485, %v484, 0
      %v487 = vshrl.u32 %v486, 5
      %v488 = vand.u32 %v486, 31
      %v489 = vsub.s32 32, %v488
      %v490 = vshrl.u32 683565275, %v489
      %v491 = vshll.u32 683565275, %v488
      %v492 = vshrl.u32 2475754826, %v489
      %v493 = vor.u32 %v491, %v492
      %v494 = vshll.u32 2475754826, %v488
      %v495 = vshrl.u32 2131351028, %v489
      %v496 = vor.u32 %v494, %v495
      %v497 = vshll.u32 2131351028, %v488
      %v498 = vshrl.u32 2102212464, %v489
      %v499 = vor.u32 %v497, %v498
      %v500 = vshll.u32 2102212464, %v488
      %v501 = vshrl.u32 920167782, %v489
      %v502 = vor.u32 %v500, %v501
      %v503 = vshll.u32 920167782, %v488
      %v504 = vshrl.u32 1326507024, %v489
      %v505 = vor.u32 %v503, %v504
      %vm506 = vcmp.lt.s32.totalorder %v487, 1
      %vm507 = vcmp.lt.s32.totalorder %v487, 2
      %vm508 = vcmp.lt.s32.totalorder %v487, 3
      %vm509 = vcmp.lt.s32.totalorder %v487, 4
      %v510 = vsel %vm506, %v490, %v493
      %v511 = vsel %vm509, %v499, 2102212464
      %v512 = vsel %vm508, %v496, %v511
      %v513 = vsel %vm507, %v510, %v512
      %v514 = vsel %vm506, %v493, %v496
      %v515 = vsel %vm509, %v502, 920167782
      %v516 = vsel %vm508, %v499, %v515
      %v517 = vsel %vm507, %v514, %v516
      %v518 = vsel %vm506, %v496, %v499
      %v519 = vsel %vm509, %v505, 1326507024
      %v520 = vsel %vm508, %v502, %v519
      %v521 = vsel %vm507, %v518, %v520
      %v522 = vshll.u32 %v482, 8
      %v523 = vmul.u32.u64.compose %v522, %v521
      %v524 = vextract.low.u32 %v523
      %v525 = vextract.high.u32 %v523
      %v526 = vmul.u32.u64.compose %v522, %v517
      %v527 = vextract.low.u32 %v526
      %v528 = vextract.high.u32 %v526
      %v529 = vmul.u32 %v522, %v513
      %v530 = vadd.s32 %v525, %v527
      %vm531 = vc.u32 %v525, %v527
      %v532 = vadd.s32 %v528, 1
      %v533 = vsel %vm531, %v532, %v528
      %v534 = vadd.s32 %v529, %v533
      %v535 = vadd.s32 %v534, 536870912
      %v536 = vshrl.u32 %v535, 30
      %v537 = vshll.u32 %v536, 30
      %v538 = vsub.s32 %v534, %v537
      %vm539 = vcmp.lt.s32.totalorder %v538, 0
      %v540 = vsub.s32 0, %v538
      %v541 = vsel %vm539, %v540, %v538
      %v542 = vclz %v541
      %v543 = vsub.s32 %v542, 2
      %vm544 = vcmp.gt.s32.totalorder 0, %v543
      %v545 = vsel %vm544, 0, %v543
      %v546 = vsub.s32 32, %v545
      %v547 = vshll.u32 %v538, %v545
      %v548 = vshrl.u32 %v530, %v546
      %v549 = vor.u32 %v547, %v548
      %v550 = vsub.s32 4294967266, %v545
      %v551 = vadd.s32 %v550, 127
      %v552 = vshll.u32 %v551, 23
      %v553 = vor.u32 4788187, %v552
      %v554 = vand.u32 2147483647, %v553
      %v556 = vcvt.s32.f32 %v549
      %v557 = vmul.f32 %v556, %v554
      %v558 = vxor.u32 %v557, 2147483648
      %v559 = vsel %vm476, %v558, %v557
      %v560 = vsub.s32 4, %v536
      %v561 = vsel %vm476, %v560, %v536
      %v562 = vsel %vm475, %v34, %v559
      %v563 = vsel %vm475, 0, %v561
      %v564 = vcosq.f32.pop %v562
      %v565 = vsinq.f32.pop %v562
      %vm566 = vweird.f32 %v34
      %v567 = vand.u32 %v563, 3
      %vm568 = vcmp.lt.s32.totalorder %v567, 2
      %vm569 = vcmp.eq.s32.totalorder %v567, 0
      %v570 = vxor.u32 %v565, 2147483648
      %v571 = vsel %vm569, %v564, %v570
      %vm572 = vcmp.eq.s32.totalorder %v567, 2
      %v573 = vxor.u32 %v564, 2147483648
      %v574 = vsel %vm572, %v573, %v565
      %v575 = vsel %vm568, %v571, %v574
      %v576 = vsel %vm566, nan, %v575
      %v577 = vand.u32 2147483647, %v35
      %vm578 = vcmp.le.f32.partialorder %v577, 0.7853982
      %vm579 = vcmp.lt.s32.totalorder %v35, 0
      %v580 = vand.u32 %v35, 2139095040
      %v581 = vshrl.u32 %v580, 23
      %v582 = vsub.s32 %v581, 127
      %v583 = vand.u32 2147483647, %v35
      %v584 = vand.u32 %v583, 8388607
      %v585 = vor.u32 %v584, 8388608
      %v586 = vsub.s32 0, %v585
      %v587 = vadd.s32 %v582, 1
      %vm588 = vcmp.gt.s32.totalorder %v587, 0
      %v589 = vsel %vm588, %v587, 0
      %v590 = vshrl.u32 %v589, 5
      %v591 = vand.u32 %v589, 31
      %v592 = vsub.s32 32, %v591
      %v593 = vshrl.u32 683565275, %v592
      %v594 = vshll.u32 683565275, %v591
      %v595 = vshrl.u32 2475754826, %v592
      %v596 = vor.u32 %v594, %v595
      %v597 = vshll.u32 2475754826, %v591
      %v598 = vshrl.u32 2131351028, %v592
      %v599 = vor.u32 %v597, %v598
      %v600 = vshll.u32 2131351028, %v591
      %v601 = vshrl.u32 2102212464, %v592
      %v602 = vor.u32 %v600, %v601
      %v603 = vshll.u32 2102212464, %v591
      %v604 = vshrl.u32 920167782, %v592
      %v605 = vor.u32 %v603, %v604
      %v606 = vshll.u32 920167782, %v591
      %v607 = vshrl.u32 1326507024, %v592
      %v608 = vor.u32 %v606, %v607
      %vm609 = vcmp.lt.s32.totalorder %v590, 1
      %vm610 = vcmp.lt.s32.totalorder %v590, 2
      %vm611 = vcmp.lt.s32.totalorder %v590, 3
      %vm612 = vcmp.lt.s32.totalorder %v590, 4
      %v613 = vsel %vm609, %v593, %v596
      %v614 = vsel %vm612, %v602, 2102212464
      %v615 = vsel %vm611, %v599, %v614
      %v616 = vsel %vm610, %v613, %v615
      %v617 = vsel %vm609, %v596, %v599
      %v618 = vsel %vm612, %v605, 920167782
      %v619 = vsel %vm611, %v602, %v618
      %v620 = vsel %vm610, %v617, %v619
      %v621 = vsel %vm609, %v599, %v602
      %v622 = vsel %vm612, %v608, 1326507024
      %v623 = vsel %vm611, %v605, %v622
      %v624 = vsel %vm610, %v621, %v623
      %v625 = vshll.u32 %v585, 8
      %v626 = vmul.u32.u64.compose %v625, %v624
      %v627 = vextract.low.u32 %v626
      %v628 = vextract.high.u32 %v626
      %v629 = vmul.u32.u64.compose %v625, %v620
      %v630 = vextract.low.u32 %v629
      %v631 = vextract.high.u32 %v629
      %v632 = vmul.u32 %v625, %v616
      %v633 = vadd.s32 %v628, %v630
      %vm634 = vc.u32 %v628, %v630
      %v635 = vadd.s32 %v631, 1
      %v636 = vsel %vm634, %v635, %v631
      %v637 = vadd.s32 %v632, %v636
      %v638 = vadd.s32 %v637, 536870912
      %v639 = vshrl.u32 %v638, 30
      %v640 = vshll.u32 %v639, 30
      %v641 = vsub.s32 %v637, %v640
      %vm642 = vcmp.lt.s32.totalorder %v641, 0
      %v643 = vsub.s32 0, %v641
      %v644 = vsel %vm642, %v643, %v641
      %v645 = vclz %v644
      %v646 = vsub.s32 %v645, 2
      %vm647 = vcmp.gt.s32.totalorder 0, %v646
      %v648 = vsel %vm647, 0, %v646
      %v649 = vsub.s32 32, %v648
      %v650 = vshll.u32 %v641, %v648
      %v651 = vshrl.u32 %v633, %v649
      %v652 = vor.u32 %v650, %v651
      %v653 = vsub.s32 4294967266, %v648
      %v654 = vadd.s32 %v653, 127
      %v655 = vshll.u32 %v654, 23
      %v656 = vor.u32 4788187, %v655
      %v657 = vand.u32 2147483647, %v656
      %v659 = vcvt.s32.f32 %v652
      %v660 = vmul.f32 %v659, %v657
      %v661 = vxor.u32 %v660, 2147483648
      %v662 = vsel %vm579, %v661, %v660
      %v663 = vsub.s32 4, %v639
      %v664 = vsel %vm579, %v663, %v639
      %v665 = vsel %vm578, %v35, %v662
      %v666 = vsel %vm578, 0, %v664
      %v667 = vcosq.f32.pop %v665
      %v668 = vsinq.f32.pop %v665
      %vm669 = vweird.f32 %v35
      %v670 = vand.u32 %v666, 3
      %vm671 = vcmp.lt.s32.totalorder %v670, 2
      %vm672 = vcmp.eq.s32.totalorder %v670, 0
      %v673 = vxor.u32 %v668, 2147483648
      %v674 = vsel %vm672, %v667, %v673
      %vm675 = vcmp.eq.s32.totalorder %v670, 2
      %v676 = vxor.u32 %v667, 2147483648
      %v677 = vsel %vm675, %v676, %v668
      %v678 = vsel %vm671, %v674, %v677
      %v679 = vsel %vm669, nan, %v678
      %v680 = vand.u32 2147483647, %v36
      %vm681 = vcmp.le.f32.partialorder %v680, 0.7853982
      %vm682 = vcmp.lt.s32.totalorder %v36, 0
      %v683 = vand.u32 %v36, 2139095040
      %v684 = vshrl.u32 %v683, 23
      %v685 = vsub.s32 %v684, 127
      %v686 = vand.u32 2147483647, %v36
      %v687 = vand.u32 %v686, 8388607
      %v688 = vor.u32 %v687, 8388608
      %v689 = vsub.s32 0, %v688
      %v690 = vadd.s32 %v685, 1
      %vm691 = vcmp.gt.s32.totalorder %v690, 0
      %v692 = vsel %vm691, %v690, 0
      %v693 = vshrl.u32 %v692, 5
      %v694 = vand.u32 %v692, 31
      %v695 = vsub.s32 32, %v694
      %v696 = vshrl.u32 683565275, %v695
      %v697 = vshll.u32 683565275, %v694
      %v698 = vshrl.u32 2475754826, %v695
      %v699 = vor.u32 %v697, %v698
      %v700 = vshll.u32 2475754826, %v694
      %v701 = vshrl.u32 2131351028, %v695
      %v702 = vor.u32 %v700, %v701
      %v703 = vshll.u32 2131351028, %v694
      %v704 = vshrl.u32 2102212464, %v695
      %v705 = vor.u32 %v703, %v704
      %v706 = vshll.u32 2102212464, %v694
      %v707 = vshrl.u32 920167782, %v695
      %v708 = vor.u32 %v706, %v707
      %v709 = vshll.u32 920167782, %v694
      %v710 = vshrl.u32 1326507024, %v695
      %v711 = vor.u32 %v709, %v710
      %vm712 = vcmp.lt.s32.totalorder %v693, 1
      %vm713 = vcmp.lt.s32.totalorder %v693, 2
      %vm714 = vcmp.lt.s32.totalorder %v693, 3
      %vm715 = vcmp.lt.s32.totalorder %v693, 4
      %v716 = vsel %vm712, %v696, %v699
      %v717 = vsel %vm715, %v705, 2102212464
      %v718 = vsel %vm714, %v702, %v717
      %v719 = vsel %vm713, %v716, %v718
      %v720 = vsel %vm712, %v699, %v702
      %v721 = vsel %vm715, %v708, 920167782
      %v722 = vsel %vm714, %v705, %v721
      %v723 = vsel %vm713, %v720, %v722
      %v724 = vsel %vm712, %v702, %v705
      %v725 = vsel %vm715, %v711, 1326507024
      %v726 = vsel %vm714, %v708, %v725
      %v727 = vsel %vm713, %v724, %v726
      %v728 = vshll.u32 %v688, 8
      %v729 = vmul.u32.u64.compose %v728, %v727
      %v730 = vextract.low.u32 %v729
      %v731 = vextract.high.u32 %v729
      %v732 = vmul.u32.u64.compose %v728, %v723
      %v733 = vextract.low.u32 %v732
      %v734 = vextract.high.u32 %v732
      %v735 = vmul.u32 %v728, %v719
      %v736 = vadd.s32 %v731, %v733
      %vm737 = vc.u32 %v731, %v733
      %v738 = vadd.s32 %v734, 1
      %v739 = vsel %vm737, %v738, %v734
      %v740 = vadd.s32 %v735, %v739
      %v741 = vadd.s32 %v740, 536870912
      %v742 = vshrl.u32 %v741, 30
      %v743 = vshll.u32 %v742, 30
      %v744 = vsub.s32 %v740, %v743
      %vm745 = vcmp.lt.s32.totalorder %v744, 0
      %v746 = vsub.s32 0, %v744
      %v747 = vsel %vm745, %v746, %v744
      %v748 = vclz %v747
      %v749 = vsub.s32 %v748, 2
      %vm750 = vcmp.gt.s32.totalorder 0, %v749
      %v751 = vsel %vm750, 0, %v749
      %v752 = vsub.s32 32, %v751
      %v753 = vshll.u32 %v744, %v751
      %v754 = vshrl.u32 %v736, %v752
      %v755 = vor.u32 %v753, %v754
      %v756 = vsub.s32 4294967266, %v751
      %v757 = vadd.s32 %v756, 127
      %v758 = vshll.u32 %v757, 23
      %v759 = vor.u32 4788187, %v758
      %v760 = vand.u32 2147483647, %v759
      %v762 = vcvt.s32.f32 %v755
      %v763 = vmul.f32 %v762, %v760
      %v764 = vxor.u32 %v763, 2147483648
      %v765 = vsel %vm682, %v764, %v763
      %v766 = vsub.s32 4, %v742
      %v767 = vsel %vm682, %v766, %v742
      %v768 = vsel %vm681, %v36, %v765
      %v769 = vsel %vm681, 0, %v767
      %v770 = vcosq.f32.pop %v768
      %v771 = vsinq.f32.pop %v768
      %vm772 = vweird.f32 %v36
      %v773 = vand.u32 %v769, 3
      %vm774 = vcmp.lt.s32.totalorder %v773, 2
      %vm775 = vcmp.eq.s32.totalorder %v773, 0
      %v776 = vxor.u32 %v771, 2147483648
      %v777 = vsel %vm775, %v770, %v776
      %vm778 = vcmp.eq.s32.totalorder %v773, 2
      %v779 = vxor.u32 %v770, 2147483648
      %v780 = vsel %vm778, %v779, %v771
      %v781 = vsel %vm774, %v777, %v780
      %v782 = vsel %vm772, nan, %v781
      %v783 = vand.u32 2147483647, %v37
      %vm784 = vcmp.le.f32.partialorder %v783, 0.7853982
      %vm785 = vcmp.lt.s32.totalorder %v37, 0
      %v786 = vand.u32 %v37, 2139095040
      %v787 = vshrl.u32 %v786, 23
      %v788 = vsub.s32 %v787, 127
      %v789 = vand.u32 2147483647, %v37
      %v790 = vand.u32 %v789, 8388607
      %v791 = vor.u32 %v790, 8388608
      %v792 = vsub.s32 0, %v791
      %v793 = vadd.s32 %v788, 1
      %vm794 = vcmp.gt.s32.totalorder %v793, 0
      %v795 = vsel %vm794, %v793, 0
      %v796 = vshrl.u32 %v795, 5
      %v797 = vand.u32 %v795, 31
      %v798 = vsub.s32 32, %v797
      %v799 = vshrl.u32 683565275, %v798
      %v800 = vshll.u32 683565275, %v797
      %v801 = vshrl.u32 2475754826, %v798
      %v802 = vor.u32 %v800, %v801
      %v803 = vshll.u32 2475754826, %v797
      %v804 = vshrl.u32 2131351028, %v798
      %v805 = vor.u32 %v803, %v804
      %v806 = vshll.u32 2131351028, %v797
      %v807 = vshrl.u32 2102212464, %v798
      %v808 = vor.u32 %v806, %v807
      %v809 = vshll.u32 2102212464, %v797
      %v810 = vshrl.u32 920167782, %v798
      %v811 = vor.u32 %v809, %v810
      %v812 = vshll.u32 920167782, %v797
      %v813 = vshrl.u32 1326507024, %v798
      %v814 = vor.u32 %v812, %v813
      %vm815 = vcmp.lt.s32.totalorder %v796, 1
      %vm816 = vcmp.lt.s32.totalorder %v796, 2
      %vm817 = vcmp.lt.s32.totalorder %v796, 3
      %vm818 = vcmp.lt.s32.totalorder %v796, 4
      %v819 = vsel %vm815, %v799, %v802
      %v820 = vsel %vm818, %v808, 2102212464
      %v821 = vsel %vm817, %v805, %v820
      %v822 = vsel %vm816, %v819, %v821
      %v823 = vsel %vm815, %v802, %v805
      %v824 = vsel %vm818, %v811, 920167782
      %v825 = vsel %vm817, %v808, %v824
      %v826 = vsel %vm816, %v823, %v825
      %v827 = vsel %vm815, %v805, %v808
      %v828 = vsel %vm818, %v814, 1326507024
      %v829 = vsel %vm817, %v811, %v828
      %v830 = vsel %vm816, %v827, %v829
      %v831 = vshll.u32 %v791, 8
      %v832 = vmul.u32.u64.compose %v831, %v830
      %v833 = vextract.low.u32 %v832
      %v834 = vextract.high.u32 %v832
      %v835 = vmul.u32.u64.compose %v831, %v826
      %v836 = vextract.low.u32 %v835
      %v837 = vextract.high.u32 %v835
      %v838 = vmul.u32 %v831, %v822
      %v839 = vadd.s32 %v834, %v836
      %vm840 = vc.u32 %v834, %v836
      %v841 = vadd.s32 %v837, 1
      %v842 = vsel %vm840, %v841, %v837
      %v843 = vadd.s32 %v838, %v842
      %v844 = vadd.s32 %v843, 536870912
      %v845 = vshrl.u32 %v844, 30
      %v846 = vshll.u32 %v845, 30
      %v847 = vsub.s32 %v843, %v846
      %vm848 = vcmp.lt.s32.totalorder %v847, 0
      %v849 = vsub.s32 0, %v847
      %v850 = vsel %vm848, %v849, %v847
      %v851 = vclz %v850
      %v852 = vsub.s32 %v851, 2
      %vm853 = vcmp.gt.s32.totalorder 0, %v852
      %v854 = vsel %vm853, 0, %v852
      %v855 = vsub.s32 32, %v854
      %v856 = vshll.u32 %v847, %v854
      %v857 = vshrl.u32 %v839, %v855
      %v858 = vor.u32 %v856, %v857
      %v859 = vsub.s32 4294967266, %v854
      %v860 = vadd.s32 %v859, 127
      %v861 = vshll.u32 %v860, 23
      %v862 = vor.u32 4788187, %v861
      %v863 = vand.u32 2147483647, %v862
      %v865 = vcvt.s32.f32 %v858
      %v866 = vmul.f32 %v865, %v863
      %v867 = vxor.u32 %v866, 2147483648
      %v868 = vsel %vm785, %v867, %v866
      %v869 = vsub.s32 4, %v845
      %v870 = vsel %vm785, %v869, %v845
      %v871 = vsel %vm784, %v37, %v868
      %v872 = vsel %vm784, 0, %v870
      %v873 = vcosq.f32.pop %v871
      %v874 = vsinq.f32.pop %v871
      %vm875 = vweird.f32 %v37
      %v876 = vand.u32 %v872, 3
      %vm877 = vcmp.lt.s32.totalorder %v876, 2
      %vm878 = vcmp.eq.s32.totalorder %v876, 0
      %v879 = vxor.u32 %v874, 2147483648
      %v880 = vsel %vm878, %v873, %v879
      %vm881 = vcmp.eq.s32.totalorder %v876, 2
      %v882 = vxor.u32 %v873, 2147483648
      %v883 = vsel %vm881, %v882, %v874
      %v884 = vsel %vm877, %v880, %v883
      %v885 = vsel %vm875, nan, %v884
      %v890 = vcombine.high %v161, %v161
      %v891 = vcombine.high %v265, %v265
      %v892 = vcombine.high %v369, %v369
      %v893 = vcombine.high %v473, %v473
      %v894 = vrot.slane %v161, 5
      %v895 = vrot.slane %v890, 5
      %v896 = vrot.slane %v265, 5
      %v897 = vrot.slane %v891, 5
      %v898 = vrot.slane %v369, 5
      %v899 = vrot.slane %v892, 5
      %v900 = vrot.slane %v473, 5
      %v901 = vrot.slane %v893, 5
      %910 = vst [vmem:[#allocation2] sm:$0x38] %v894
      %911 = vst [vmem:[#allocation2 + $0x8] sm:$0x38] %v895
      %912 = vst [vmem:[#allocation2 + $0x10] sm:$0x38] %v896
      %913 = vst [vmem:[#allocation2 + $0x18] sm:$0x38] %v897
      %914 = vst [vmem:[#allocation2 + $0x20] sm:$0x38] %v898
      %915 = vst [vmem:[#allocation2 + $0x28] sm:$0x38] %v899
      %916 = vst [vmem:[#allocation2 + $0x30] sm:$0x38] %v900
      %917 = vst [vmem:[#allocation2 + $0x38] sm:$0x38] %v901
      %v922 = vcombine.high %v576, %v576
      %v923 = vcombine.high %v679, %v679
      %v924 = vcombine.high %v782, %v782
      %v925 = vcombine.high %v885, %v885
      %v926 = vrot.slane %v576, 2
      %v927 = vrot.slane %v922, 2
      %v928 = vrot.slane %v679, 2
      %v929 = vrot.slane %v923, 2
      %v930 = vrot.slane %v782, 2
      %v931 = vrot.slane %v924, 2
      %v932 = vrot.slane %v885, 2
      %v933 = vrot.slane %v925, 2
      %942 = vst [vmem:[#allocation2] sm:$0xc0] %v926
      %943 = vst [vmem:[#allocation2 + $0x8] sm:$0xc0] %v927
      %944 = vst [vmem:[#allocation2 + $0x10] sm:$0xc0] %v928
      %945 = vst [vmem:[#allocation2 + $0x18] sm:$0xc0] %v929
      %946 = vst [vmem:[#allocation2 + $0x20] sm:$0xc0] %v930
      %947 = vst [vmem:[#allocation2 + $0x28] sm:$0xc0] %v931
      %948 = vst [vmem:[#allocation2 + $0x30] sm:$0xc0] %v932
      %949 = vst [vmem:[#allocation2 + $0x38] sm:$0xc0] %v933
      %950 = vst [vmem:[#allocation2 + $0x40] sm:$0x1] %v926
      %951 = vst [vmem:[#allocation2 + $0x48] sm:$0x1] %v927
      %952 = vst [vmem:[#allocation2 + $0x50] sm:$0x1] %v928
      %953 = vst [vmem:[#allocation2 + $0x58] sm:$0x1] %v929
      %954 = vst [vmem:[#allocation2 + $0x60] sm:$0x1] %v930
      %955 = vst [vmem:[#allocation2 + $0x68] sm:$0x1] %v931
      %956 = vst [vmem:[#allocation2 + $0x70] sm:$0x1] %v932
      %957 = vst [vmem:[#allocation2 + $0x78] sm:$0x1] %v933
      %v958 = vmul.f32 %v161, %v576
      %v959 = vmul.f32 %v265, %v679
      %v960 = vmul.f32 %v369, %v782
      %v961 = vmul.f32 %v473, %v885
      %v962 = vmul.f32 %v958, 2.0
      %v963 = vmul.f32 %v959, 2.0
      %v964 = vmul.f32 %v960, 2.0
      %v965 = vmul.f32 %v961, 2.0
      %v966 = vmul.f32 %v161, %v161
      %v967 = vmul.f32 %v265, %v265
      %v968 = vmul.f32 %v369, %v369
      %v969 = vmul.f32 %v473, %v473
      %v970 = vmul.f32 %v966, 2.0
      %v971 = vmul.f32 %v967, 2.0
      %v972 = vmul.f32 %v968, 2.0
      %v973 = vmul.f32 %v969, 2.0
      %v974 = vsub.f32 1.0, %v970
      %v975 = vsub.f32 1.0, %v971
      %v976 = vsub.f32 1.0, %v972
      %v977 = vsub.f32 1.0, %v973
      %v982 = vcombine.high %v962, %v962
      %v983 = vcombine.high %v963, %v963
      %v984 = vcombine.high %v964, %v964
      %v985 = vcombine.high %v965, %v965
      %v986 = vrot.slane %v962, 7
      %v987 = vrot.slane %v982, 7
      %v988 = vrot.slane %v963, 7
      %v989 = vrot.slane %v983, 7
      %v990 = vrot.slane %v964, 7
      %v991 = vrot.slane %v984, 7
      %v992 = vrot.slane %v965, 7
      %v993 = vrot.slane %v985, 7
      %1002 = vst [vmem:[#allocation2 + $0x40] sm:$0xe] %v986
      %1003 = vst [vmem:[#allocation2 + $0x48] sm:$0xe] %v987
      %1004 = vst [vmem:[#allocation2 + $0x50] sm:$0xe] %v988
      %1005 = vst [vmem:[#allocation2 + $0x58] sm:$0xe] %v989
      %1006 = vst [vmem:[#allocation2 + $0x60] sm:$0xe] %v990
      %1007 = vst [vmem:[#allocation2 + $0x68] sm:$0xe] %v991
      %1008 = vst [vmem:[#allocation2 + $0x70] sm:$0xe] %v992
      %1009 = vst [vmem:[#allocation2 + $0x78] sm:$0xe] %v993
      %v1014 = vcombine.low %v974, %v974
      %v1015 = vcombine.low %v975, %v975
      %v1016 = vcombine.low %v976, %v976
      %v1017 = vcombine.low %v977, %v977
      %1022 = vst [vmem:[#allocation2 + $0x40] sm:$0x70] %v1014
      %1023 = vst [vmem:[#allocation2 + $0x48] sm:$0x70] %v974
      %1024 = vst [vmem:[#allocation2 + $0x50] sm:$0x70] %v1015
      %1025 = vst [vmem:[#allocation2 + $0x58] sm:$0x70] %v975
      %1026 = vst [vmem:[#allocation2 + $0x60] sm:$0x70] %v1016
      %1027 = vst [vmem:[#allocation2 + $0x68] sm:$0x70] %v976
      %1028 = vst [vmem:[#allocation2 + $0x70] sm:$0x70] %v1017
      %1029 = vst [vmem:[#allocation2 + $0x78] sm:$0x70] %v977
      %v1030 = vmul.f32 %v962, %v974
      %v1031 = vmul.f32 %v963, %v975
      %v1032 = vmul.f32 %v964, %v976
      %v1033 = vmul.f32 %v965, %v977
      %v1034 = vmul.f32 %v1030, 2.0
      %v1035 = vmul.f32 %v1031, 2.0
      %v1036 = vmul.f32 %v1032, 2.0
      %v1037 = vmul.f32 %v1033, 2.0
      %v1038 = vmul.f32 %v962, %v962
      %v1039 = vmul.f32 %v963, %v963
      %v1040 = vmul.f32 %v964, %v964
      %v1041 = vmul.f32 %v965, %v965
      %v1042 = vmul.f32 %v1038, 2.0
      %v1043 = vmul.f32 %v1039, 2.0
      %v1044 = vmul.f32 %v1040, 2.0
      %v1045 = vmul.f32 %v1041, 2.0
      %v1046 = vsub.f32 1.0, %v1042
      %v1047 = vsub.f32 1.0, %v1043
      %v1048 = vsub.f32 1.0, %v1044
      %v1049 = vsub.f32 1.0, %v1045
      %v1054 = vcombine.high %v1034, %v1034
      %v1055 = vcombine.high %v1035, %v1035
      %v1056 = vcombine.high %v1036, %v1036
      %v1057 = vcombine.high %v1037, %v1037
      %v1058 = vrot.slane %v1034, 1
      %v1059 = vrot.slane %v1054, 1
      %v1060 = vrot.slane %v1035, 1
      %v1061 = vrot.slane %v1055, 1
      %v1062 = vrot.slane %v1036, 1
      %v1063 = vrot.slane %v1056, 1
      %v1064 = vrot.slane %v1037, 1
      %v1065 = vrot.slane %v1057, 1
      %1074 = vst [vmem:[#allocation2 + $0x40] sm:$0x80] %v1058
      %1075 = vst [vmem:[#allocation2 + $0x48] sm:$0x80] %v1059
      %1076 = vst [vmem:[#allocation2 + $0x50] sm:$0x80] %v1060
      %1077 = vst [vmem:[#allocation2 + $0x58] sm:$0x80] %v1061
      %1078 = vst [vmem:[#allocation2 + $0x60] sm:$0x80] %v1062
      %1079 = vst [vmem:[#allocation2 + $0x68] sm:$0x80] %v1063
      %1080 = vst [vmem:[#allocation2 + $0x70] sm:$0x80] %v1064
      %1081 = vst [vmem:[#allocation2 + $0x78] sm:$0x80] %v1065
      %1082 = vst [vmem:[#allocation2 + $0x80] sm:$0x3] %v1058
      %1083 = vst [vmem:[#allocation2 + $0x88] sm:$0x3] %v1059
      %1084 = vst [vmem:[#allocation2 + $0x90] sm:$0x3] %v1060
      %1085 = vst [vmem:[#allocation2 + $0x98] sm:$0x3] %v1061
      %1086 = vst [vmem:[#allocation2 + $0xa0] sm:$0x3] %v1062
      %1087 = vst [vmem:[#allocation2 + $0xa8] sm:$0x3] %v1063
      %1088 = vst [vmem:[#allocation2 + $0xb0] sm:$0x3] %v1064
      %1089 = vst [vmem:[#allocation2 + $0xb8] sm:$0x3] %v1065
      %v1094 = vcombine.high %v1046, %v1046
      %v1095 = vcombine.high %v1047, %v1047
      %v1096 = vcombine.high %v1048, %v1048
      %v1097 = vcombine.high %v1049, %v1049
      %v1098 = vrot.slane %v1046, 6
      %v1099 = vrot.slane %v1094, 6
      %v1100 = vrot.slane %v1047, 6
      %v1101 = vrot.slane %v1095, 6
      %v1102 = vrot.slane %v1048, 6
      %v1103 = vrot.slane %v1096, 6
      %v1104 = vrot.slane %v1049, 6
      %v1105 = vrot.slane %v1097, 6
      %1114 = vst [vmem:[#allocation2 + $0x80] sm:$0x1c] %v1098
      %1115 = vst [vmem:[#allocation2 + $0x88] sm:$0x1c] %v1099
      %1116 = vst [vmem:[#allocation2 + $0x90] sm:$0x1c] %v1100
      %1117 = vst [vmem:[#allocation2 + $0x98] sm:$0x1c] %v1101
      %1118 = vst [vmem:[#allocation2 + $0xa0] sm:$0x1c] %v1102
      %1119 = vst [vmem:[#allocation2 + $0xa8] sm:$0x1c] %v1103
      %1120 = vst [vmem:[#allocation2 + $0xb0] sm:$0x1c] %v1104
      %1121 = vst [vmem:[#allocation2 + $0xb8] sm:$0x1c] %v1105
      %v1122 = vmul.f32 %v1034, %v1046
      %v1123 = vmul.f32 %v1035, %v1047
      %v1124 = vmul.f32 %v1036, %v1048
      %v1125 = vmul.f32 %v1037, %v1049
      %v1126 = vmul.f32 %v1122, 2.0
      %v1127 = vmul.f32 %v1123, 2.0
      %v1128 = vmul.f32 %v1124, 2.0
      %v1129 = vmul.f32 %v1125, 2.0
      %v1130 = vmul.f32 %v1034, %v1034
      %v1131 = vmul.f32 %v1035, %v1035
      %v1132 = vmul.f32 %v1036, %v1036
      %v1133 = vmul.f32 %v1037, %v1037
      %v1134 = vmul.f32 %v1130, 2.0
      %v1135 = vmul.f32 %v1131, 2.0
      %v1136 = vmul.f32 %v1132, 2.0
      %v1137 = vmul.f32 %v1133, 2.0
      %v1138 = vsub.f32 1.0, %v1134
      %v1139 = vsub.f32 1.0, %v1135
      %v1140 = vsub.f32 1.0, %v1136
      %v1141 = vsub.f32 1.0, %v1137
      %v1146 = vcombine.high %v1126, %v1126
      %v1147 = vcombine.high %v1127, %v1127
      %v1148 = vcombine.high %v1128, %v1128
      %v1149 = vcombine.high %v1129, %v1129
      %v1150 = vrot.slane %v1126, 3
      %v1151 = vrot.slane %v1146, 3
      %v1152 = vrot.slane %v1127, 3
      %v1153 = vrot.slane %v1147, 3
      %v1154 = vrot.slane %v1128, 3
      %v1155 = vrot.slane %v1148, 3
      %v1156 = vrot.slane %v1129, 3
      %v1157 = vrot.slane %v1149, 3
      %1166 = vst [vmem:[#allocation2 + $0x80] sm:$0xe0] %v1150
      %1167 = vst [vmem:[#allocation2 + $0x88] sm:$0xe0] %v1151
      %1168 = vst [vmem:[#allocation2 + $0x90] sm:$0xe0] %v1152
      %1169 = vst [vmem:[#allocation2 + $0x98] sm:$0xe0] %v1153
      %1170 = vst [vmem:[#allocation2 + $0xa0] sm:$0xe0] %v1154
      %1171 = vst [vmem:[#allocation2 + $0xa8] sm:$0xe0] %v1155
      %1172 = vst [vmem:[#allocation2 + $0xb0] sm:$0xe0] %v1156
      %1173 = vst [vmem:[#allocation2 + $0xb8] sm:$0xe0] %v1157
      %v1178 = vcombine.high %v1138, %v1138
      %v1179 = vcombine.high %v1139, %v1139
      %v1180 = vcombine.high %v1140, %v1140
      %v1181 = vcombine.high %v1141, %v1141
      %1186 = vst [vmem:[#allocation2 + $0xc0] sm:$0x7] %v1138
      %1187 = vst [vmem:[#allocation2 + $0xc8] sm:$0x7] %v1178
      %1188 = vst [vmem:[#allocation2 + $0xd0] sm:$0x7] %v1139
      %1189 = vst [vmem:[#allocation2 + $0xd8] sm:$0x7] %v1179
      %1190 = vst [vmem:[#allocation2 + $0xe0] sm:$0x7] %v1140
      %1191 = vst [vmem:[#allocation2 + $0xe8] sm:$0x7] %v1180
      %1192 = vst [vmem:[#allocation2 + $0xf0] sm:$0x7] %v1141
      %1193 = vst [vmem:[#allocation2 + $0xf8] sm:$0x7] %v1181
      %v1194 = vmul.f32 %v34, 16.0
      %v1195 = vmul.f32 %v35, 16.0
      %v1196 = vmul.f32 %v36, 16.0
      %v1197 = vmul.f32 %v37, 16.0
      %v1198 = vand.u32 2147483647, %v1194
      %vm1199 = vcmp.le.f32.partialorder %v1198, 0.7853982
      %vm1200 = vcmp.lt.s32.totalorder %v1194, 0
      %v1201 = vand.u32 %v1194, 2139095040
      %v1202 = vshrl.u32 %v1201, 23
      %v1203 = vsub.s32 %v1202, 127
      %v1204 = vand.u32 2147483647, %v1194
      %v1205 = vand.u32 %v1204, 8388607
      %v1206 = vor.u32 %v1205, 8388608
      %v1207 = vsub.s32 0, %v1206
      %v1208 = vadd.s32 %v1203, 1
      %vm1209 = vcmp.gt.s32.totalorder %v1208, 0
      %v1210 = vsel %vm1209, %v1208, 0
      %v1211 = vshrl.u32 %v1210, 5
      %v1212 = vand.u32 %v1210, 31
      %v1213 = vsub.s32 32, %v1212
      %v1214 = vshrl.u32 683565275, %v1213
      %v1215 = vshll.u32 683565275, %v1212
      %v1216 = vshrl.u32 2475754826, %v1213
      %v1217 = vor.u32 %v1215, %v1216
      %v1218 = vshll.u32 2475754826, %v1212
      %v1219 = vshrl.u32 2131351028, %v1213
      %v1220 = vor.u32 %v1218, %v1219
      %v1221 = vshll.u32 2131351028, %v1212
      %v1222 = vshrl.u32 2102212464, %v1213
      %v1223 = vor.u32 %v1221, %v1222
      %v1224 = vshll.u32 2102212464, %v1212
      %v1225 = vshrl.u32 920167782, %v1213
      %v1226 = vor.u32 %v1224, %v1225
      %v1227 = vshll.u32 920167782, %v1212
      %v1228 = vshrl.u32 1326507024, %v1213
      %v1229 = vor.u32 %v1227, %v1228
      %vm1230 = vcmp.lt.s32.totalorder %v1211, 1
      %vm1231 = vcmp.lt.s32.totalorder %v1211, 2
      %vm1232 = vcmp.lt.s32.totalorder %v1211, 3
      %vm1233 = vcmp.lt.s32.totalorder %v1211, 4
      %v1234 = vsel %vm1230, %v1214, %v1217
      %v1235 = vsel %vm1233, %v1223, 2102212464
      %v1236 = vsel %vm1232, %v1220, %v1235
      %v1237 = vsel %vm1231, %v1234, %v1236
      %v1238 = vsel %vm1230, %v1217, %v1220
      %v1239 = vsel %vm1233, %v1226, 920167782
      %v1240 = vsel %vm1232, %v1223, %v1239
      %v1241 = vsel %vm1231, %v1238, %v1240
      %v1242 = vsel %vm1230, %v1220, %v1223
      %v1243 = vsel %vm1233, %v1229, 1326507024
      %v1244 = vsel %vm1232, %v1226, %v1243
      %v1245 = vsel %vm1231, %v1242, %v1244
      %v1246 = vshll.u32 %v1206, 8
      %v1247 = vmul.u32.u64.compose %v1246, %v1245
      %v1248 = vextract.low.u32 %v1247
      %v1249 = vextract.high.u32 %v1247
      %v1250 = vmul.u32.u64.compose %v1246, %v1241
      %v1251 = vextract.low.u32 %v1250
      %v1252 = vextract.high.u32 %v1250
      %v1253 = vmul.u32 %v1246, %v1237
      %v1254 = vadd.s32 %v1249, %v1251
      %vm1255 = vc.u32 %v1249, %v1251
      %v1256 = vadd.s32 %v1252, 1
      %v1257 = vsel %vm1255, %v1256, %v1252
      %v1258 = vadd.s32 %v1253, %v1257
      %v1259 = vadd.s32 %v1258, 536870912
      %v1260 = vshrl.u32 %v1259, 30
      %v1261 = vshll.u32 %v1260, 30
      %v1262 = vsub.s32 %v1258, %v1261
      %vm1263 = vcmp.lt.s32.totalorder %v1262, 0
      %v1264 = vsub.s32 0, %v1262
      %v1265 = vsel %vm1263, %v1264, %v1262
      %v1266 = vclz %v1265
      %v1267 = vsub.s32 %v1266, 2
      %vm1268 = vcmp.gt.s32.totalorder 0, %v1267
      %v1269 = vsel %vm1268, 0, %v1267
      %v1270 = vsub.s32 32, %v1269
      %v1271 = vshll.u32 %v1262, %v1269
      %v1272 = vshrl.u32 %v1254, %v1270
      %v1273 = vor.u32 %v1271, %v1272
      %v1274 = vsub.s32 4294967266, %v1269
      %v1275 = vadd.s32 %v1274, 127
      %v1276 = vshll.u32 %v1275, 23
      %v1277 = vor.u32 4788187, %v1276
      %v1278 = vand.u32 2147483647, %v1277
      %v1280 = vcvt.s32.f32 %v1273
      %v1281 = vmul.f32 %v1280, %v1278
      %v1282 = vxor.u32 %v1281, 2147483648
      %v1283 = vsel %vm1200, %v1282, %v1281
      %v1284 = vsub.s32 4, %v1260
      %v1285 = vsel %vm1200, %v1284, %v1260
      %v1286 = vsel %vm1199, %v1194, %v1283
      %v1287 = vsel %vm1199, 0, %v1285
      %v1288 = vcosq.f32.pop %v1286
      %v1289 = vsinq.f32.pop %v1286
      %vm1290 = vweird.f32 %v1194
      %v1291 = vadd.s32 %v1287, 3
      %v1292 = vand.u32 %v1291, 3
      %vm1293 = vcmp.lt.s32.totalorder %v1292, 2
      %vm1294 = vcmp.eq.s32.totalorder %v1292, 0
      %v1295 = vxor.u32 %v1289, 2147483648
      %v1296 = vsel %vm1294, %v1288, %v1295
      %vm1297 = vcmp.eq.s32.totalorder %v1292, 2
      %v1298 = vxor.u32 %v1288, 2147483648
      %v1299 = vsel %vm1297, %v1298, %v1289
      %v1300 = vsel %vm1293, %v1296, %v1299
      %v1301 = vsel %vm1290, nan, %v1300
      %v1302 = vand.u32 2147483647, %v1195
      %vm1303 = vcmp.le.f32.partialorder %v1302, 0.7853982
      %vm1304 = vcmp.lt.s32.totalorder %v1195, 0
      %v1305 = vand.u32 %v1195, 2139095040
      %v1306 = vshrl.u32 %v1305, 23
      %v1307 = vsub.s32 %v1306, 127
      %v1308 = vand.u32 2147483647, %v1195
      %v1309 = vand.u32 %v1308, 8388607
      %v1310 = vor.u32 %v1309, 8388608
      %v1311 = vsub.s32 0, %v1310
      %v1312 = vadd.s32 %v1307, 1
      %vm1313 = vcmp.gt.s32.totalorder %v1312, 0
      %v1314 = vsel %vm1313, %v1312, 0
      %v1315 = vshrl.u32 %v1314, 5
      %v1316 = vand.u32 %v1314, 31
      %v1317 = vsub.s32 32, %v1316
      %v1318 = vshrl.u32 683565275, %v1317
      %v1319 = vshll.u32 683565275, %v1316
      %v1320 = vshrl.u32 2475754826, %v1317
      %v1321 = vor.u32 %v1319, %v1320
      %v1322 = vshll.u32 2475754826, %v1316
      %v1323 = vshrl.u32 2131351028, %v1317
      %v1324 = vor.u32 %v1322, %v1323
      %v1325 = vshll.u32 2131351028, %v1316
      %v1326 = vshrl.u32 2102212464, %v1317
      %v1327 = vor.u32 %v1325, %v1326
      %v1328 = vshll.u32 2102212464, %v1316
      %v1329 = vshrl.u32 920167782, %v1317
      %v1330 = vor.u32 %v1328, %v1329
      %v1331 = vshll.u32 920167782, %v1316
      %v1332 = vshrl.u32 1326507024, %v1317
      %v1333 = vor.u32 %v1331, %v1332
      %vm1334 = vcmp.lt.s32.totalorder %v1315, 1
      %vm1335 = vcmp.lt.s32.totalorder %v1315, 2
      %vm1336 = vcmp.lt.s32.totalorder %v1315, 3
      %vm1337 = vcmp.lt.s32.totalorder %v1315, 4
      %v1338 = vsel %vm1334, %v1318, %v1321
      %v1339 = vsel %vm1337, %v1327, 2102212464
      %v1340 = vsel %vm1336, %v1324, %v1339
      %v1341 = vsel %vm1335, %v1338, %v1340
      %v1342 = vsel %vm1334, %v1321, %v1324
      %v1343 = vsel %vm1337, %v1330, 920167782
      %v1344 = vsel %vm1336, %v1327, %v1343
      %v1345 = vsel %vm1335, %v1342, %v1344
      %v1346 = vsel %vm1334, %v1324, %v1327
      %v1347 = vsel %vm1337, %v1333, 1326507024
      %v1348 = vsel %vm1336, %v1330, %v1347
      %v1349 = vsel %vm1335, %v1346, %v1348
      %v1350 = vshll.u32 %v1310, 8
      %v1351 = vmul.u32.u64.compose %v1350, %v1349
      %v1352 = vextract.low.u32 %v1351
      %v1353 = vextract.high.u32 %v1351
      %v1354 = vmul.u32.u64.compose %v1350, %v1345
      %v1355 = vextract.low.u32 %v1354
      %v1356 = vextract.high.u32 %v1354
      %v1357 = vmul.u32 %v1350, %v1341
      %v1358 = vadd.s32 %v1353, %v1355
      %vm1359 = vc.u32 %v1353, %v1355
      %v1360 = vadd.s32 %v1356, 1
      %v1361 = vsel %vm1359, %v1360, %v1356
      %v1362 = vadd.s32 %v1357, %v1361
      %v1363 = vadd.s32 %v1362, 536870912
      %v1364 = vshrl.u32 %v1363, 30
      %v1365 = vshll.u32 %v1364, 30
      %v1366 = vsub.s32 %v1362, %v1365
      %vm1367 = vcmp.lt.s32.totalorder %v1366, 0
      %v1368 = vsub.s32 0, %v1366
      %v1369 = vsel %vm1367, %v1368, %v1366
      %v1370 = vclz %v1369
      %v1371 = vsub.s32 %v1370, 2
      %vm1372 = vcmp.gt.s32.totalorder 0, %v1371
      %v1373 = vsel %vm1372, 0, %v1371
      %v1374 = vsub.s32 32, %v1373
      %v1375 = vshll.u32 %v1366, %v1373
      %v1376 = vshrl.u32 %v1358, %v1374
      %v1377 = vor.u32 %v1375, %v1376
      %v1378 = vsub.s32 4294967266, %v1373
      %v1379 = vadd.s32 %v1378, 127
      %v1380 = vshll.u32 %v1379, 23
      %v1381 = vor.u32 4788187, %v1380
      %v1382 = vand.u32 2147483647, %v1381
      %v1384 = vcvt.s32.f32 %v1377
      %v1385 = vmul.f32 %v1384, %v1382
      %v1386 = vxor.u32 %v1385, 2147483648
      %v1387 = vsel %vm1304, %v1386, %v1385
      %v1388 = vsub.s32 4, %v1364
      %v1389 = vsel %vm1304, %v1388, %v1364
      %v1390 = vsel %vm1303, %v1195, %v1387
      %v1391 = vsel %vm1303, 0, %v1389
      %v1392 = vcosq.f32.pop %v1390
      %v1393 = vsinq.f32.pop %v1390
      %vm1394 = vweird.f32 %v1195
      %v1395 = vadd.s32 %v1391, 3
      %v1396 = vand.u32 %v1395, 3
      %vm1397 = vcmp.lt.s32.totalorder %v1396, 2
      %vm1398 = vcmp.eq.s32.totalorder %v1396, 0
      %v1399 = vxor.u32 %v1393, 2147483648
      %v1400 = vsel %vm1398, %v1392, %v1399
      %vm1401 = vcmp.eq.s32.totalorder %v1396, 2
      %v1402 = vxor.u32 %v1392, 2147483648
      %v1403 = vsel %vm1401, %v1402, %v1393
      %v1404 = vsel %vm1397, %v1400, %v1403
      %v1405 = vsel %vm1394, nan, %v1404
      %v1406 = vand.u32 2147483647, %v1196
      %vm1407 = vcmp.le.f32.partialorder %v1406, 0.7853982
      %vm1408 = vcmp.lt.s32.totalorder %v1196, 0
      %v1409 = vand.u32 %v1196, 2139095040
      %v1410 = vshrl.u32 %v1409, 23
      %v1411 = vsub.s32 %v1410, 127
      %v1412 = vand.u32 2147483647, %v1196
      %v1413 = vand.u32 %v1412, 8388607
      %v1414 = vor.u32 %v1413, 8388608
      %v1415 = vsub.s32 0, %v1414
      %v1416 = vadd.s32 %v1411, 1
      %vm1417 = vcmp.gt.s32.totalorder %v1416, 0
      %v1418 = vsel %vm1417, %v1416, 0
      %v1419 = vshrl.u32 %v1418, 5
      %v1420 = vand.u32 %v1418, 31
      %v1421 = vsub.s32 32, %v1420
      %v1422 = vshrl.u32 683565275, %v1421
      %v1423 = vshll.u32 683565275, %v1420
      %v1424 = vshrl.u32 2475754826, %v1421
      %v1425 = vor.u32 %v1423, %v1424
      %v1426 = vshll.u32 2475754826, %v1420
      %v1427 = vshrl.u32 2131351028, %v1421
      %v1428 = vor.u32 %v1426, %v1427
      %v1429 = vshll.u32 2131351028, %v1420
      %v1430 = vshrl.u32 2102212464, %v1421
      %v1431 = vor.u32 %v1429, %v1430
      %v1432 = vshll.u32 2102212464, %v1420
      %v1433 = vshrl.u32 920167782, %v1421
      %v1434 = vor.u32 %v1432, %v1433
      %v1435 = vshll.u32 920167782, %v1420
      %v1436 = vshrl.u32 1326507024, %v1421
      %v1437 = vor.u32 %v1435, %v1436
      %vm1438 = vcmp.lt.s32.totalorder %v1419, 1
      %vm1439 = vcmp.lt.s32.totalorder %v1419, 2
      %vm1440 = vcmp.lt.s32.totalorder %v1419, 3
      %vm1441 = vcmp.lt.s32.totalorder %v1419, 4
      %v1442 = vsel %vm1438, %v1422, %v1425
      %v1443 = vsel %vm1441, %v1431, 2102212464
      %v1444 = vsel %vm1440, %v1428, %v1443
      %v1445 = vsel %vm1439, %v1442, %v1444
      %v1446 = vsel %vm1438, %v1425, %v1428
      %v1447 = vsel %vm1441, %v1434, 920167782
      %v1448 = vsel %vm1440, %v1431, %v1447
      %v1449 = vsel %vm1439, %v1446, %v1448
      %v1450 = vsel %vm1438, %v1428, %v1431
      %v1451 = vsel %vm1441, %v1437, 1326507024
      %v1452 = vsel %vm1440, %v1434, %v1451
      %v1453 = vsel %vm1439, %v1450, %v1452
      %v1454 = vshll.u32 %v1414, 8
      %v1455 = vmul.u32.u64.compose %v1454, %v1453
      %v1456 = vextract.low.u32 %v1455
      %v1457 = vextract.high.u32 %v1455
      %v1458 = vmul.u32.u64.compose %v1454, %v1449
      %v1459 = vextract.low.u32 %v1458
      %v1460 = vextract.high.u32 %v1458
      %v1461 = vmul.u32 %v1454, %v1445
      %v1462 = vadd.s32 %v1457, %v1459
      %vm1463 = vc.u32 %v1457, %v1459
      %v1464 = vadd.s32 %v1460, 1
      %v1465 = vsel %vm1463, %v1464, %v1460
      %v1466 = vadd.s32 %v1461, %v1465
      %v1467 = vadd.s32 %v1466, 536870912
      %v1468 = vshrl.u32 %v1467, 30
      %v1469 = vshll.u32 %v1468, 30
      %v1470 = vsub.s32 %v1466, %v1469
      %vm1471 = vcmp.lt.s32.totalorder %v1470, 0
      %v1472 = vsub.s32 0, %v1470
      %v1473 = vsel %vm1471, %v1472, %v1470
      %v1474 = vclz %v1473
      %v1475 = vsub.s32 %v1474, 2
      %vm1476 = vcmp.gt.s32.totalorder 0, %v1475
      %v1477 = vsel %vm1476, 0, %v1475
      %v1478 = vsub.s32 32, %v1477
      %v1479 = vshll.u32 %v1470, %v1477
      %v1480 = vshrl.u32 %v1462, %v1478
      %v1481 = vor.u32 %v1479, %v1480
      %v1482 = vsub.s32 4294967266, %v1477
      %v1483 = vadd.s32 %v1482, 127
      %v1484 = vshll.u32 %v1483, 23
      %v1485 = vor.u32 4788187, %v1484
      %v1486 = vand.u32 2147483647, %v1485
      %v1488 = vcvt.s32.f32 %v1481
      %v1489 = vmul.f32 %v1488, %v1486
      %v1490 = vxor.u32 %v1489, 2147483648
      %v1491 = vsel %vm1408, %v1490, %v1489
      %v1492 = vsub.s32 4, %v1468
      %v1493 = vsel %vm1408, %v1492, %v1468
      %v1494 = vsel %vm1407, %v1196, %v1491
      %v1495 = vsel %vm1407, 0, %v1493
      %v1496 = vcosq.f32.pop %v1494
      %v1497 = vsinq.f32.pop %v1494
      %vm1498 = vweird.f32 %v1196
      %v1499 = vadd.s32 %v1495, 3
      %v1500 = vand.u32 %v1499, 3
      %vm1501 = vcmp.lt.s32.totalorder %v1500, 2
      %vm1502 = vcmp.eq.s32.totalorder %v1500, 0
      %v1503 = vxor.u32 %v1497, 2147483648
      %v1504 = vsel %vm1502, %v1496, %v1503
      %vm1505 = vcmp.eq.s32.totalorder %v1500, 2
      %v1506 = vxor.u32 %v1496, 2147483648
      %v1507 = vsel %vm1505, %v1506, %v1497
      %v1508 = vsel %vm1501, %v1504, %v1507
      %v1509 = vsel %vm1498, nan, %v1508
      %v1510 = vand.u32 2147483647, %v1197
      %vm1511 = vcmp.le.f32.partialorder %v1510, 0.7853982
      %vm1512 = vcmp.lt.s32.totalorder %v1197, 0
      %v1513 = vand.u32 %v1197, 2139095040
      %v1514 = vshrl.u32 %v1513, 23
      %v1515 = vsub.s32 %v1514, 127
      %v1516 = vand.u32 2147483647, %v1197
      %v1517 = vand.u32 %v1516, 8388607
      %v1518 = vor.u32 %v1517, 8388608
      %v1519 = vsub.s32 0, %v1518
      %v1520 = vadd.s32 %v1515, 1
      %vm1521 = vcmp.gt.s32.totalorder %v1520, 0
      %v1522 = vsel %vm1521, %v1520, 0
      %v1523 = vshrl.u32 %v1522, 5
      %v1524 = vand.u32 %v1522, 31
      %v1525 = vsub.s32 32, %v1524
      %v1526 = vshrl.u32 683565275, %v1525
      %v1527 = vshll.u32 683565275, %v1524
      %v1528 = vshrl.u32 2475754826, %v1525
      %v1529 = vor.u32 %v1527, %v1528
      %v1530 = vshll.u32 2475754826, %v1524
      %v1531 = vshrl.u32 2131351028, %v1525
      %v1532 = vor.u32 %v1530, %v1531
      %v1533 = vshll.u32 2131351028, %v1524
      %v1534 = vshrl.u32 2102212464, %v1525
      %v1535 = vor.u32 %v1533, %v1534
      %v1536 = vshll.u32 2102212464, %v1524
      %v1537 = vshrl.u32 920167782, %v1525
      %v1538 = vor.u32 %v1536, %v1537
      %v1539 = vshll.u32 920167782, %v1524
      %v1540 = vshrl.u32 1326507024, %v1525
      %v1541 = vor.u32 %v1539, %v1540
      %vm1542 = vcmp.lt.s32.totalorder %v1523, 1
      %vm1543 = vcmp.lt.s32.totalorder %v1523, 2
      %vm1544 = vcmp.lt.s32.totalorder %v1523, 3
      %vm1545 = vcmp.lt.s32.totalorder %v1523, 4
      %v1546 = vsel %vm1542, %v1526, %v1529
      %v1547 = vsel %vm1545, %v1535, 2102212464
      %v1548 = vsel %vm1544, %v1532, %v1547
      %v1549 = vsel %vm1543, %v1546, %v1548
      %v1550 = vsel %vm1542, %v1529, %v1532
      %v1551 = vsel %vm1545, %v1538, 920167782
      %v1552 = vsel %vm1544, %v1535, %v1551
      %v1553 = vsel %vm1543, %v1550, %v1552
      %v1554 = vsel %vm1542, %v1532, %v1535
      %v1555 = vsel %vm1545, %v1541, 1326507024
      %v1556 = vsel %vm1544, %v1538, %v1555
      %v1557 = vsel %vm1543, %v1554, %v1556
      %v1558 = vshll.u32 %v1518, 8
      %v1559 = vmul.u32.u64.compose %v1558, %v1557
      %v1560 = vextract.low.u32 %v1559
      %v1561 = vextract.high.u32 %v1559
      %v1562 = vmul.u32.u64.compose %v1558, %v1553
      %v1563 = vextract.low.u32 %v1562
      %v1564 = vextract.high.u32 %v1562
      %v1565 = vmul.u32 %v1558, %v1549
      %v1566 = vadd.s32 %v1561, %v1563
      %vm1567 = vc.u32 %v1561, %v1563
      %v1568 = vadd.s32 %v1564, 1
      %v1569 = vsel %vm1567, %v1568, %v1564
      %v1570 = vadd.s32 %v1565, %v1569
      %v1571 = vadd.s32 %v1570, 536870912
      %v1572 = vshrl.u32 %v1571, 30
      %v1573 = vshll.u32 %v1572, 30
      %v1574 = vsub.s32 %v1570, %v1573
      %vm1575 = vcmp.lt.s32.totalorder %v1574, 0
      %v1576 = vsub.s32 0, %v1574
      %v1577 = vsel %vm1575, %v1576, %v1574
      %v1578 = vclz %v1577
      %v1579 = vsub.s32 %v1578, 2
      %vm1580 = vcmp.gt.s32.totalorder 0, %v1579
      %v1581 = vsel %vm1580, 0, %v1579
      %v1582 = vsub.s32 32, %v1581
      %v1583 = vshll.u32 %v1574, %v1581
      %v1584 = vshrl.u32 %v1566, %v1582
      %v1585 = vor.u32 %v1583, %v1584
      %v1586 = vsub.s32 4294967266, %v1581
      %v1587 = vadd.s32 %v1586, 127
      %v1588 = vshll.u32 %v1587, 23
      %v1589 = vor.u32 4788187, %v1588
      %v1590 = vand.u32 2147483647, %v1589
      %v1592 = vcvt.s32.f32 %v1585
      %v1593 = vmul.f32 %v1592, %v1590
      %v1594 = vxor.u32 %v1593, 2147483648
      %v1595 = vsel %vm1512, %v1594, %v1593
      %v1596 = vsub.s32 4, %v1572
      %v1597 = vsel %vm1512, %v1596, %v1572
      %v1598 = vsel %vm1511, %v1197, %v1595
      %v1599 = vsel %vm1511, 0, %v1597
      %v1600 = vcosq.f32.pop %v1598
      %v1601 = vsinq.f32.pop %v1598
      %vm1602 = vweird.f32 %v1197
      %v1603 = vadd.s32 %v1599, 3
      %v1604 = vand.u32 %v1603, 3
      %vm1605 = vcmp.lt.s32.totalorder %v1604, 2
      %vm1606 = vcmp.eq.s32.totalorder %v1604, 0
      %v1607 = vxor.u32 %v1601, 2147483648
      %v1608 = vsel %vm1606, %v1600, %v1607
      %vm1609 = vcmp.eq.s32.totalorder %v1604, 2
      %v1610 = vxor.u32 %v1600, 2147483648
      %v1611 = vsel %vm1609, %v1610, %v1601
      %v1612 = vsel %vm1605, %v1608, %v1611
      %v1613 = vsel %vm1602, nan, %v1612
      %v1614 = vand.u32 2147483647, %v1194
      %vm1615 = vcmp.le.f32.partialorder %v1614, 0.7853982
      %vm1616 = vcmp.lt.s32.totalorder %v1194, 0
      %v1617 = vand.u32 %v1194, 2139095040
      %v1618 = vshrl.u32 %v1617, 23
      %v1619 = vsub.s32 %v1618, 127
      %v1620 = vand.u32 2147483647, %v1194
      %v1621 = vand.u32 %v1620, 8388607
      %v1622 = vor.u32 %v1621, 8388608
      %v1623 = vsub.s32 0, %v1622
      %v1624 = vadd.s32 %v1619, 1
      %vm1625 = vcmp.gt.s32.totalorder %v1624, 0
      %v1626 = vsel %vm1625, %v1624, 0
      %v1627 = vshrl.u32 %v1626, 5
      %v1628 = vand.u32 %v1626, 31
      %v1629 = vsub.s32 32, %v1628
      %v1630 = vshrl.u32 683565275, %v1629
      %v1631 = vshll.u32 683565275, %v1628
      %v1632 = vshrl.u32 2475754826, %v1629
      %v1633 = vor.u32 %v1631, %v1632
      %v1634 = vshll.u32 2475754826, %v1628
      %v1635 = vshrl.u32 2131351028, %v1629
      %v1636 = vor.u32 %v1634, %v1635
      %v1637 = vshll.u32 2131351028, %v1628
      %v1638 = vshrl.u32 2102212464, %v1629
      %v1639 = vor.u32 %v1637, %v1638
      %v1640 = vshll.u32 2102212464, %v1628
      %v1641 = vshrl.u32 920167782, %v1629
      %v1642 = vor.u32 %v1640, %v1641
      %v1643 = vshll.u32 920167782, %v1628
      %v1644 = vshrl.u32 1326507024, %v1629
      %v1645 = vor.u32 %v1643, %v1644
      %vm1646 = vcmp.lt.s32.totalorder %v1627, 1
      %vm1647 = vcmp.lt.s32.totalorder %v1627, 2
      %vm1648 = vcmp.lt.s32.totalorder %v1627, 3
      %vm1649 = vcmp.lt.s32.totalorder %v1627, 4
      %v1650 = vsel %vm1646, %v1630, %v1633
      %v1651 = vsel %vm1649, %v1639, 2102212464
      %v1652 = vsel %vm1648, %v1636, %v1651
      %v1653 = vsel %vm1647, %v1650, %v1652
      %v1654 = vsel %vm1646, %v1633, %v1636
      %v1655 = vsel %vm1649, %v1642, 920167782
      %v1656 = vsel %vm1648, %v1639, %v1655
      %v1657 = vsel %vm1647, %v1654, %v1656
      %v1658 = vsel %vm1646, %v1636, %v1639
      %v1659 = vsel %vm1649, %v1645, 1326507024
      %v1660 = vsel %vm1648, %v1642, %v1659
      %v1661 = vsel %vm1647, %v1658, %v1660
      %v1662 = vshll.u32 %v1622, 8
      %v1663 = vmul.u32.u64.compose %v1662, %v1661
      %v1664 = vextract.low.u32 %v1663
      %v1665 = vextract.high.u32 %v1663
      %v1666 = vmul.u32.u64.compose %v1662, %v1657
      %v1667 = vextract.low.u32 %v1666
      %v1668 = vextract.high.u32 %v1666
      %v1669 = vmul.u32 %v1662, %v1653
      %v1670 = vadd.s32 %v1665, %v1667
      %vm1671 = vc.u32 %v1665, %v1667
      %v1672 = vadd.s32 %v1668, 1
      %v1673 = vsel %vm1671, %v1672, %v1668
      %v1674 = vadd.s32 %v1669, %v1673
      %v1675 = vadd.s32 %v1674, 536870912
      %v1676 = vshrl.u32 %v1675, 30
      %v1677 = vshll.u32 %v1676, 30
      %v1678 = vsub.s32 %v1674, %v1677
      %vm1679 = vcmp.lt.s32.totalorder %v1678, 0
      %v1680 = vsub.s32 0, %v1678
      %v1681 = vsel %vm1679, %v1680, %v1678
      %v1682 = vclz %v1681
      %v1683 = vsub.s32 %v1682, 2
      %vm1684 = vcmp.gt.s32.totalorder 0, %v1683
      %v1685 = vsel %vm1684, 0, %v1683
      %v1686 = vsub.s32 32, %v1685
      %v1687 = vshll.u32 %v1678, %v1685
      %v1688 = vshrl.u32 %v1670, %v1686
      %v1689 = vor.u32 %v1687, %v1688
      %v1690 = vsub.s32 4294967266, %v1685
      %v1691 = vadd.s32 %v1690, 127
      %v1692 = vshll.u32 %v1691, 23
      %v1693 = vor.u32 4788187, %v1692
      %v1694 = vand.u32 2147483647, %v1693
      %v1696 = vcvt.s32.f32 %v1689
      %v1697 = vmul.f32 %v1696, %v1694
      %v1698 = vxor.u32 %v1697, 2147483648
      %v1699 = vsel %vm1616, %v1698, %v1697
      %v1700 = vsub.s32 4, %v1676
      %v1701 = vsel %vm1616, %v1700, %v1676
      %v1702 = vsel %vm1615, %v1194, %v1699
      %v1703 = vsel %vm1615, 0, %v1701
      %v1704 = vcosq.f32.pop %v1702
      %v1705 = vsinq.f32.pop %v1702
      %vm1706 = vweird.f32 %v1194
      %v1707 = vand.u32 %v1703, 3
      %vm1708 = vcmp.lt.s32.totalorder %v1707, 2
      %vm1709 = vcmp.eq.s32.totalorder %v1707, 0
      %v1710 = vxor.u32 %v1705, 2147483648
      %v1711 = vsel %vm1709, %v1704, %v1710
      %vm1712 = vcmp.eq.s32.totalorder %v1707, 2
      %v1713 = vxor.u32 %v1704, 2147483648
      %v1714 = vsel %vm1712, %v1713, %v1705
      %v1715 = vsel %vm1708, %v1711, %v1714
      %v1716 = vsel %vm1706, nan, %v1715
      %v1717 = vand.u32 2147483647, %v1195
      %vm1718 = vcmp.le.f32.partialorder %v1717, 0.7853982
      %vm1719 = vcmp.lt.s32.totalorder %v1195, 0
      %v1720 = vand.u32 %v1195, 2139095040
      %v1721 = vshrl.u32 %v1720, 23
      %v1722 = vsub.s32 %v1721, 127
      %v1723 = vand.u32 2147483647, %v1195
      %v1724 = vand.u32 %v1723, 8388607
      %v1725 = vor.u32 %v1724, 8388608
      %v1726 = vsub.s32 0, %v1725
      %v1727 = vadd.s32 %v1722, 1
      %vm1728 = vcmp.gt.s32.totalorder %v1727, 0
      %v1729 = vsel %vm1728, %v1727, 0
      %v1730 = vshrl.u32 %v1729, 5
      %v1731 = vand.u32 %v1729, 31
      %v1732 = vsub.s32 32, %v1731
      %v1733 = vshrl.u32 683565275, %v1732
      %v1734 = vshll.u32 683565275, %v1731
      %v1735 = vshrl.u32 2475754826, %v1732
      %v1736 = vor.u32 %v1734, %v1735
      %v1737 = vshll.u32 2475754826, %v1731
      %v1738 = vshrl.u32 2131351028, %v1732
      %v1739 = vor.u32 %v1737, %v1738
      %v1740 = vshll.u32 2131351028, %v1731
      %v1741 = vshrl.u32 2102212464, %v1732
      %v1742 = vor.u32 %v1740, %v1741
      %v1743 = vshll.u32 2102212464, %v1731
      %v1744 = vshrl.u32 920167782, %v1732
      %v1745 = vor.u32 %v1743, %v1744
      %v1746 = vshll.u32 920167782, %v1731
      %v1747 = vshrl.u32 1326507024, %v1732
      %v1748 = vor.u32 %v1746, %v1747
      %vm1749 = vcmp.lt.s32.totalorder %v1730, 1
      %vm1750 = vcmp.lt.s32.totalorder %v1730, 2
      %vm1751 = vcmp.lt.s32.totalorder %v1730, 3
      %vm1752 = vcmp.lt.s32.totalorder %v1730, 4
      %v1753 = vsel %vm1749, %v1733, %v1736
      %v1754 = vsel %vm1752, %v1742, 2102212464
      %v1755 = vsel %vm1751, %v1739, %v1754
      %v1756 = vsel %vm1750, %v1753, %v1755
      %v1757 = vsel %vm1749, %v1736, %v1739
      %v1758 = vsel %vm1752, %v1745, 920167782
      %v1759 = vsel %vm1751, %v1742, %v1758
      %v1760 = vsel %vm1750, %v1757, %v1759
      %v1761 = vsel %vm1749, %v1739, %v1742
      %v1762 = vsel %vm1752, %v1748, 1326507024
      %v1763 = vsel %vm1751, %v1745, %v1762
      %v1764 = vsel %vm1750, %v1761, %v1763
      %v1765 = vshll.u32 %v1725, 8
      %v1766 = vmul.u32.u64.compose %v1765, %v1764
      %v1767 = vextract.low.u32 %v1766
      %v1768 = vextract.high.u32 %v1766
      %v1769 = vmul.u32.u64.compose %v1765, %v1760
      %v1770 = vextract.low.u32 %v1769
      %v1771 = vextract.high.u32 %v1769
      %v1772 = vmul.u32 %v1765, %v1756
      %v1773 = vadd.s32 %v1768, %v1770
      %vm1774 = vc.u32 %v1768, %v1770
      %v1775 = vadd.s32 %v1771, 1
      %v1776 = vsel %vm1774, %v1775, %v1771
      %v1777 = vadd.s32 %v1772, %v1776
      %v1778 = vadd.s32 %v1777, 536870912
      %v1779 = vshrl.u32 %v1778, 30
      %v1780 = vshll.u32 %v1779, 30
      %v1781 = vsub.s32 %v1777, %v1780
      %vm1782 = vcmp.lt.s32.totalorder %v1781, 0
      %v1783 = vsub.s32 0, %v1781
      %v1784 = vsel %vm1782, %v1783, %v1781
      %v1785 = vclz %v1784
      %v1786 = vsub.s32 %v1785, 2
      %vm1787 = vcmp.gt.s32.totalorder 0, %v1786
      %v1788 = vsel %vm1787, 0, %v1786
      %v1789 = vsub.s32 32, %v1788
      %v1790 = vshll.u32 %v1781, %v1788
      %v1791 = vshrl.u32 %v1773, %v1789
      %v1792 = vor.u32 %v1790, %v1791
      %v1793 = vsub.s32 4294967266, %v1788
      %v1794 = vadd.s32 %v1793, 127
      %v1795 = vshll.u32 %v1794, 23
      %v1796 = vor.u32 4788187, %v1795
      %v1797 = vand.u32 2147483647, %v1796
      %v1799 = vcvt.s32.f32 %v1792
      %v1800 = vmul.f32 %v1799, %v1797
      %v1801 = vxor.u32 %v1800, 2147483648
      %v1802 = vsel %vm1719, %v1801, %v1800
      %v1803 = vsub.s32 4, %v1779
      %v1804 = vsel %vm1719, %v1803, %v1779
      %v1805 = vsel %vm1718, %v1195, %v1802
      %v1806 = vsel %vm1718, 0, %v1804
      %v1807 = vcosq.f32.pop %v1805
      %v1808 = vsinq.f32.pop %v1805
      %vm1809 = vweird.f32 %v1195
      %v1810 = vand.u32 %v1806, 3
      %vm1811 = vcmp.lt.s32.totalorder %v1810, 2
      %vm1812 = vcmp.eq.s32.totalorder %v1810, 0
      %v1813 = vxor.u32 %v1808, 2147483648
      %v1814 = vsel %vm1812, %v1807, %v1813
      %vm1815 = vcmp.eq.s32.totalorder %v1810, 2
      %v1816 = vxor.u32 %v1807, 2147483648
      %v1817 = vsel %vm1815, %v1816, %v1808
      %v1818 = vsel %vm1811, %v1814, %v1817
      %v1819 = vsel %vm1809, nan, %v1818
      %v1820 = vand.u32 2147483647, %v1196
      %vm1821 = vcmp.le.f32.partialorder %v1820, 0.7853982
      %vm1822 = vcmp.lt.s32.totalorder %v1196, 0
      %v1823 = vand.u32 %v1196, 2139095040
      %v1824 = vshrl.u32 %v1823, 23
      %v1825 = vsub.s32 %v1824, 127
      %v1826 = vand.u32 2147483647, %v1196
      %v1827 = vand.u32 %v1826, 8388607
      %v1828 = vor.u32 %v1827, 8388608
      %v1829 = vsub.s32 0, %v1828
      %v1830 = vadd.s32 %v1825, 1
      %vm1831 = vcmp.gt.s32.totalorder %v1830, 0
      %v1832 = vsel %vm1831, %v1830, 0
      %v1833 = vshrl.u32 %v1832, 5
      %v1834 = vand.u32 %v1832, 31
      %v1835 = vsub.s32 32, %v1834
      %v1836 = vshrl.u32 683565275, %v1835
      %v1837 = vshll.u32 683565275, %v1834
      %v1838 = vshrl.u32 2475754826, %v1835
      %v1839 = vor.u32 %v1837, %v1838
      %v1840 = vshll.u32 2475754826, %v1834
      %v1841 = vshrl.u32 2131351028, %v1835
      %v1842 = vor.u32 %v1840, %v1841
      %v1843 = vshll.u32 2131351028, %v1834
      %v1844 = vshrl.u32 2102212464, %v1835
      %v1845 = vor.u32 %v1843, %v1844
      %v1846 = vshll.u32 2102212464, %v1834
      %v1847 = vshrl.u32 920167782, %v1835
      %v1848 = vor.u32 %v1846, %v1847
      %v1849 = vshll.u32 920167782, %v1834
      %v1850 = vshrl.u32 1326507024, %v1835
      %v1851 = vor.u32 %v1849, %v1850
      %vm1852 = vcmp.lt.s32.totalorder %v1833, 1
      %vm1853 = vcmp.lt.s32.totalorder %v1833, 2
      %vm1854 = vcmp.lt.s32.totalorder %v1833, 3
      %vm1855 = vcmp.lt.s32.totalorder %v1833, 4
      %v1856 = vsel %vm1852, %v1836, %v1839
      %v1857 = vsel %vm1855, %v1845, 2102212464
      %v1858 = vsel %vm1854, %v1842, %v1857
      %v1859 = vsel %vm1853, %v1856, %v1858
      %v1860 = vsel %vm1852, %v1839, %v1842
      %v1861 = vsel %vm1855, %v1848, 920167782
      %v1862 = vsel %vm1854, %v1845, %v1861
      %v1863 = vsel %vm1853, %v1860, %v1862
      %v1864 = vsel %vm1852, %v1842, %v1845
      %v1865 = vsel %vm1855, %v1851, 1326507024
      %v1866 = vsel %vm1854, %v1848, %v1865
      %v1867 = vsel %vm1853, %v1864, %v1866
      %v1868 = vshll.u32 %v1828, 8
      %v1869 = vmul.u32.u64.compose %v1868, %v1867
      %v1870 = vextract.low.u32 %v1869
      %v1871 = vextract.high.u32 %v1869
      %v1872 = vmul.u32.u64.compose %v1868, %v1863
      %v1873 = vextract.low.u32 %v1872
      %v1874 = vextract.high.u32 %v1872
      %v1875 = vmul.u32 %v1868, %v1859
      %v1876 = vadd.s32 %v1871, %v1873
      %vm1877 = vc.u32 %v1871, %v1873
      %v1878 = vadd.s32 %v1874, 1
      %v1879 = vsel %vm1877, %v1878, %v1874
      %v1880 = vadd.s32 %v1875, %v1879
      %v1881 = vadd.s32 %v1880, 536870912
      %v1882 = vshrl.u32 %v1881, 30
      %v1883 = vshll.u32 %v1882, 30
      %v1884 = vsub.s32 %v1880, %v1883
      %vm1885 = vcmp.lt.s32.totalorder %v1884, 0
      %v1886 = vsub.s32 0, %v1884
      %v1887 = vsel %vm1885, %v1886, %v1884
      %v1888 = vclz %v1887
      %v1889 = vsub.s32 %v1888, 2
      %vm1890 = vcmp.gt.s32.totalorder 0, %v1889
      %v1891 = vsel %vm1890, 0, %v1889
      %v1892 = vsub.s32 32, %v1891
      %v1893 = vshll.u32 %v1884, %v1891
      %v1894 = vshrl.u32 %v1876, %v1892
      %v1895 = vor.u32 %v1893, %v1894
      %v1896 = vsub.s32 4294967266, %v1891
      %v1897 = vadd.s32 %v1896, 127
      %v1898 = vshll.u32 %v1897, 23
      %v1899 = vor.u32 4788187, %v1898
      %v1900 = vand.u32 2147483647, %v1899
      %v1902 = vcvt.s32.f32 %v1895
      %v1903 = vmul.f32 %v1902, %v1900
      %v1904 = vxor.u32 %v1903, 2147483648
      %v1905 = vsel %vm1822, %v1904, %v1903
      %v1906 = vsub.s32 4, %v1882
      %v1907 = vsel %vm1822, %v1906, %v1882
      %v1908 = vsel %vm1821, %v1196, %v1905
      %v1909 = vsel %vm1821, 0, %v1907
      %v1910 = vcosq.f32.pop %v1908
      %v1911 = vsinq.f32.pop %v1908
      %vm1912 = vweird.f32 %v1196
      %v1913 = vand.u32 %v1909, 3
      %vm1914 = vcmp.lt.s32.totalorder %v1913, 2
      %vm1915 = vcmp.eq.s32.totalorder %v1913, 0
      %v1916 = vxor.u32 %v1911, 2147483648
      %v1917 = vsel %vm1915, %v1910, %v1916
      %vm1918 = vcmp.eq.s32.totalorder %v1913, 2
      %v1919 = vxor.u32 %v1910, 2147483648
      %v1920 = vsel %vm1918, %v1919, %v1911
      %v1921 = vsel %vm1914, %v1917, %v1920
      %v1922 = vsel %vm1912, nan, %v1921
      %v1923 = vand.u32 2147483647, %v1197
      %vm1924 = vcmp.le.f32.partialorder %v1923, 0.7853982
      %vm1925 = vcmp.lt.s32.totalorder %v1197, 0
      %v1926 = vand.u32 %v1197, 2139095040
      %v1927 = vshrl.u32 %v1926, 23
      %v1928 = vsub.s32 %v1927, 127
      %v1929 = vand.u32 2147483647, %v1197
      %v1930 = vand.u32 %v1929, 8388607
      %v1931 = vor.u32 %v1930, 8388608
      %v1932 = vsub.s32 0, %v1931
      %v1933 = vadd.s32 %v1928, 1
      %vm1934 = vcmp.gt.s32.totalorder %v1933, 0
      %v1935 = vsel %vm1934, %v1933, 0
      %v1936 = vshrl.u32 %v1935, 5
      %v1937 = vand.u32 %v1935, 31
      %v1938 = vsub.s32 32, %v1937
      %v1939 = vshrl.u32 683565275, %v1938
      %v1940 = vshll.u32 683565275, %v1937
      %v1941 = vshrl.u32 2475754826, %v1938
      %v1942 = vor.u32 %v1940, %v1941
      %v1943 = vshll.u32 2475754826, %v1937
      %v1944 = vshrl.u32 2131351028, %v1938
      %v1945 = vor.u32 %v1943, %v1944
      %v1946 = vshll.u32 2131351028, %v1937
      %v1947 = vshrl.u32 2102212464, %v1938
      %v1948 = vor.u32 %v1946, %v1947
      %v1949 = vshll.u32 2102212464, %v1937
      %v1950 = vshrl.u32 920167782, %v1938
      %v1951 = vor.u32 %v1949, %v1950
      %v1952 = vshll.u32 920167782, %v1937
      %v1953 = vshrl.u32 1326507024, %v1938
      %v1954 = vor.u32 %v1952, %v1953
      %vm1955 = vcmp.lt.s32.totalorder %v1936, 1
      %vm1956 = vcmp.lt.s32.totalorder %v1936, 2
      %vm1957 = vcmp.lt.s32.totalorder %v1936, 3
      %vm1958 = vcmp.lt.s32.totalorder %v1936, 4
      %v1959 = vsel %vm1955, %v1939, %v1942
      %v1960 = vsel %vm1958, %v1948, 2102212464
      %v1961 = vsel %vm1957, %v1945, %v1960
      %v1962 = vsel %vm1956, %v1959, %v1961
      %v1963 = vsel %vm1955, %v1942, %v1945
      %v1964 = vsel %vm1958, %v1951, 920167782
      %v1965 = vsel %vm1957, %v1948, %v1964
      %v1966 = vsel %vm1956, %v1963, %v1965
      %v1967 = vsel %vm1955, %v1945, %v1948
      %v1968 = vsel %vm1958, %v1954, 1326507024
      %v1969 = vsel %vm1957, %v1951, %v1968
      %v1970 = vsel %vm1956, %v1967, %v1969
      %v1971 = vshll.u32 %v1931, 8
      %v1972 = vmul.u32.u64.compose %v1971, %v1970
      %v1973 = vextract.low.u32 %v1972
      %v1974 = vextract.high.u32 %v1972
      %v1975 = vmul.u32.u64.compose %v1971, %v1966
      %v1976 = vextract.low.u32 %v1975
      %v1977 = vextract.high.u32 %v1975
      %v1978 = vmul.u32 %v1971, %v1962
      %v1979 = vadd.s32 %v1974, %v1976
      %vm1980 = vc.u32 %v1974, %v1976
      %v1981 = vadd.s32 %v1977, 1
      %v1982 = vsel %vm1980, %v1981, %v1977
      %v1983 = vadd.s32 %v1978, %v1982
      %v1984 = vadd.s32 %v1983, 536870912
      %v1985 = vshrl.u32 %v1984, 30
      %v1986 = vshll.u32 %v1985, 30
      %v1987 = vsub.s32 %v1983, %v1986
      %vm1988 = vcmp.lt.s32.totalorder %v1987, 0
      %v1989 = vsub.s32 0, %v1987
      %v1990 = vsel %vm1988, %v1989, %v1987
      %v1991 = vclz %v1990
      %v1992 = vsub.s32 %v1991, 2
      %vm1993 = vcmp.gt.s32.totalorder 0, %v1992
      %v1994 = vsel %vm1993, 0, %v1992
      %v1995 = vsub.s32 32, %v1994
      %v1996 = vshll.u32 %v1987, %v1994
      %v1997 = vshrl.u32 %v1979, %v1995
      %v1998 = vor.u32 %v1996, %v1997
      %v1999 = vsub.s32 4294967266, %v1994
      %v2000 = vadd.s32 %v1999, 127
      %v2001 = vshll.u32 %v2000, 23
      %v2002 = vor.u32 4788187, %v2001
      %v2003 = vand.u32 2147483647, %v2002
      %v2005 = vcvt.s32.f32 %v1998
      %v2006 = vmul.f32 %v2005, %v2003
      %v2007 = vxor.u32 %v2006, 2147483648
      %v2008 = vsel %vm1925, %v2007, %v2006
      %v2009 = vsub.s32 4, %v1985
      %v2010 = vsel %vm1925, %v2009, %v1985
      %v2011 = vsel %vm1924, %v1197, %v2008
      %v2012 = vsel %vm1924, 0, %v2010
      %v2013 = vcosq.f32.pop %v2011
      %v2014 = vsinq.f32.pop %v2011
      %vm2015 = vweird.f32 %v1197
      %v2016 = vand.u32 %v2012, 3
      %vm2017 = vcmp.lt.s32.totalorder %v2016, 2
      %vm2018 = vcmp.eq.s32.totalorder %v2016, 0
      %v2019 = vxor.u32 %v2014, 2147483648
      %v2020 = vsel %vm2018, %v2013, %v2019
      %vm2021 = vcmp.eq.s32.totalorder %v2016, 2
      %v2022 = vxor.u32 %v2013, 2147483648
      %v2023 = vsel %vm2021, %v2022, %v2014
      %v2024 = vsel %vm2017, %v2020, %v2023
      %v2025 = vsel %vm2015, nan, %v2024
      %v2030 = vcombine.high %v1301, %v1301
      %v2031 = vcombine.high %v1405, %v1405
      %v2032 = vcombine.high %v1509, %v1509
      %v2033 = vcombine.high %v1613, %v1613
      %v2034 = vrot.slane %v1301, 5
      %v2035 = vrot.slane %v2030, 5
      %v2036 = vrot.slane %v1405, 5
      %v2037 = vrot.slane %v2031, 5
      %v2038 = vrot.slane %v1509, 5
      %v2039 = vrot.slane %v2032, 5
      %v2040 = vrot.slane %v1613, 5
      %v2041 = vrot.slane %v2033, 5
      %2050 = vst [vmem:[#allocation2 + $0xc0] sm:$0x38] %v2034
      %2051 = vst [vmem:[#allocation2 + $0xc8] sm:$0x38] %v2035
      %2052 = vst [vmem:[#allocation2 + $0xd0] sm:$0x38] %v2036
      %2053 = vst [vmem:[#allocation2 + $0xd8] sm:$0x38] %v2037
      %2054 = vst [vmem:[#allocation2 + $0xe0] sm:$0x38] %v2038
      %2055 = vst [vmem:[#allocation2 + $0xe8] sm:$0x38] %v2039
      %2056 = vst [vmem:[#allocation2 + $0xf0] sm:$0x38] %v2040
      %2057 = vst [vmem:[#allocation2 + $0xf8] sm:$0x38] %v2041
      %v2062 = vcombine.high %v1716, %v1716
      %v2063 = vcombine.high %v1819, %v1819
      %v2064 = vcombine.high %v1922, %v1922
      %v2065 = vcombine.high %v2025, %v2025
      %v2066 = vrot.slane %v1716, 2
      %v2067 = vrot.slane %v2062, 2
      %v2068 = vrot.slane %v1819, 2
      %v2069 = vrot.slane %v2063, 2
      %v2070 = vrot.slane %v1922, 2
      %v2071 = vrot.slane %v2064, 2
      %v2072 = vrot.slane %v2025, 2
      %v2073 = vrot.slane %v2065, 2
      %2082 = vst [vmem:[#allocation2 + $0xc0] sm:$0xc0] %v2066
      %2083 = vst [vmem:[#allocation2 + $0xc8] sm:$0xc0] %v2067
      %2084 = vst [vmem:[#allocation2 + $0xd0] sm:$0xc0] %v2068
      %2085 = vst [vmem:[#allocation2 + $0xd8] sm:$0xc0] %v2069
      %2086 = vst [vmem:[#allocation2 + $0xe0] sm:$0xc0] %v2070
      %2087 = vst [vmem:[#allocation2 + $0xe8] sm:$0xc0] %v2071
      %2088 = vst [vmem:[#allocation2 + $0xf0] sm:$0xc0] %v2072
      %2089 = vst [vmem:[#allocation2 + $0xf8] sm:$0xc0] %v2073
      %2090 = vst [vmem:[#allocation2 + $0x100] sm:$0x1] %v2066
      %2091 = vst [vmem:[#allocation2 + $0x108] sm:$0x1] %v2067
      %2092 = vst [vmem:[#allocation2 + $0x110] sm:$0x1] %v2068
      %2093 = vst [vmem:[#allocation2 + $0x118] sm:$0x1] %v2069
      %2094 = vst [vmem:[#allocation2 + $0x120] sm:$0x1] %v2070
      %2095 = vst [vmem:[#allocation2 + $0x128] sm:$0x1] %v2071
      %2096 = vst [vmem:[#allocation2 + $0x130] sm:$0x1] %v2072
      %2097 = vst [vmem:[#allocation2 + $0x138] sm:$0x1] %v2073
      %v2098 = vmul.f32 %v1301, %v1716
      %v2099 = vmul.f32 %v1405, %v1819
      %v2100 = vmul.f32 %v1509, %v1922
      %v2101 = vmul.f32 %v1613, %v2025
      %v2102 = vmul.f32 %v2098, 2.0
      %v2103 = vmul.f32 %v2099, 2.0
      %v2104 = vmul.f32 %v2100, 2.0
      %v2105 = vmul.f32 %v2101, 2.0
      %v2106 = vmul.f32 %v1301, %v1301
      %v2107 = vmul.f32 %v1405, %v1405
      %v2108 = vmul.f32 %v1509, %v1509
      %v2109 = vmul.f32 %v1613, %v1613
      %v2110 = vmul.f32 %v2106, 2.0
      %v2111 = vmul.f32 %v2107, 2.0
      %v2112 = vmul.f32 %v2108, 2.0
      %v2113 = vmul.f32 %v2109, 2.0
      %v2114 = vsub.f32 1.0, %v2110
      %v2115 = vsub.f32 1.0, %v2111
      %v2116 = vsub.f32 1.0, %v2112
      %v2117 = vsub.f32 1.0, %v2113
      %v2122 = vcombine.high %v2102, %v2102
      %v2123 = vcombine.high %v2103, %v2103
      %v2124 = vcombine.high %v2104, %v2104
      %v2125 = vcombine.high %v2105, %v2105
      %v2126 = vrot.slane %v2102, 7
      %v2127 = vrot.slane %v2122, 7
      %v2128 = vrot.slane %v2103, 7
      %v2129 = vrot.slane %v2123, 7
      %v2130 = vrot.slane %v2104, 7
      %v2131 = vrot.slane %v2124, 7
      %v2132 = vrot.slane %v2105, 7
      %v2133 = vrot.slane %v2125, 7
      %2142 = vst [vmem:[#allocation2 + $0x100] sm:$0xe] %v2126
      %2143 = vst [vmem:[#allocation2 + $0x108] sm:$0xe] %v2127
      %2144 = vst [vmem:[#allocation2 + $0x110] sm:$0xe] %v2128
      %2145 = vst [vmem:[#allocation2 + $0x118] sm:$0xe] %v2129
      %2146 = vst [vmem:[#allocation2 + $0x120] sm:$0xe] %v2130
      %2147 = vst [vmem:[#allocation2 + $0x128] sm:$0xe] %v2131
      %2148 = vst [vmem:[#allocation2 + $0x130] sm:$0xe] %v2132
      %2149 = vst [vmem:[#allocation2 + $0x138] sm:$0xe] %v2133
      %v2154 = vcombine.low %v2114, %v2114
      %v2155 = vcombine.low %v2115, %v2115
      %v2156 = vcombine.low %v2116, %v2116
      %v2157 = vcombine.low %v2117, %v2117
      %2162 = vst [vmem:[#allocation2 + $0x100] sm:$0x70] %v2154
      %2163 = vst [vmem:[#allocation2 + $0x108] sm:$0x70] %v2114
      %2164 = vst [vmem:[#allocation2 + $0x110] sm:$0x70] %v2155
      %2165 = vst [vmem:[#allocation2 + $0x118] sm:$0x70] %v2115
      %2166 = vst [vmem:[#allocation2 + $0x120] sm:$0x70] %v2156
      %2167 = vst [vmem:[#allocation2 + $0x128] sm:$0x70] %v2116
      %2168 = vst [vmem:[#allocation2 + $0x130] sm:$0x70] %v2157
      %2169 = vst [vmem:[#allocation2 + $0x138] sm:$0x70] %v2117
      %v2170 = vmul.f32 %v2102, %v2114
      %v2171 = vmul.f32 %v2103, %v2115
      %v2172 = vmul.f32 %v2104, %v2116
      %v2173 = vmul.f32 %v2105, %v2117
      %v2174 = vmul.f32 %v2170, 2.0
      %v2175 = vmul.f32 %v2171, 2.0
      %v2176 = vmul.f32 %v2172, 2.0
      %v2177 = vmul.f32 %v2173, 2.0
      %v2178 = vmul.f32 %v2102, %v2102
      %v2179 = vmul.f32 %v2103, %v2103
      %v2180 = vmul.f32 %v2104, %v2104
      %v2181 = vmul.f32 %v2105, %v2105
      %v2182 = vmul.f32 %v2178, 2.0
      %v2183 = vmul.f32 %v2179, 2.0
      %v2184 = vmul.f32 %v2180, 2.0
      %v2185 = vmul.f32 %v2181, 2.0
      %v2186 = vsub.f32 1.0, %v2182
      %v2187 = vsub.f32 1.0, %v2183
      %v2188 = vsub.f32 1.0, %v2184
      %v2189 = vsub.f32 1.0, %v2185
      %v2194 = vcombine.high %v2174, %v2174
      %v2195 = vcombine.high %v2175, %v2175
      %v2196 = vcombine.high %v2176, %v2176
      %v2197 = vcombine.high %v2177, %v2177
      %v2198 = vrot.slane %v2174, 1
      %v2199 = vrot.slane %v2194, 1
      %v2200 = vrot.slane %v2175, 1
      %v2201 = vrot.slane %v2195, 1
      %v2202 = vrot.slane %v2176, 1
      %v2203 = vrot.slane %v2196, 1
      %v2204 = vrot.slane %v2177, 1
      %v2205 = vrot.slane %v2197, 1
      %2214 = vst [vmem:[#allocation2 + $0x100] sm:$0x80] %v2198
      %2215 = vst [vmem:[#allocation2 + $0x108] sm:$0x80] %v2199
      %2216 = vst [vmem:[#allocation2 + $0x110] sm:$0x80] %v2200
      %2217 = vst [vmem:[#allocation2 + $0x118] sm:$0x80] %v2201
      %2218 = vst [vmem:[#allocation2 + $0x120] sm:$0x80] %v2202
      %2219 = vst [vmem:[#allocation2 + $0x128] sm:$0x80] %v2203
      %2220 = vst [vmem:[#allocation2 + $0x130] sm:$0x80] %v2204
      %2221 = vst [vmem:[#allocation2 + $0x138] sm:$0x80] %v2205
      %2222 = vst [vmem:[#allocation2 + $0x140] sm:$0x3] %v2198
      %2223 = vst [vmem:[#allocation2 + $0x148] sm:$0x3] %v2199
      %2224 = vst [vmem:[#allocation2 + $0x150] sm:$0x3] %v2200
      %2225 = vst [vmem:[#allocation2 + $0x158] sm:$0x3] %v2201
      %2226 = vst [vmem:[#allocation2 + $0x160] sm:$0x3] %v2202
      %2227 = vst [vmem:[#allocation2 + $0x168] sm:$0x3] %v2203
      %2228 = vst [vmem:[#allocation2 + $0x170] sm:$0x3] %v2204
      %2229 = vst [vmem:[#allocation2 + $0x178] sm:$0x3] %v2205
      %v2234 = vcombine.high %v2186, %v2186
      %v2235 = vcombine.high %v2187, %v2187
      %v2236 = vcombine.high %v2188, %v2188
      %v2237 = vcombine.high %v2189, %v2189
      %v2238 = vrot.slane %v2186, 6
      %v2239 = vrot.slane %v2234, 6
      %v2240 = vrot.slane %v2187, 6
      %v2241 = vrot.slane %v2235, 6
      %v2242 = vrot.slane %v2188, 6
      %v2243 = vrot.slane %v2236, 6
      %v2244 = vrot.slane %v2189, 6
      %v2245 = vrot.slane %v2237, 6
      %2254 = vst [vmem:[#allocation2 + $0x140] sm:$0x1c] %v2238
      %2255 = vst [vmem:[#allocation2 + $0x148] sm:$0x1c] %v2239
      %2256 = vst [vmem:[#allocation2 + $0x150] sm:$0x1c] %v2240
      %2257 = vst [vmem:[#allocation2 + $0x158] sm:$0x1c] %v2241
      %2258 = vst [vmem:[#allocation2 + $0x160] sm:$0x1c] %v2242
      %2259 = vst [vmem:[#allocation2 + $0x168] sm:$0x1c] %v2243
      %2260 = vst [vmem:[#allocation2 + $0x170] sm:$0x1c] %v2244
      %2261 = vst [vmem:[#allocation2 + $0x178] sm:$0x1c] %v2245
      %v2262 = vmul.f32 %v2174, %v2186
      %v2263 = vmul.f32 %v2175, %v2187
      %v2264 = vmul.f32 %v2176, %v2188
      %v2265 = vmul.f32 %v2177, %v2189
      %v2266 = vmul.f32 %v2262, 2.0
      %v2267 = vmul.f32 %v2263, 2.0
      %v2268 = vmul.f32 %v2264, 2.0
      %v2269 = vmul.f32 %v2265, 2.0
      %v2270 = vmul.f32 %v2174, %v2174
      %v2271 = vmul.f32 %v2175, %v2175
      %v2272 = vmul.f32 %v2176, %v2176
      %v2273 = vmul.f32 %v2177, %v2177
      %v2274 = vmul.f32 %v2270, 2.0
      %v2275 = vmul.f32 %v2271, 2.0
      %v2276 = vmul.f32 %v2272, 2.0
      %v2277 = vmul.f32 %v2273, 2.0
      %v2278 = vsub.f32 1.0, %v2274
      %v2279 = vsub.f32 1.0, %v2275
      %v2280 = vsub.f32 1.0, %v2276
      %v2281 = vsub.f32 1.0, %v2277
      %v2286 = vcombine.high %v2266, %v2266
      %v2287 = vcombine.high %v2267, %v2267
      %v2288 = vcombine.high %v2268, %v2268
      %v2289 = vcombine.high %v2269, %v2269
      %v2290 = vrot.slane %v2266, 3
      %v2291 = vrot.slane %v2286, 3
      %v2292 = vrot.slane %v2267, 3
      %v2293 = vrot.slane %v2287, 3
      %v2294 = vrot.slane %v2268, 3
      %v2295 = vrot.slane %v2288, 3
      %v2296 = vrot.slane %v2269, 3
      %v2297 = vrot.slane %v2289, 3
      %2306 = vst [vmem:[#allocation2 + $0x140] sm:$0xe0] %v2290
      %2307 = vst [vmem:[#allocation2 + $0x148] sm:$0xe0] %v2291
      %2308 = vst [vmem:[#allocation2 + $0x150] sm:$0xe0] %v2292
      %2309 = vst [vmem:[#allocation2 + $0x158] sm:$0xe0] %v2293
      %2310 = vst [vmem:[#allocation2 + $0x160] sm:$0xe0] %v2294
      %2311 = vst [vmem:[#allocation2 + $0x168] sm:$0xe0] %v2295
      %2312 = vst [vmem:[#allocation2 + $0x170] sm:$0xe0] %v2296
      %2313 = vst [vmem:[#allocation2 + $0x178] sm:$0xe0] %v2297
      %v2318 = vcombine.high %v2278, %v2278
      %v2319 = vcombine.high %v2279, %v2279
      %v2320 = vcombine.high %v2280, %v2280
      %v2321 = vcombine.high %v2281, %v2281
      %2326 = vst [vmem:[#allocation2 + $0x180] sm:$0x7] %v2278
      %2327 = vst [vmem:[#allocation2 + $0x188] sm:$0x7] %v2318
      %2328 = vst [vmem:[#allocation2 + $0x190] sm:$0x7] %v2279
      %2329 = vst [vmem:[#allocation2 + $0x198] sm:$0x7] %v2319
      %2330 = vst [vmem:[#allocation2 + $0x1a0] sm:$0x7] %v2280
      %2331 = vst [vmem:[#allocation2 + $0x1a8] sm:$0x7] %v2320
      %2332 = vst [vmem:[#allocation2 + $0x1b0] sm:$0x7] %v2281
      %2333 = vst [vmem:[#allocation2 + $0x1b8] sm:$0x7] %v2321
      %v2334 = vmul.f32 %v34, 256.0
      %v2335 = vmul.f32 %v35, 256.0
      %v2336 = vmul.f32 %v36, 256.0
      %v2337 = vmul.f32 %v37, 256.0
      %v2338 = vand.u32 2147483647, %v2334
      %vm2339 = vcmp.le.f32.partialorder %v2338, 0.7853982
      %vm2340 = vcmp.lt.s32.totalorder %v2334, 0
      %v2341 = vand.u32 %v2334, 2139095040
      %v2342 = vshrl.u32 %v2341, 23
      %v2343 = vsub.s32 %v2342, 127
      %v2344 = vand.u32 2147483647, %v2334
      %v2345 = vand.u32 %v2344, 8388607
      %v2346 = vor.u32 %v2345, 8388608
      %v2347 = vsub.s32 0, %v2346
      %v2348 = vadd.s32 %v2343, 1
      %vm2349 = vcmp.gt.s32.totalorder %v2348, 0
      %v2350 = vsel %vm2349, %v2348, 0
      %v2351 = vshrl.u32 %v2350, 5
      %v2352 = vand.u32 %v2350, 31
      %v2353 = vsub.s32 32, %v2352
      %v2354 = vshrl.u32 683565275, %v2353
      %v2355 = vshll.u32 683565275, %v2352
      %v2356 = vshrl.u32 2475754826, %v2353
      %v2357 = vor.u32 %v2355, %v2356
      %v2358 = vshll.u32 2475754826, %v2352
      %v2359 = vshrl.u32 2131351028, %v2353
      %v2360 = vor.u32 %v2358, %v2359
      %v2361 = vshll.u32 2131351028, %v2352
      %v2362 = vshrl.u32 2102212464, %v2353
      %v2363 = vor.u32 %v2361, %v2362
      %v2364 = vshll.u32 2102212464, %v2352
      %v2365 = vshrl.u32 920167782, %v2353
      %v2366 = vor.u32 %v2364, %v2365
      %v2367 = vshll.u32 920167782, %v2352
      %v2368 = vshrl.u32 1326507024, %v2353
      %v2369 = vor.u32 %v2367, %v2368
      %vm2370 = vcmp.lt.s32.totalorder %v2351, 1
      %vm2371 = vcmp.lt.s32.totalorder %v2351, 2
      %vm2372 = vcmp.lt.s32.totalorder %v2351, 3
      %vm2373 = vcmp.lt.s32.totalorder %v2351, 4
      %v2374 = vsel %vm2370, %v2354, %v2357
      %v2375 = vsel %vm2373, %v2363, 2102212464
      %v2376 = vsel %vm2372, %v2360, %v2375
      %v2377 = vsel %vm2371, %v2374, %v2376
      %v2378 = vsel %vm2370, %v2357, %v2360
      %v2379 = vsel %vm2373, %v2366, 920167782
      %v2380 = vsel %vm2372, %v2363, %v2379
      %v2381 = vsel %vm2371, %v2378, %v2380
      %v2382 = vsel %vm2370, %v2360, %v2363
      %v2383 = vsel %vm2373, %v2369, 1326507024
      %v2384 = vsel %vm2372, %v2366, %v2383
      %v2385 = vsel %vm2371, %v2382, %v2384
      %v2386 = vshll.u32 %v2346, 8
      %v2387 = vmul.u32.u64.compose %v2386, %v2385
      %v2388 = vextract.low.u32 %v2387
      %v2389 = vextract.high.u32 %v2387
      %v2390 = vmul.u32.u64.compose %v2386, %v2381
      %v2391 = vextract.low.u32 %v2390
      %v2392 = vextract.high.u32 %v2390
      %v2393 = vmul.u32 %v2386, %v2377
      %v2394 = vadd.s32 %v2389, %v2391
      %vm2395 = vc.u32 %v2389, %v2391
      %v2396 = vadd.s32 %v2392, 1
      %v2397 = vsel %vm2395, %v2396, %v2392
      %v2398 = vadd.s32 %v2393, %v2397
      %v2399 = vadd.s32 %v2398, 536870912
      %v2400 = vshrl.u32 %v2399, 30
      %v2401 = vshll.u32 %v2400, 30
      %v2402 = vsub.s32 %v2398, %v2401
      %vm2403 = vcmp.lt.s32.totalorder %v2402, 0
      %v2404 = vsub.s32 0, %v2402
      %v2405 = vsel %vm2403, %v2404, %v2402
      %v2406 = vclz %v2405
      %v2407 = vsub.s32 %v2406, 2
      %vm2408 = vcmp.gt.s32.totalorder 0, %v2407
      %v2409 = vsel %vm2408, 0, %v2407
      %v2410 = vsub.s32 32, %v2409
      %v2411 = vshll.u32 %v2402, %v2409
      %v2412 = vshrl.u32 %v2394, %v2410
      %v2413 = vor.u32 %v2411, %v2412
      %v2414 = vsub.s32 4294967266, %v2409
      %v2415 = vadd.s32 %v2414, 127
      %v2416 = vshll.u32 %v2415, 23
      %v2417 = vor.u32 4788187, %v2416
      %v2418 = vand.u32 2147483647, %v2417
      %v2420 = vcvt.s32.f32 %v2413
      %v2421 = vmul.f32 %v2420, %v2418
      %v2422 = vxor.u32 %v2421, 2147483648
      %v2423 = vsel %vm2340, %v2422, %v2421
      %v2424 = vsub.s32 4, %v2400
      %v2425 = vsel %vm2340, %v2424, %v2400
      %v2426 = vsel %vm2339, %v2334, %v2423
      %v2427 = vsel %vm2339, 0, %v2425
      %v2428 = vcosq.f32.pop %v2426
      %v2429 = vsinq.f32.pop %v2426
      %vm2430 = vweird.f32 %v2334
      %v2431 = vadd.s32 %v2427, 3
      %v2432 = vand.u32 %v2431, 3
      %vm2433 = vcmp.lt.s32.totalorder %v2432, 2
      %vm2434 = vcmp.eq.s32.totalorder %v2432, 0
      %v2435 = vxor.u32 %v2429, 2147483648
      %v2436 = vsel %vm2434, %v2428, %v2435
      %vm2437 = vcmp.eq.s32.totalorder %v2432, 2
      %v2438 = vxor.u32 %v2428, 2147483648
      %v2439 = vsel %vm2437, %v2438, %v2429
      %v2440 = vsel %vm2433, %v2436, %v2439
      %v2441 = vsel %vm2430, nan, %v2440
      %v2442 = vand.u32 2147483647, %v2335
      %vm2443 = vcmp.le.f32.partialorder %v2442, 0.7853982
      %vm2444 = vcmp.lt.s32.totalorder %v2335, 0
      %v2445 = vand.u32 %v2335, 2139095040
      %v2446 = vshrl.u32 %v2445, 23
      %v2447 = vsub.s32 %v2446, 127
      %v2448 = vand.u32 2147483647, %v2335
      %v2449 = vand.u32 %v2448, 8388607
      %v2450 = vor.u32 %v2449, 8388608
      %v2451 = vsub.s32 0, %v2450
      %v2452 = vadd.s32 %v2447, 1
      %vm2453 = vcmp.gt.s32.totalorder %v2452, 0
      %v2454 = vsel %vm2453, %v2452, 0
      %v2455 = vshrl.u32 %v2454, 5
      %v2456 = vand.u32 %v2454, 31
      %v2457 = vsub.s32 32, %v2456
      %v2458 = vshrl.u32 683565275, %v2457
      %v2459 = vshll.u32 683565275, %v2456
      %v2460 = vshrl.u32 2475754826, %v2457
      %v2461 = vor.u32 %v2459, %v2460
      %v2462 = vshll.u32 2475754826, %v2456
      %v2463 = vshrl.u32 2131351028, %v2457
      %v2464 = vor.u32 %v2462, %v2463
      %v2465 = vshll.u32 2131351028, %v2456
      %v2466 = vshrl.u32 2102212464, %v2457
      %v2467 = vor.u32 %v2465, %v2466
      %v2468 = vshll.u32 2102212464, %v2456
      %v2469 = vshrl.u32 920167782, %v2457
      %v2470 = vor.u32 %v2468, %v2469
      %v2471 = vshll.u32 920167782, %v2456
      %v2472 = vshrl.u32 1326507024, %v2457
      %v2473 = vor.u32 %v2471, %v2472
      %vm2474 = vcmp.lt.s32.totalorder %v2455, 1
      %vm2475 = vcmp.lt.s32.totalorder %v2455, 2
      %vm2476 = vcmp.lt.s32.totalorder %v2455, 3
      %vm2477 = vcmp.lt.s32.totalorder %v2455, 4
      %v2478 = vsel %vm2474, %v2458, %v2461
      %v2479 = vsel %vm2477, %v2467, 2102212464
      %v2480 = vsel %vm2476, %v2464, %v2479
      %v2481 = vsel %vm2475, %v2478, %v2480
      %v2482 = vsel %vm2474, %v2461, %v2464
      %v2483 = vsel %vm2477, %v2470, 920167782
      %v2484 = vsel %vm2476, %v2467, %v2483
      %v2485 = vsel %vm2475, %v2482, %v2484
      %v2486 = vsel %vm2474, %v2464, %v2467
      %v2487 = vsel %vm2477, %v2473, 1326507024
      %v2488 = vsel %vm2476, %v2470, %v2487
      %v2489 = vsel %vm2475, %v2486, %v2488
      %v2490 = vshll.u32 %v2450, 8
      %v2491 = vmul.u32.u64.compose %v2490, %v2489
      %v2492 = vextract.low.u32 %v2491
      %v2493 = vextract.high.u32 %v2491
      %v2494 = vmul.u32.u64.compose %v2490, %v2485
      %v2495 = vextract.low.u32 %v2494
      %v2496 = vextract.high.u32 %v2494
      %v2497 = vmul.u32 %v2490, %v2481
      %v2498 = vadd.s32 %v2493, %v2495
      %vm2499 = vc.u32 %v2493, %v2495
      %v2500 = vadd.s32 %v2496, 1
      %v2501 = vsel %vm2499, %v2500, %v2496
      %v2502 = vadd.s32 %v2497, %v2501
      %v2503 = vadd.s32 %v2502, 536870912
      %v2504 = vshrl.u32 %v2503, 30
      %v2505 = vshll.u32 %v2504, 30
      %v2506 = vsub.s32 %v2502, %v2505
      %vm2507 = vcmp.lt.s32.totalorder %v2506, 0
      %v2508 = vsub.s32 0, %v2506
      %v2509 = vsel %vm2507, %v2508, %v2506
      %v2510 = vclz %v2509
      %v2511 = vsub.s32 %v2510, 2
      %vm2512 = vcmp.gt.s32.totalorder 0, %v2511
      %v2513 = vsel %vm2512, 0, %v2511
      %v2514 = vsub.s32 32, %v2513
      %v2515 = vshll.u32 %v2506, %v2513
      %v2516 = vshrl.u32 %v2498, %v2514
      %v2517 = vor.u32 %v2515, %v2516
      %v2518 = vsub.s32 4294967266, %v2513
      %v2519 = vadd.s32 %v2518, 127
      %v2520 = vshll.u32 %v2519, 23
      %v2521 = vor.u32 4788187, %v2520
      %v2522 = vand.u32 2147483647, %v2521
      %v2524 = vcvt.s32.f32 %v2517
      %v2525 = vmul.f32 %v2524, %v2522
      %v2526 = vxor.u32 %v2525, 2147483648
      %v2527 = vsel %vm2444, %v2526, %v2525
      %v2528 = vsub.s32 4, %v2504
      %v2529 = vsel %vm2444, %v2528, %v2504
      %v2530 = vsel %vm2443, %v2335, %v2527
      %v2531 = vsel %vm2443, 0, %v2529
      %v2532 = vcosq.f32.pop %v2530
      %v2533 = vsinq.f32.pop %v2530
      %vm2534 = vweird.f32 %v2335
      %v2535 = vadd.s32 %v2531, 3
      %v2536 = vand.u32 %v2535, 3
      %vm2537 = vcmp.lt.s32.totalorder %v2536, 2
      %vm2538 = vcmp.eq.s32.totalorder %v2536, 0
      %v2539 = vxor.u32 %v2533, 2147483648
      %v2540 = vsel %vm2538, %v2532, %v2539
      %vm2541 = vcmp.eq.s32.totalorder %v2536, 2
      %v2542 = vxor.u32 %v2532, 2147483648
      %v2543 = vsel %vm2541, %v2542, %v2533
      %v2544 = vsel %vm2537, %v2540, %v2543
      %v2545 = vsel %vm2534, nan, %v2544
      %v2546 = vand.u32 2147483647, %v2336
      %vm2547 = vcmp.le.f32.partialorder %v2546, 0.7853982
      %vm2548 = vcmp.lt.s32.totalorder %v2336, 0
      %v2549 = vand.u32 %v2336, 2139095040
      %v2550 = vshrl.u32 %v2549, 23
      %v2551 = vsub.s32 %v2550, 127
      %v2552 = vand.u32 2147483647, %v2336
      %v2553 = vand.u32 %v2552, 8388607
      %v2554 = vor.u32 %v2553, 8388608
      %v2555 = vsub.s32 0, %v2554
      %v2556 = vadd.s32 %v2551, 1
      %vm2557 = vcmp.gt.s32.totalorder %v2556, 0
      %v2558 = vsel %vm2557, %v2556, 0
      %v2559 = vshrl.u32 %v2558, 5
      %v2560 = vand.u32 %v2558, 31
      %v2561 = vsub.s32 32, %v2560
      %v2562 = vshrl.u32 683565275, %v2561
      %v2563 = vshll.u32 683565275, %v2560
      %v2564 = vshrl.u32 2475754826, %v2561
      %v2565 = vor.u32 %v2563, %v2564
      %v2566 = vshll.u32 2475754826, %v2560
      %v2567 = vshrl.u32 2131351028, %v2561
      %v2568 = vor.u32 %v2566, %v2567
      %v2569 = vshll.u32 2131351028, %v2560
      %v2570 = vshrl.u32 2102212464, %v2561
      %v2571 = vor.u32 %v2569, %v2570
      %v2572 = vshll.u32 2102212464, %v2560
      %v2573 = vshrl.u32 920167782, %v2561
      %v2574 = vor.u32 %v2572, %v2573
      %v2575 = vshll.u32 920167782, %v2560
      %v2576 = vshrl.u32 1326507024, %v2561
      %v2577 = vor.u32 %v2575, %v2576
      %vm2578 = vcmp.lt.s32.totalorder %v2559, 1
      %vm2579 = vcmp.lt.s32.totalorder %v2559, 2
      %vm2580 = vcmp.lt.s32.totalorder %v2559, 3
      %vm2581 = vcmp.lt.s32.totalorder %v2559, 4
      %v2582 = vsel %vm2578, %v2562, %v2565
      %v2583 = vsel %vm2581, %v2571, 2102212464
      %v2584 = vsel %vm2580, %v2568, %v2583
      %v2585 = vsel %vm2579, %v2582, %v2584
      %v2586 = vsel %vm2578, %v2565, %v2568
      %v2587 = vsel %vm2581, %v2574, 920167782
      %v2588 = vsel %vm2580, %v2571, %v2587
      %v2589 = vsel %vm2579, %v2586, %v2588
      %v2590 = vsel %vm2578, %v2568, %v2571
      %v2591 = vsel %vm2581, %v2577, 1326507024
      %v2592 = vsel %vm2580, %v2574, %v2591
      %v2593 = vsel %vm2579, %v2590, %v2592
      %v2594 = vshll.u32 %v2554, 8
      %v2595 = vmul.u32.u64.compose %v2594, %v2593
      %v2596 = vextract.low.u32 %v2595
      %v2597 = vextract.high.u32 %v2595
      %v2598 = vmul.u32.u64.compose %v2594, %v2589
      %v2599 = vextract.low.u32 %v2598
      %v2600 = vextract.high.u32 %v2598
      %v2601 = vmul.u32 %v2594, %v2585
      %v2602 = vadd.s32 %v2597, %v2599
      %vm2603 = vc.u32 %v2597, %v2599
      %v2604 = vadd.s32 %v2600, 1
      %v2605 = vsel %vm2603, %v2604, %v2600
      %v2606 = vadd.s32 %v2601, %v2605
      %v2607 = vadd.s32 %v2606, 536870912
      %v2608 = vshrl.u32 %v2607, 30
      %v2609 = vshll.u32 %v2608, 30
      %v2610 = vsub.s32 %v2606, %v2609
      %vm2611 = vcmp.lt.s32.totalorder %v2610, 0
      %v2612 = vsub.s32 0, %v2610
      %v2613 = vsel %vm2611, %v2612, %v2610
      %v2614 = vclz %v2613
      %v2615 = vsub.s32 %v2614, 2
      %vm2616 = vcmp.gt.s32.totalorder 0, %v2615
      %v2617 = vsel %vm2616, 0, %v2615
      %v2618 = vsub.s32 32, %v2617
      %v2619 = vshll.u32 %v2610, %v2617
      %v2620 = vshrl.u32 %v2602, %v2618
      %v2621 = vor.u32 %v2619, %v2620
      %v2622 = vsub.s32 4294967266, %v2617
      %v2623 = vadd.s32 %v2622, 127
      %v2624 = vshll.u32 %v2623, 23
      %v2625 = vor.u32 4788187, %v2624
      %v2626 = vand.u32 2147483647, %v2625
      %v2628 = vcvt.s32.f32 %v2621
      %v2629 = vmul.f32 %v2628, %v2626
      %v2630 = vxor.u32 %v2629, 2147483648
      %v2631 = vsel %vm2548, %v2630, %v2629
      %v2632 = vsub.s32 4, %v2608
      %v2633 = vsel %vm2548, %v2632, %v2608
      %v2634 = vsel %vm2547, %v2336, %v2631
      %v2635 = vsel %vm2547, 0, %v2633
      %v2636 = vcosq.f32.pop %v2634
      %v2637 = vsinq.f32.pop %v2634
      %vm2638 = vweird.f32 %v2336
      %v2639 = vadd.s32 %v2635, 3
      %v2640 = vand.u32 %v2639, 3
      %vm2641 = vcmp.lt.s32.totalorder %v2640, 2
      %vm2642 = vcmp.eq.s32.totalorder %v2640, 0
      %v2643 = vxor.u32 %v2637, 2147483648
      %v2644 = vsel %vm2642, %v2636, %v2643
      %vm2645 = vcmp.eq.s32.totalorder %v2640, 2
      %v2646 = vxor.u32 %v2636, 2147483648
      %v2647 = vsel %vm2645, %v2646, %v2637
      %v2648 = vsel %vm2641, %v2644, %v2647
      %v2649 = vsel %vm2638, nan, %v2648
      %v2650 = vand.u32 2147483647, %v2337
      %vm2651 = vcmp.le.f32.partialorder %v2650, 0.7853982
      %vm2652 = vcmp.lt.s32.totalorder %v2337, 0
      %v2653 = vand.u32 %v2337, 2139095040
      %v2654 = vshrl.u32 %v2653, 23
      %v2655 = vsub.s32 %v2654, 127
      %v2656 = vand.u32 2147483647, %v2337
      %v2657 = vand.u32 %v2656, 8388607
      %v2658 = vor.u32 %v2657, 8388608
      %v2659 = vsub.s32 0, %v2658
      %v2660 = vadd.s32 %v2655, 1
      %vm2661 = vcmp.gt.s32.totalorder %v2660, 0
      %v2662 = vsel %vm2661, %v2660, 0
      %v2663 = vshrl.u32 %v2662, 5
      %v2664 = vand.u32 %v2662, 31
      %v2665 = vsub.s32 32, %v2664
      %v2666 = vshrl.u32 683565275, %v2665
      %v2667 = vshll.u32 683565275, %v2664
      %v2668 = vshrl.u32 2475754826, %v2665
      %v2669 = vor.u32 %v2667, %v2668
      %v2670 = vshll.u32 2475754826, %v2664
      %v2671 = vshrl.u32 2131351028, %v2665
      %v2672 = vor.u32 %v2670, %v2671
      %v2673 = vshll.u32 2131351028, %v2664
      %v2674 = vshrl.u32 2102212464, %v2665
      %v2675 = vor.u32 %v2673, %v2674
      %v2676 = vshll.u32 2102212464, %v2664
      %v2677 = vshrl.u32 920167782, %v2665
      %v2678 = vor.u32 %v2676, %v2677
      %v2679 = vshll.u32 920167782, %v2664
      %v2680 = vshrl.u32 1326507024, %v2665
      %v2681 = vor.u32 %v2679, %v2680
      %vm2682 = vcmp.lt.s32.totalorder %v2663, 1
      %vm2683 = vcmp.lt.s32.totalorder %v2663, 2
      %vm2684 = vcmp.lt.s32.totalorder %v2663, 3
      %vm2685 = vcmp.lt.s32.totalorder %v2663, 4
      %v2686 = vsel %vm2682, %v2666, %v2669
      %v2687 = vsel %vm2685, %v2675, 2102212464
      %v2688 = vsel %vm2684, %v2672, %v2687
      %v2689 = vsel %vm2683, %v2686, %v2688
      %v2690 = vsel %vm2682, %v2669, %v2672
      %v2691 = vsel %vm2685, %v2678, 920167782
      %v2692 = vsel %vm2684, %v2675, %v2691
      %v2693 = vsel %vm2683, %v2690, %v2692
      %v2694 = vsel %vm2682, %v2672, %v2675
      %v2695 = vsel %vm2685, %v2681, 1326507024
      %v2696 = vsel %vm2684, %v2678, %v2695
      %v2697 = vsel %vm2683, %v2694, %v2696
      %v2698 = vshll.u32 %v2658, 8
      %v2699 = vmul.u32.u64.compose %v2698, %v2697
      %v2700 = vextract.low.u32 %v2699
      %v2701 = vextract.high.u32 %v2699
      %v2702 = vmul.u32.u64.compose %v2698, %v2693
      %v2703 = vextract.low.u32 %v2702
      %v2704 = vextract.high.u32 %v2702
      %v2705 = vmul.u32 %v2698, %v2689
      %v2706 = vadd.s32 %v2701, %v2703
      %vm2707 = vc.u32 %v2701, %v2703
      %v2708 = vadd.s32 %v2704, 1
      %v2709 = vsel %vm2707, %v2708, %v2704
      %v2710 = vadd.s32 %v2705, %v2709
      %v2711 = vadd.s32 %v2710, 536870912
      %v2712 = vshrl.u32 %v2711, 30
      %v2713 = vshll.u32 %v2712, 30
      %v2714 = vsub.s32 %v2710, %v2713
      %vm2715 = vcmp.lt.s32.totalorder %v2714, 0
      %v2716 = vsub.s32 0, %v2714
      %v2717 = vsel %vm2715, %v2716, %v2714
      %v2718 = vclz %v2717
      %v2719 = vsub.s32 %v2718, 2
      %vm2720 = vcmp.gt.s32.totalorder 0, %v2719
      %v2721 = vsel %vm2720, 0, %v2719
      %v2722 = vsub.s32 32, %v2721
      %v2723 = vshll.u32 %v2714, %v2721
      %v2724 = vshrl.u32 %v2706, %v2722
      %v2725 = vor.u32 %v2723, %v2724
      %v2726 = vsub.s32 4294967266, %v2721
      %v2727 = vadd.s32 %v2726, 127
      %v2728 = vshll.u32 %v2727, 23
      %v2729 = vor.u32 4788187, %v2728
      %v2730 = vand.u32 2147483647, %v2729
      %v2732 = vcvt.s32.f32 %v2725
      %v2733 = vmul.f32 %v2732, %v2730
      %v2734 = vxor.u32 %v2733, 2147483648
      %v2735 = vsel %vm2652, %v2734, %v2733
      %v2736 = vsub.s32 4, %v2712
      %v2737 = vsel %vm2652, %v2736, %v2712
      %v2738 = vsel %vm2651, %v2337, %v2735
      %v2739 = vsel %vm2651, 0, %v2737
      %v2740 = vcosq.f32.pop %v2738
      %v2741 = vsinq.f32.pop %v2738
      %vm2742 = vweird.f32 %v2337
      %v2743 = vadd.s32 %v2739, 3
      %v2744 = vand.u32 %v2743, 3
      %vm2745 = vcmp.lt.s32.totalorder %v2744, 2
      %vm2746 = vcmp.eq.s32.totalorder %v2744, 0
      %v2747 = vxor.u32 %v2741, 2147483648
      %v2748 = vsel %vm2746, %v2740, %v2747
      %vm2749 = vcmp.eq.s32.totalorder %v2744, 2
      %v2750 = vxor.u32 %v2740, 2147483648
      %v2751 = vsel %vm2749, %v2750, %v2741
      %v2752 = vsel %vm2745, %v2748, %v2751
      %v2753 = vsel %vm2742, nan, %v2752
      %v2754 = vand.u32 2147483647, %v2334
      %vm2755 = vcmp.le.f32.partialorder %v2754, 0.7853982
      %vm2756 = vcmp.lt.s32.totalorder %v2334, 0
      %v2757 = vand.u32 %v2334, 2139095040
      %v2758 = vshrl.u32 %v2757, 23
      %v2759 = vsub.s32 %v2758, 127
      %v2760 = vand.u32 2147483647, %v2334
      %v2761 = vand.u32 %v2760, 8388607
      %v2762 = vor.u32 %v2761, 8388608
      %v2763 = vsub.s32 0, %v2762
      %v2764 = vadd.s32 %v2759, 1
      %vm2765 = vcmp.gt.s32.totalorder %v2764, 0
      %v2766 = vsel %vm2765, %v2764, 0
      %v2767 = vshrl.u32 %v2766, 5
      %v2768 = vand.u32 %v2766, 31
      %v2769 = vsub.s32 32, %v2768
      %v2770 = vshrl.u32 683565275, %v2769
      %v2771 = vshll.u32 683565275, %v2768
      %v2772 = vshrl.u32 2475754826, %v2769
      %v2773 = vor.u32 %v2771, %v2772
      %v2774 = vshll.u32 2475754826, %v2768
      %v2775 = vshrl.u32 2131351028, %v2769
      %v2776 = vor.u32 %v2774, %v2775
      %v2777 = vshll.u32 2131351028, %v2768
      %v2778 = vshrl.u32 2102212464, %v2769
      %v2779 = vor.u32 %v2777, %v2778
      %v2780 = vshll.u32 2102212464, %v2768
      %v2781 = vshrl.u32 920167782, %v2769
      %v2782 = vor.u32 %v2780, %v2781
      %v2783 = vshll.u32 920167782, %v2768
      %v2784 = vshrl.u32 1326507024, %v2769
      %v2785 = vor.u32 %v2783, %v2784
      %vm2786 = vcmp.lt.s32.totalorder %v2767, 1
      %vm2787 = vcmp.lt.s32.totalorder %v2767, 2
      %vm2788 = vcmp.lt.s32.totalorder %v2767, 3
      %vm2789 = vcmp.lt.s32.totalorder %v2767, 4
      %v2790 = vsel %vm2786, %v2770, %v2773
      %v2791 = vsel %vm2789, %v2779, 2102212464
      %v2792 = vsel %vm2788, %v2776, %v2791
      %v2793 = vsel %vm2787, %v2790, %v2792
      %v2794 = vsel %vm2786, %v2773, %v2776
      %v2795 = vsel %vm2789, %v2782, 920167782
      %v2796 = vsel %vm2788, %v2779, %v2795
      %v2797 = vsel %vm2787, %v2794, %v2796
      %v2798 = vsel %vm2786, %v2776, %v2779
      %v2799 = vsel %vm2789, %v2785, 1326507024
      %v2800 = vsel %vm2788, %v2782, %v2799
      %v2801 = vsel %vm2787, %v2798, %v2800
      %v2802 = vshll.u32 %v2762, 8
      %v2803 = vmul.u32.u64.compose %v2802, %v2801
      %v2804 = vextract.low.u32 %v2803
      %v2805 = vextract.high.u32 %v2803
      %v2806 = vmul.u32.u64.compose %v2802, %v2797
      %v2807 = vextract.low.u32 %v2806
      %v2808 = vextract.high.u32 %v2806
      %v2809 = vmul.u32 %v2802, %v2793
      %v2810 = vadd.s32 %v2805, %v2807
      %vm2811 = vc.u32 %v2805, %v2807
      %v2812 = vadd.s32 %v2808, 1
      %v2813 = vsel %vm2811, %v2812, %v2808
      %v2814 = vadd.s32 %v2809, %v2813
      %v2815 = vadd.s32 %v2814, 536870912
      %v2816 = vshrl.u32 %v2815, 30
      %v2817 = vshll.u32 %v2816, 30
      %v2818 = vsub.s32 %v2814, %v2817
      %vm2819 = vcmp.lt.s32.totalorder %v2818, 0
      %v2820 = vsub.s32 0, %v2818
      %v2821 = vsel %vm2819, %v2820, %v2818
      %v2822 = vclz %v2821
      %v2823 = vsub.s32 %v2822, 2
      %vm2824 = vcmp.gt.s32.totalorder 0, %v2823
      %v2825 = vsel %vm2824, 0, %v2823
      %v2826 = vsub.s32 32, %v2825
      %v2827 = vshll.u32 %v2818, %v2825
      %v2828 = vshrl.u32 %v2810, %v2826
      %v2829 = vor.u32 %v2827, %v2828
      %v2830 = vsub.s32 4294967266, %v2825
      %v2831 = vadd.s32 %v2830, 127
      %v2832 = vshll.u32 %v2831, 23
      %v2833 = vor.u32 4788187, %v2832
      %v2834 = vand.u32 2147483647, %v2833
      %v2836 = vcvt.s32.f32 %v2829
      %v2837 = vmul.f32 %v2836, %v2834
      %v2838 = vxor.u32 %v2837, 2147483648
      %v2839 = vsel %vm2756, %v2838, %v2837
      %v2840 = vsub.s32 4, %v2816
      %v2841 = vsel %vm2756, %v2840, %v2816
      %v2842 = vsel %vm2755, %v2334, %v2839
      %v2843 = vsel %vm2755, 0, %v2841
      %v2844 = vcosq.f32.pop %v2842
      %v2845 = vsinq.f32.pop %v2842
      %vm2846 = vweird.f32 %v2334
      %v2847 = vand.u32 %v2843, 3
      %vm2848 = vcmp.lt.s32.totalorder %v2847, 2
      %vm2849 = vcmp.eq.s32.totalorder %v2847, 0
      %v2850 = vxor.u32 %v2845, 2147483648
      %v2851 = vsel %vm2849, %v2844, %v2850
      %vm2852 = vcmp.eq.s32.totalorder %v2847, 2
      %v2853 = vxor.u32 %v2844, 2147483648
      %v2854 = vsel %vm2852, %v2853, %v2845
      %v2855 = vsel %vm2848, %v2851, %v2854
      %v2856 = vsel %vm2846, nan, %v2855
      %v2857 = vand.u32 2147483647, %v2335
      %vm2858 = vcmp.le.f32.partialorder %v2857, 0.7853982
      %vm2859 = vcmp.lt.s32.totalorder %v2335, 0
      %v2860 = vand.u32 %v2335, 2139095040
      %v2861 = vshrl.u32 %v2860, 23
      %v2862 = vsub.s32 %v2861, 127
      %v2863 = vand.u32 2147483647, %v2335
      %v2864 = vand.u32 %v2863, 8388607
      %v2865 = vor.u32 %v2864, 8388608
      %v2866 = vsub.s32 0, %v2865
      %v2867 = vadd.s32 %v2862, 1
      %vm2868 = vcmp.gt.s32.totalorder %v2867, 0
      %v2869 = vsel %vm2868, %v2867, 0
      %v2870 = vshrl.u32 %v2869, 5
      %v2871 = vand.u32 %v2869, 31
      %v2872 = vsub.s32 32, %v2871
      %v2873 = vshrl.u32 683565275, %v2872
      %v2874 = vshll.u32 683565275, %v2871
      %v2875 = vshrl.u32 2475754826, %v2872
      %v2876 = vor.u32 %v2874, %v2875
      %v2877 = vshll.u32 2475754826, %v2871
      %v2878 = vshrl.u32 2131351028, %v2872
      %v2879 = vor.u32 %v2877, %v2878
      %v2880 = vshll.u32 2131351028, %v2871
      %v2881 = vshrl.u32 2102212464, %v2872
      %v2882 = vor.u32 %v2880, %v2881
      %v2883 = vshll.u32 2102212464, %v2871
      %v2884 = vshrl.u32 920167782, %v2872
      %v2885 = vor.u32 %v2883, %v2884
      %v2886 = vshll.u32 920167782, %v2871
      %v2887 = vshrl.u32 1326507024, %v2872
      %v2888 = vor.u32 %v2886, %v2887
      %vm2889 = vcmp.lt.s32.totalorder %v2870, 1
      %vm2890 = vcmp.lt.s32.totalorder %v2870, 2
      %vm2891 = vcmp.lt.s32.totalorder %v2870, 3
      %vm2892 = vcmp.lt.s32.totalorder %v2870, 4
      %v2893 = vsel %vm2889, %v2873, %v2876
      %v2894 = vsel %vm2892, %v2882, 2102212464
      %v2895 = vsel %vm2891, %v2879, %v2894
      %v2896 = vsel %vm2890, %v2893, %v2895
      %v2897 = vsel %vm2889, %v2876, %v2879
      %v2898 = vsel %vm2892, %v2885, 920167782
      %v2899 = vsel %vm2891, %v2882, %v2898
      %v2900 = vsel %vm2890, %v2897, %v2899
      %v2901 = vsel %vm2889, %v2879, %v2882
      %v2902 = vsel %vm2892, %v2888, 1326507024
      %v2903 = vsel %vm2891, %v2885, %v2902
      %v2904 = vsel %vm2890, %v2901, %v2903
      %v2905 = vshll.u32 %v2865, 8
      %v2906 = vmul.u32.u64.compose %v2905, %v2904
      %v2907 = vextract.low.u32 %v2906
      %v2908 = vextract.high.u32 %v2906
      %v2909 = vmul.u32.u64.compose %v2905, %v2900
      %v2910 = vextract.low.u32 %v2909
      %v2911 = vextract.high.u32 %v2909
      %v2912 = vmul.u32 %v2905, %v2896
      %v2913 = vadd.s32 %v2908, %v2910
      %vm2914 = vc.u32 %v2908, %v2910
      %v2915 = vadd.s32 %v2911, 1
      %v2916 = vsel %vm2914, %v2915, %v2911
      %v2917 = vadd.s32 %v2912, %v2916
      %v2918 = vadd.s32 %v2917, 536870912
      %v2919 = vshrl.u32 %v2918, 30
      %v2920 = vshll.u32 %v2919, 30
      %v2921 = vsub.s32 %v2917, %v2920
      %vm2922 = vcmp.lt.s32.totalorder %v2921, 0
      %v2923 = vsub.s32 0, %v2921
      %v2924 = vsel %vm2922, %v2923, %v2921
      %v2925 = vclz %v2924
      %v2926 = vsub.s32 %v2925, 2
      %vm2927 = vcmp.gt.s32.totalorder 0, %v2926
      %v2928 = vsel %vm2927, 0, %v2926
      %v2929 = vsub.s32 32, %v2928
      %v2930 = vshll.u32 %v2921, %v2928
      %v2931 = vshrl.u32 %v2913, %v2929
      %v2932 = vor.u32 %v2930, %v2931
      %v2933 = vsub.s32 4294967266, %v2928
      %v2934 = vadd.s32 %v2933, 127
      %v2935 = vshll.u32 %v2934, 23
      %v2936 = vor.u32 4788187, %v2935
      %v2937 = vand.u32 2147483647, %v2936
      %v2939 = vcvt.s32.f32 %v2932
      %v2940 = vmul.f32 %v2939, %v2937
      %v2941 = vxor.u32 %v2940, 2147483648
      %v2942 = vsel %vm2859, %v2941, %v2940
      %v2943 = vsub.s32 4, %v2919
      %v2944 = vsel %vm2859, %v2943, %v2919
      %v2945 = vsel %vm2858, %v2335, %v2942
      %v2946 = vsel %vm2858, 0, %v2944
      %v2947 = vcosq.f32.pop %v2945
      %v2948 = vsinq.f32.pop %v2945
      %vm2949 = vweird.f32 %v2335
      %v2950 = vand.u32 %v2946, 3
      %vm2951 = vcmp.lt.s32.totalorder %v2950, 2
      %vm2952 = vcmp.eq.s32.totalorder %v2950, 0
      %v2953 = vxor.u32 %v2948, 2147483648
      %v2954 = vsel %vm2952, %v2947, %v2953
      %vm2955 = vcmp.eq.s32.totalorder %v2950, 2
      %v2956 = vxor.u32 %v2947, 2147483648
      %v2957 = vsel %vm2955, %v2956, %v2948
      %v2958 = vsel %vm2951, %v2954, %v2957
      %v2959 = vsel %vm2949, nan, %v2958
      %v2960 = vand.u32 2147483647, %v2336
      %vm2961 = vcmp.le.f32.partialorder %v2960, 0.7853982
      %vm2962 = vcmp.lt.s32.totalorder %v2336, 0
      %v2963 = vand.u32 %v2336, 2139095040
      %v2964 = vshrl.u32 %v2963, 23
      %v2965 = vsub.s32 %v2964, 127
      %v2966 = vand.u32 2147483647, %v2336
      %v2967 = vand.u32 %v2966, 8388607
      %v2968 = vor.u32 %v2967, 8388608
      %v2969 = vsub.s32 0, %v2968
      %v2970 = vadd.s32 %v2965, 1
      %vm2971 = vcmp.gt.s32.totalorder %v2970, 0
      %v2972 = vsel %vm2971, %v2970, 0
      %v2973 = vshrl.u32 %v2972, 5
      %v2974 = vand.u32 %v2972, 31
      %v2975 = vsub.s32 32, %v2974
      %v2976 = vshrl.u32 683565275, %v2975
      %v2977 = vshll.u32 683565275, %v2974
      %v2978 = vshrl.u32 2475754826, %v2975
      %v2979 = vor.u32 %v2977, %v2978
      %v2980 = vshll.u32 2475754826, %v2974
      %v2981 = vshrl.u32 2131351028, %v2975
      %v2982 = vor.u32 %v2980, %v2981
      %v2983 = vshll.u32 2131351028, %v2974
      %v2984 = vshrl.u32 2102212464, %v2975
      %v2985 = vor.u32 %v2983, %v2984
      %v2986 = vshll.u32 2102212464, %v2974
      %v2987 = vshrl.u32 920167782, %v2975
      %v2988 = vor.u32 %v2986, %v2987
      %v2989 = vshll.u32 920167782, %v2974
      %v2990 = vshrl.u32 1326507024, %v2975
      %v2991 = vor.u32 %v2989, %v2990
      %vm2992 = vcmp.lt.s32.totalorder %v2973, 1
      %vm2993 = vcmp.lt.s32.totalorder %v2973, 2
      %vm2994 = vcmp.lt.s32.totalorder %v2973, 3
      %vm2995 = vcmp.lt.s32.totalorder %v2973, 4
      %v2996 = vsel %vm2992, %v2976, %v2979
      %v2997 = vsel %vm2995, %v2985, 2102212464
      %v2998 = vsel %vm2994, %v2982, %v2997
      %v2999 = vsel %vm2993, %v2996, %v2998
      %v3000 = vsel %vm2992, %v2979, %v2982
      %v3001 = vsel %vm2995, %v2988, 920167782
      %v3002 = vsel %vm2994, %v2985, %v3001
      %v3003 = vsel %vm2993, %v3000, %v3002
      %v3004 = vsel %vm2992, %v2982, %v2985
      %v3005 = vsel %vm2995, %v2991, 1326507024
      %v3006 = vsel %vm2994, %v2988, %v3005
      %v3007 = vsel %vm2993, %v3004, %v3006
      %v3008 = vshll.u32 %v2968, 8
      %v3009 = vmul.u32.u64.compose %v3008, %v3007
      %v3010 = vextract.low.u32 %v3009
      %v3011 = vextract.high.u32 %v3009
      %v3012 = vmul.u32.u64.compose %v3008, %v3003
      %v3013 = vextract.low.u32 %v3012
      %v3014 = vextract.high.u32 %v3012
      %v3015 = vmul.u32 %v3008, %v2999
      %v3016 = vadd.s32 %v3011, %v3013
      %vm3017 = vc.u32 %v3011, %v3013
      %v3018 = vadd.s32 %v3014, 1
      %v3019 = vsel %vm3017, %v3018, %v3014
      %v3020 = vadd.s32 %v3015, %v3019
      %v3021 = vadd.s32 %v3020, 536870912
      %v3022 = vshrl.u32 %v3021, 30
      %v3023 = vshll.u32 %v3022, 30
      %v3024 = vsub.s32 %v3020, %v3023
      %vm3025 = vcmp.lt.s32.totalorder %v3024, 0
      %v3026 = vsub.s32 0, %v3024
      %v3027 = vsel %vm3025, %v3026, %v3024
      %v3028 = vclz %v3027
      %v3029 = vsub.s32 %v3028, 2
      %vm3030 = vcmp.gt.s32.totalorder 0, %v3029
      %v3031 = vsel %vm3030, 0, %v3029
      %v3032 = vsub.s32 32, %v3031
      %v3033 = vshll.u32 %v3024, %v3031
      %v3034 = vshrl.u32 %v3016, %v3032
      %v3035 = vor.u32 %v3033, %v3034
      %v3036 = vsub.s32 4294967266, %v3031
      %v3037 = vadd.s32 %v3036, 127
      %v3038 = vshll.u32 %v3037, 23
      %v3039 = vor.u32 4788187, %v3038
      %v3040 = vand.u32 2147483647, %v3039
      %v3042 = vcvt.s32.f32 %v3035
      %v3043 = vmul.f32 %v3042, %v3040
      %v3044 = vxor.u32 %v3043, 2147483648
      %v3045 = vsel %vm2962, %v3044, %v3043
      %v3046 = vsub.s32 4, %v3022
      %v3047 = vsel %vm2962, %v3046, %v3022
      %v3048 = vsel %vm2961, %v2336, %v3045
      %v3049 = vsel %vm2961, 0, %v3047
      %v3050 = vcosq.f32.pop %v3048
      %v3051 = vsinq.f32.pop %v3048
      %vm3052 = vweird.f32 %v2336
      %v3053 = vand.u32 %v3049, 3
      %vm3054 = vcmp.lt.s32.totalorder %v3053, 2
      %vm3055 = vcmp.eq.s32.totalorder %v3053, 0
      %v3056 = vxor.u32 %v3051, 2147483648
      %v3057 = vsel %vm3055, %v3050, %v3056
      %vm3058 = vcmp.eq.s32.totalorder %v3053, 2
      %v3059 = vxor.u32 %v3050, 2147483648
      %v3060 = vsel %vm3058, %v3059, %v3051
      %v3061 = vsel %vm3054, %v3057, %v3060
      %v3062 = vsel %vm3052, nan, %v3061
      %v3063 = vand.u32 2147483647, %v2337
      %vm3064 = vcmp.le.f32.partialorder %v3063, 0.7853982
      %vm3065 = vcmp.lt.s32.totalorder %v2337, 0
      %v3066 = vand.u32 %v2337, 2139095040
      %v3067 = vshrl.u32 %v3066, 23
      %v3068 = vsub.s32 %v3067, 127
      %v3069 = vand.u32 2147483647, %v2337
      %v3070 = vand.u32 %v3069, 8388607
      %v3071 = vor.u32 %v3070, 8388608
      %v3072 = vsub.s32 0, %v3071
      %v3073 = vadd.s32 %v3068, 1
      %vm3074 = vcmp.gt.s32.totalorder %v3073, 0
      %v3075 = vsel %vm3074, %v3073, 0
      %v3076 = vshrl.u32 %v3075, 5
      %v3077 = vand.u32 %v3075, 31
      %v3078 = vsub.s32 32, %v3077
      %v3079 = vshrl.u32 683565275, %v3078
      %v3080 = vshll.u32 683565275, %v3077
      %v3081 = vshrl.u32 2475754826, %v3078
      %v3082 = vor.u32 %v3080, %v3081
      %v3083 = vshll.u32 2475754826, %v3077
      %v3084 = vshrl.u32 2131351028, %v3078
      %v3085 = vor.u32 %v3083, %v3084
      %v3086 = vshll.u32 2131351028, %v3077
      %v3087 = vshrl.u32 2102212464, %v3078
      %v3088 = vor.u32 %v3086, %v3087
      %v3089 = vshll.u32 2102212464, %v3077
      %v3090 = vshrl.u32 920167782, %v3078
      %v3091 = vor.u32 %v3089, %v3090
      %v3092 = vshll.u32 920167782, %v3077
      %v3093 = vshrl.u32 1326507024, %v3078
      %v3094 = vor.u32 %v3092, %v3093
      %vm3095 = vcmp.lt.s32.totalorder %v3076, 1
      %vm3096 = vcmp.lt.s32.totalorder %v3076, 2
      %vm3097 = vcmp.lt.s32.totalorder %v3076, 3
      %vm3098 = vcmp.lt.s32.totalorder %v3076, 4
      %v3099 = vsel %vm3095, %v3079, %v3082
      %v3100 = vsel %vm3098, %v3088, 2102212464
      %v3101 = vsel %vm3097, %v3085, %v3100
      %v3102 = vsel %vm3096, %v3099, %v3101
      %v3103 = vsel %vm3095, %v3082, %v3085
      %v3104 = vsel %vm3098, %v3091, 920167782
      %v3105 = vsel %vm3097, %v3088, %v3104
      %v3106 = vsel %vm3096, %v3103, %v3105
      %v3107 = vsel %vm3095, %v3085, %v3088
      %v3108 = vsel %vm3098, %v3094, 1326507024
      %v3109 = vsel %vm3097, %v3091, %v3108
      %v3110 = vsel %vm3096, %v3107, %v3109
      %v3111 = vshll.u32 %v3071, 8
      %v3112 = vmul.u32.u64.compose %v3111, %v3110
      %v3113 = vextract.low.u32 %v3112
      %v3114 = vextract.high.u32 %v3112
      %v3115 = vmul.u32.u64.compose %v3111, %v3106
      %v3116 = vextract.low.u32 %v3115
      %v3117 = vextract.high.u32 %v3115
      %v3118 = vmul.u32 %v3111, %v3102
      %v3119 = vadd.s32 %v3114, %v3116
      %vm3120 = vc.u32 %v3114, %v3116
      %v3121 = vadd.s32 %v3117, 1
      %v3122 = vsel %vm3120, %v3121, %v3117
      %v3123 = vadd.s32 %v3118, %v3122
      %v3124 = vadd.s32 %v3123, 536870912
      %v3125 = vshrl.u32 %v3124, 30
      %v3126 = vshll.u32 %v3125, 30
      %v3127 = vsub.s32 %v3123, %v3126
      %vm3128 = vcmp.lt.s32.totalorder %v3127, 0
      %v3129 = vsub.s32 0, %v3127
      %v3130 = vsel %vm3128, %v3129, %v3127
      %v3131 = vclz %v3130
      %v3132 = vsub.s32 %v3131, 2
      %vm3133 = vcmp.gt.s32.totalorder 0, %v3132
      %v3134 = vsel %vm3133, 0, %v3132
      %v3135 = vsub.s32 32, %v3134
      %v3136 = vshll.u32 %v3127, %v3134
      %v3137 = vshrl.u32 %v3119, %v3135
      %v3138 = vor.u32 %v3136, %v3137
      %v3139 = vsub.s32 4294967266, %v3134
      %v3140 = vadd.s32 %v3139, 127
      %v3141 = vshll.u32 %v3140, 23
      %v3142 = vor.u32 4788187, %v3141
      %v3143 = vand.u32 2147483647, %v3142
      %v3145 = vcvt.s32.f32 %v3138
      %v3146 = vmul.f32 %v3145, %v3143
      %v3147 = vxor.u32 %v3146, 2147483648
      %v3148 = vsel %vm3065, %v3147, %v3146
      %v3149 = vsub.s32 4, %v3125
      %v3150 = vsel %vm3065, %v3149, %v3125
      %v3151 = vsel %vm3064, %v2337, %v3148
      %v3152 = vsel %vm3064, 0, %v3150
      %v3153 = vcosq.f32.pop %v3151
      %v3154 = vsinq.f32.pop %v3151
      %vm3155 = vweird.f32 %v2337
      %v3156 = vand.u32 %v3152, 3
      %vm3157 = vcmp.lt.s32.totalorder %v3156, 2
      %vm3158 = vcmp.eq.s32.totalorder %v3156, 0
      %v3159 = vxor.u32 %v3154, 2147483648
      %v3160 = vsel %vm3158, %v3153, %v3159
      %vm3161 = vcmp.eq.s32.totalorder %v3156, 2
      %v3162 = vxor.u32 %v3153, 2147483648
      %v3163 = vsel %vm3161, %v3162, %v3154
      %v3164 = vsel %vm3157, %v3160, %v3163
      %v3165 = vsel %vm3155, nan, %v3164
      %v3170 = vcombine.high %v2441, %v2441
      %v3171 = vcombine.high %v2545, %v2545
      %v3172 = vcombine.high %v2649, %v2649
      %v3173 = vcombine.high %v2753, %v2753
      %v3174 = vrot.slane %v2441, 5
      %v3175 = vrot.slane %v3170, 5
      %v3176 = vrot.slane %v2545, 5
      %v3177 = vrot.slane %v3171, 5
      %v3178 = vrot.slane %v2649, 5
      %v3179 = vrot.slane %v3172, 5
      %v3180 = vrot.slane %v2753, 5
      %v3181 = vrot.slane %v3173, 5
      %3190 = vst [vmem:[#allocation2 + $0x180] sm:$0x38] %v3174
      %3191 = vst [vmem:[#allocation2 + $0x188] sm:$0x38] %v3175
      %3192 = vst [vmem:[#allocation2 + $0x190] sm:$0x38] %v3176
      %3193 = vst [vmem:[#allocation2 + $0x198] sm:$0x38] %v3177
      %3194 = vst [vmem:[#allocation2 + $0x1a0] sm:$0x38] %v3178
      %3195 = vst [vmem:[#allocation2 + $0x1a8] sm:$0x38] %v3179
      %3196 = vst [vmem:[#allocation2 + $0x1b0] sm:$0x38] %v3180
      %3197 = vst [vmem:[#allocation2 + $0x1b8] sm:$0x38] %v3181
      %v3202 = vcombine.high %v2856, %v2856
      %v3203 = vcombine.high %v2959, %v2959
      %v3204 = vcombine.high %v3062, %v3062
      %v3205 = vcombine.high %v3165, %v3165
      %v3206 = vrot.slane %v2856, 2
      %v3207 = vrot.slane %v3202, 2
      %v3208 = vrot.slane %v2959, 2
      %v3209 = vrot.slane %v3203, 2
      %v3210 = vrot.slane %v3062, 2
      %v3211 = vrot.slane %v3204, 2
      %v3212 = vrot.slane %v3165, 2
      %v3213 = vrot.slane %v3205, 2
      %3222 = vst [vmem:[#allocation2 + $0x180] sm:$0xc0] %v3206
      %3223 = vst [vmem:[#allocation2 + $0x188] sm:$0xc0] %v3207
      %3224 = vst [vmem:[#allocation2 + $0x190] sm:$0xc0] %v3208
      %3225 = vst [vmem:[#allocation2 + $0x198] sm:$0xc0] %v3209
      %3226 = vst [vmem:[#allocation2 + $0x1a0] sm:$0xc0] %v3210
      %3227 = vst [vmem:[#allocation2 + $0x1a8] sm:$0xc0] %v3211
      %3228 = vst [vmem:[#allocation2 + $0x1b0] sm:$0xc0] %v3212
      %3229 = vst [vmem:[#allocation2 + $0x1b8] sm:$0xc0] %v3213
      %3230 = vst [vmem:[#allocation2 + $0x1c0] sm:$0x1] %v3206
      %3231 = vst [vmem:[#allocation2 + $0x1c8] sm:$0x1] %v3207
      %3232 = vst [vmem:[#allocation2 + $0x1d0] sm:$0x1] %v3208
      %3233 = vst [vmem:[#allocation2 + $0x1d8] sm:$0x1] %v3209
      %3234 = vst [vmem:[#allocation2 + $0x1e0] sm:$0x1] %v3210
      %3235 = vst [vmem:[#allocation2 + $0x1e8] sm:$0x1] %v3211
      %3236 = vst [vmem:[#allocation2 + $0x1f0] sm:$0x1] %v3212
      %3237 = vst [vmem:[#allocation2 + $0x1f8] sm:$0x1] %v3213
      %v3238 = vmul.f32 %v2441, %v2856
      %v3239 = vmul.f32 %v2545, %v2959
      %v3240 = vmul.f32 %v2649, %v3062
      %v3241 = vmul.f32 %v2753, %v3165
      %v3242 = vmul.f32 %v3238, 2.0
      %v3243 = vmul.f32 %v3239, 2.0
      %v3244 = vmul.f32 %v3240, 2.0
      %v3245 = vmul.f32 %v3241, 2.0
      %v3246 = vmul.f32 %v2441, %v2441
      %v3247 = vmul.f32 %v2545, %v2545
      %v3248 = vmul.f32 %v2649, %v2649
      %v3249 = vmul.f32 %v2753, %v2753
      %v3250 = vmul.f32 %v3246, 2.0
      %v3251 = vmul.f32 %v3247, 2.0
      %v3252 = vmul.f32 %v3248, 2.0
      %v3253 = vmul.f32 %v3249, 2.0
      %v3254 = vsub.f32 1.0, %v3250
      %v3255 = vsub.f32 1.0, %v3251
      %v3256 = vsub.f32 1.0, %v3252
      %v3257 = vsub.f32 1.0, %v3253
      %v3262 = vcombine.high %v3242, %v3242
      %v3263 = vcombine.high %v3243, %v3243
      %v3264 = vcombine.high %v3244, %v3244
      %v3265 = vcombine.high %v3245, %v3245
      %v3266 = vrot.slane %v3242, 7
      %v3267 = vrot.slane %v3262, 7
      %v3268 = vrot.slane %v3243, 7
      %v3269 = vrot.slane %v3263, 7
      %v3270 = vrot.slane %v3244, 7
      %v3271 = vrot.slane %v3264, 7
      %v3272 = vrot.slane %v3245, 7
      %v3273 = vrot.slane %v3265, 7
      %3282 = vst [vmem:[#allocation2 + $0x1c0] sm:$0xe] %v3266
      %3283 = vst [vmem:[#allocation2 + $0x1c8] sm:$0xe] %v3267
      %3284 = vst [vmem:[#allocation2 + $0x1d0] sm:$0xe] %v3268
      %3285 = vst [vmem:[#allocation2 + $0x1d8] sm:$0xe] %v3269
      %3286 = vst [vmem:[#allocation2 + $0x1e0] sm:$0xe] %v3270
      %3287 = vst [vmem:[#allocation2 + $0x1e8] sm:$0xe] %v3271
      %3288 = vst [vmem:[#allocation2 + $0x1f0] sm:$0xe] %v3272
      %3289 = vst [vmem:[#allocation2 + $0x1f8] sm:$0xe] %v3273
      %v3294 = vcombine.low %v3254, %v3254
      %v3295 = vcombine.low %v3255, %v3255
      %v3296 = vcombine.low %v3256, %v3256
      %v3297 = vcombine.low %v3257, %v3257
      %3302 = vst [vmem:[#allocation2 + $0x1c0] sm:$0x70] %v3294
      %3303 = vst [vmem:[#allocation2 + $0x1c8] sm:$0x70] %v3254
      %3304 = vst [vmem:[#allocation2 + $0x1d0] sm:$0x70] %v3295
      %3305 = vst [vmem:[#allocation2 + $0x1d8] sm:$0x70] %v3255
      %3306 = vst [vmem:[#allocation2 + $0x1e0] sm:$0x70] %v3296
      %3307 = vst [vmem:[#allocation2 + $0x1e8] sm:$0x70] %v3256
      %3308 = vst [vmem:[#allocation2 + $0x1f0] sm:$0x70] %v3297
      %3309 = vst [vmem:[#allocation2 + $0x1f8] sm:$0x70] %v3257
      %v3310 = vld [vmem:[#allocation2] sm:$0xff]
      %v3311 = vld [vmem:[#allocation2 + $0x40] sm:$0xff]
      %v3312 = vld [vmem:[#allocation2 + $0x80] sm:$0xff]
      %v3313 = vld [vmem:[#allocation2 + $0xc0] sm:$0xff]
      %v3314 = vld [vmem:[#allocation2 + $0x100] sm:$0xff]
      %v3315 = vld [vmem:[#allocation2 + $0x140] sm:$0xff]
      %v3316 = vld [vmem:[#allocation2 + $0x180] sm:$0xff]
      %v3317 = vld [vmem:[#allocation2 + $0x1c0] sm:$0xff]
      %3318 = vxpose.xlu0.b32.start [1/16] %v3310, 128
      %3319 = vxpose.xlu0.b32.cont [2/16] %v3311, 128
      %3320 = vxpose.xlu0.b32.cont [3/16] %v3312, 128
      %3321 = vxpose.xlu0.b32.cont [4/16] %v3313, 128
      %3322 = vxpose.xlu0.b32.cont [5/16] %v3314, 128
      %3323 = vxpose.xlu0.b32.cont [6/16] %v3315, 128
      %3324 = vxpose.xlu0.b32.cont [7/16] %v3316, 128
      %3325 = vxpose.xlu0.b32.cont [8/16] %v3317, 128
      %3326 = vxpose.xlu0.b32.cont [9/16] 0.0, 128
      %3327 = vxpose.xlu0.b32.cont [10/16] 0.0, 128
      %3328 = vxpose.xlu0.b32.cont [11/16] 0.0, 128
      %3329 = vxpose.xlu0.b32.cont [12/16] 0.0, 128
      %3330 = vxpose.xlu0.b32.cont [13/16] 0.0, 128
      %3331 = vxpose.xlu0.b32.cont [14/16] 0.0, 128
      %3332 = vxpose.xlu0.b32.cont [15/16] 0.0, 128
      %3333 = vxpose.xlu0.b32.end [16/16] 0.0, 128
      %v3334 = vpop.trf.xlu0
      %v3335 = vpop.trf.xlu0
      %v3336 = vpop.trf.xlu0
      %v3337 = vpop.trf.xlu0
      %v3338 = vpop.trf.xlu0
      %v3339 = vpop.trf.xlu0
      %v3340 = vpop.trf.xlu0
      %v3341 = vpop.trf.xlu0
      %v3342 = vpop.trf.xlu0
      %v3343 = vpop.trf.xlu0
      %v3344 = vpop.trf.xlu0
      %v3345 = vpop.trf.xlu0
      %v3346 = vpop.trf.xlu0
      %v3347 = vpop.trf.xlu0
      %v3348 = vpop.trf.xlu0
      %v3349 = vpop.trf.xlu0
      %s3350 = scalar_lea.vmem %s1, %s29
      %vm3351 = vcmask 515072
      %3352 = vst.msk [vmem:[%s3350] sm:$0xff] %vm3351, %v3334
      %3353 = vst.msk [vmem:[%s3350 + $0x8] sm:$0xff] %vm3351, %v3335
      %3354 = vst.msk [vmem:[%s3350 + $0x10] sm:$0xff] %vm3351, %v3336
      %3355 = vst.msk [vmem:[%s3350 + $0x18] sm:$0xff] %vm3351, %v3337
      %3356 = vst.msk [vmem:[%s3350 + $0x20] sm:$0xff] %vm3351, %v3338
      %3357 = vst.msk [vmem:[%s3350 + $0x28] sm:$0xff] %vm3351, %v3339
      %3358 = vst.msk [vmem:[%s3350 + $0x30] sm:$0xff] %vm3351, %v3340
      %3359 = vst.msk [vmem:[%s3350 + $0x38] sm:$0xff] %vm3351, %v3341
      %3360 = vst.msk [vmem:[%s3350 + $0x40] sm:$0xff] %vm3351, %v3342
      %3361 = vst.msk [vmem:[%s3350 + $0x48] sm:$0xff] %vm3351, %v3343
      %3362 = vst.msk [vmem:[%s3350 + $0x50] sm:$0xff] %vm3351, %v3344
      %3363 = vst.msk [vmem:[%s3350 + $0x58] sm:$0xff] %vm3351, %v3345
      %3364 = vst.msk [vmem:[%s3350 + $0x60] sm:$0xff] %vm3351, %v3346
      %3365 = vst.msk [vmem:[%s3350 + $0x68] sm:$0xff] %vm3351, %v3347
      %3366 = vst.msk [vmem:[%s3350 + $0x70] sm:$0xff] %vm3351, %v3348
      %3367 = vst.msk [vmem:[%s3350 + $0x78] sm:$0xff] %vm3351, %v3349
      %v3368 = vld [vmem:[#allocation2 + $0x8] sm:$0xff]
      %v3369 = vld [vmem:[#allocation2 + $0x48] sm:$0xff]
      %v3370 = vld [vmem:[#allocation2 + $0x88] sm:$0xff]
      %v3371 = vld [vmem:[#allocation2 + $0xc8] sm:$0xff]
      %v3372 = vld [vmem:[#allocation2 + $0x108] sm:$0xff]
      %v3373 = vld [vmem:[#allocation2 + $0x148] sm:$0xff]
      %v3374 = vld [vmem:[#allocation2 + $0x188] sm:$0xff]
      %v3375 = vld [vmem:[#allocation2 + $0x1c8] sm:$0xff]
      %3376 = vxpose.xlu0.b32.start [1/16] %v3368, 128
      %3377 = vxpose.xlu0.b32.cont [2/16] %v3369, 128
      %3378 = vxpose.xlu0.b32.cont [3/16] %v3370, 128
      %3379 = vxpose.xlu0.b32.cont [4/16] %v3371, 128
      %3380 = vxpose.xlu0.b32.cont [5/16] %v3372, 128
      %3381 = vxpose.xlu0.b32.cont [6/16] %v3373, 128
      %3382 = vxpose.xlu0.b32.cont [7/16] %v3374, 128
      %3383 = vxpose.xlu0.b32.cont [8/16] %v3375, 128
      %3384 = vxpose.xlu0.b32.cont [9/16] 0.0, 128
      %3385 = vxpose.xlu0.b32.cont [10/16] 0.0, 128
      %3386 = vxpose.xlu0.b32.cont [11/16] 0.0, 128
      %3387 = vxpose.xlu0.b32.cont [12/16] 0.0, 128
      %3388 = vxpose.xlu0.b32.cont [13/16] 0.0, 128
      %3389 = vxpose.xlu0.b32.cont [14/16] 0.0, 128
      %3390 = vxpose.xlu0.b32.cont [15/16] 0.0, 128
      %3391 = vxpose.xlu0.b32.end [16/16] 0.0, 128
      %v3392 = vpop.trf.xlu0
      %v3393 = vpop.trf.xlu0
      %v3394 = vpop.trf.xlu0
      %v3395 = vpop.trf.xlu0
      %v3396 = vpop.trf.xlu0
      %v3397 = vpop.trf.xlu0
      %v3398 = vpop.trf.xlu0
      %v3399 = vpop.trf.xlu0
      %v3400 = vpop.trf.xlu0
      %v3401 = vpop.trf.xlu0
      %v3402 = vpop.trf.xlu0
      %v3403 = vpop.trf.xlu0
      %v3404 = vpop.trf.xlu0
      %v3405 = vpop.trf.xlu0
      %v3406 = vpop.trf.xlu0
      %v3407 = vpop.trf.xlu0
      %s3408 = sadd.s32 %s29, 128
      %s3409 = scalar_lea.vmem %s1, %s3408
      %3410 = vst.msk [vmem:[%s3409] sm:$0xff] %vm3351, %v3392
      %3411 = vst.msk [vmem:[%s3409 + $0x8] sm:$0xff] %vm3351, %v3393
      %3412 = vst.msk [vmem:[%s3409 + $0x10] sm:$0xff] %vm3351, %v3394
      %3413 = vst.msk [vmem:[%s3409 + $0x18] sm:$0xff] %vm3351, %v3395
      %3414 = vst.msk [vmem:[%s3409 + $0x20] sm:$0xff] %vm3351, %v3396
      %3415 = vst.msk [vmem:[%s3409 + $0x28] sm:$0xff] %vm3351, %v3397
      %3416 = vst.msk [vmem:[%s3409 + $0x30] sm:$0xff] %vm3351, %v3398
      %3417 = vst.msk [vmem:[%s3409 + $0x38] sm:$0xff] %vm3351, %v3399
      %3418 = vst.msk [vmem:[%s3409 + $0x40] sm:$0xff] %vm3351, %v3400
      %3419 = vst.msk [vmem:[%s3409 + $0x48] sm:$0xff] %vm3351, %v3401
      %3420 = vst.msk [vmem:[%s3409 + $0x50] sm:$0xff] %vm3351, %v3402
      %3421 = vst.msk [vmem:[%s3409 + $0x58] sm:$0xff] %vm3351, %v3403
      %3422 = vst.msk [vmem:[%s3409 + $0x60] sm:$0xff] %vm3351, %v3404
      %3423 = vst.msk [vmem:[%s3409 + $0x68] sm:$0xff] %vm3351, %v3405
      %3424 = vst.msk [vmem:[%s3409 + $0x70] sm:$0xff] %vm3351, %v3406
      %3425 = vst.msk [vmem:[%s3409 + $0x78] sm:$0xff] %vm3351, %v3407
      %v3426 = vld [vmem:[#allocation2 + $0x10] sm:$0xff]
      %v3427 = vld [vmem:[#allocation2 + $0x50] sm:$0xff]
      %v3428 = vld [vmem:[#allocation2 + $0x90] sm:$0xff]
      %v3429 = vld [vmem:[#allocation2 + $0xd0] sm:$0xff]
      %v3430 = vld [vmem:[#allocation2 + $0x110] sm:$0xff]
      %v3431 = vld [vmem:[#allocation2 + $0x150] sm:$0xff]
      %v3432 = vld [vmem:[#allocation2 + $0x190] sm:$0xff]
      %v3433 = vld [vmem:[#allocation2 + $0x1d0] sm:$0xff]
      %3434 = vxpose.xlu0.b32.start [1/16] %v3426, 128
      %3435 = vxpose.xlu0.b32.cont [2/16] %v3427, 128
      %3436 = vxpose.xlu0.b32.cont [3/16] %v3428, 128
      %3437 = vxpose.xlu0.b32.cont [4/16] %v3429, 128
      %3438 = vxpose.xlu0.b32.cont [5/16] %v3430, 128
      %3439 = vxpose.xlu0.b32.cont [6/16] %v3431, 128
      %3440 = vxpose.xlu0.b32.cont [7/16] %v3432, 128
      %3441 = vxpose.xlu0.b32.cont [8/16] %v3433, 128
      %3442 = vxpose.xlu0.b32.cont [9/16] 0.0, 128
      %3443 = vxpose.xlu0.b32.cont [10/16] 0.0, 128
      %3444 = vxpose.xlu0.b32.cont [11/16] 0.0, 128
      %3445 = vxpose.xlu0.b32.cont [12/16] 0.0, 128
      %3446 = vxpose.xlu0.b32.cont [13/16] 0.0, 128
      %3447 = vxpose.xlu0.b32.cont [14/16] 0.0, 128
      %3448 = vxpose.xlu0.b32.cont [15/16] 0.0, 128
      %3449 = vxpose.xlu0.b32.end [16/16] 0.0, 128
      %v3450 = vpop.trf.xlu0
      %v3451 = vpop.trf.xlu0
      %v3452 = vpop.trf.xlu0
      %v3453 = vpop.trf.xlu0
      %v3454 = vpop.trf.xlu0
      %v3455 = vpop.trf.xlu0
      %v3456 = vpop.trf.xlu0
      %v3457 = vpop.trf.xlu0
      %v3458 = vpop.trf.xlu0
      %v3459 = vpop.trf.xlu0
      %v3460 = vpop.trf.xlu0
      %v3461 = vpop.trf.xlu0
      %v3462 = vpop.trf.xlu0
      %v3463 = vpop.trf.xlu0
      %v3464 = vpop.trf.xlu0
      %v3465 = vpop.trf.xlu0
      %s3466 = sadd.s32 %s29, 256
      %s3467 = scalar_lea.vmem %s1, %s3466
      %3468 = vst.msk [vmem:[%s3467] sm:$0xff] %vm3351, %v3450
      %3469 = vst.msk [vmem:[%s3467 + $0x8] sm:$0xff] %vm3351, %v3451
      %3470 = vst.msk [vmem:[%s3467 + $0x10] sm:$0xff] %vm3351, %v3452
      %3471 = vst.msk [vmem:[%s3467 + $0x18] sm:$0xff] %vm3351, %v3453
      %3472 = vst.msk [vmem:[%s3467 + $0x20] sm:$0xff] %vm3351, %v3454
      %3473 = vst.msk [vmem:[%s3467 + $0x28] sm:$0xff] %vm3351, %v3455
      %3474 = vst.msk [vmem:[%s3467 + $0x30] sm:$0xff] %vm3351, %v3456
      %3475 = vst.msk [vmem:[%s3467 + $0x38] sm:$0xff] %vm3351, %v3457
      %3476 = vst.msk [vmem:[%s3467 + $0x40] sm:$0xff] %vm3351, %v3458
      %3477 = vst.msk [vmem:[%s3467 + $0x48] sm:$0xff] %vm3351, %v3459
      %3478 = vst.msk [vmem:[%s3467 + $0x50] sm:$0xff] %vm3351, %v3460
      %3479 = vst.msk [vmem:[%s3467 + $0x58] sm:$0xff] %vm3351, %v3461
      %3480 = vst.msk [vmem:[%s3467 + $0x60] sm:$0xff] %vm3351, %v3462
      %3481 = vst.msk [vmem:[%s3467 + $0x68] sm:$0xff] %vm3351, %v3463
      %3482 = vst.msk [vmem:[%s3467 + $0x70] sm:$0xff] %vm3351, %v3464
      %3483 = vst.msk [vmem:[%s3467 + $0x78] sm:$0xff] %vm3351, %v3465
      %v3484 = vld [vmem:[#allocation2 + $0x18] sm:$0xff]
      %v3485 = vld [vmem:[#allocation2 + $0x58] sm:$0xff]
      %v3486 = vld [vmem:[#allocation2 + $0x98] sm:$0xff]
      %v3487 = vld [vmem:[#allocation2 + $0xd8] sm:$0xff]
      %v3488 = vld [vmem:[#allocation2 + $0x118] sm:$0xff]
      %v3489 = vld [vmem:[#allocation2 + $0x158] sm:$0xff]
      %v3490 = vld [vmem:[#allocation2 + $0x198] sm:$0xff]
      %v3491 = vld [vmem:[#allocation2 + $0x1d8] sm:$0xff]
      %3492 = vxpose.xlu0.b32.start [1/16] %v3484, 128
      %3493 = vxpose.xlu0.b32.cont [2/16] %v3485, 128
      %3494 = vxpose.xlu0.b32.cont [3/16] %v3486, 128
      %3495 = vxpose.xlu0.b32.cont [4/16] %v3487, 128
      %3496 = vxpose.xlu0.b32.cont [5/16] %v3488, 128
      %3497 = vxpose.xlu0.b32.cont [6/16] %v3489, 128
      %3498 = vxpose.xlu0.b32.cont [7/16] %v3490, 128
      %3499 = vxpose.xlu0.b32.cont [8/16] %v3491, 128
      %3500 = vxpose.xlu0.b32.cont [9/16] 0.0, 128
      %3501 = vxpose.xlu0.b32.cont [10/16] 0.0, 128
      %3502 = vxpose.xlu0.b32.cont [11/16] 0.0, 128
      %3503 = vxpose.xlu0.b32.cont [12/16] 0.0, 128
      %3504 = vxpose.xlu0.b32.cont [13/16] 0.0, 128
      %3505 = vxpose.xlu0.b32.cont [14/16] 0.0, 128
      %3506 = vxpose.xlu0.b32.cont [15/16] 0.0, 128
      %3507 = vxpose.xlu0.b32.end [16/16] 0.0, 128
      %v3508 = vpop.trf.xlu0
      %v3509 = vpop.trf.xlu0
      %v3510 = vpop.trf.xlu0
      %v3511 = vpop.trf.xlu0
      %v3512 = vpop.trf.xlu0
      %v3513 = vpop.trf.xlu0
      %v3514 = vpop.trf.xlu0
      %v3515 = vpop.trf.xlu0
      %v3516 = vpop.trf.xlu0
      %v3517 = vpop.trf.xlu0
      %v3518 = vpop.trf.xlu0
      %v3519 = vpop.trf.xlu0
      %v3520 = vpop.trf.xlu0
      %v3521 = vpop.trf.xlu0
      %v3522 = vpop.trf.xlu0
      %v3523 = vpop.trf.xlu0
      %s3524 = sadd.s32 %s29, 384
      %s3525 = scalar_lea.vmem %s1, %s3524
      %3526 = vst.msk [vmem:[%s3525] sm:$0xff] %vm3351, %v3508
      %3527 = vst.msk [vmem:[%s3525 + $0x8] sm:$0xff] %vm3351, %v3509
      %3528 = vst.msk [vmem:[%s3525 + $0x10] sm:$0xff] %vm3351, %v3510
      %3529 = vst.msk [vmem:[%s3525 + $0x18] sm:$0xff] %vm3351, %v3511
      %3530 = vst.msk [vmem:[%s3525 + $0x20] sm:$0xff] %vm3351, %v3512
      %3531 = vst.msk [vmem:[%s3525 + $0x28] sm:$0xff] %vm3351, %v3513
      %3532 = vst.msk [vmem:[%s3525 + $0x30] sm:$0xff] %vm3351, %v3514
      %3533 = vst.msk [vmem:[%s3525 + $0x38] sm:$0xff] %vm3351, %v3515
      %3534 = vst.msk [vmem:[%s3525 + $0x40] sm:$0xff] %vm3351, %v3516
      %3535 = vst.msk [vmem:[%s3525 + $0x48] sm:$0xff] %vm3351, %v3517
      %3536 = vst.msk [vmem:[%s3525 + $0x50] sm:$0xff] %vm3351, %v3518
      %3537 = vst.msk [vmem:[%s3525 + $0x58] sm:$0xff] %vm3351, %v3519
      %3538 = vst.msk [vmem:[%s3525 + $0x60] sm:$0xff] %vm3351, %v3520
      %3539 = vst.msk [vmem:[%s3525 + $0x68] sm:$0xff] %vm3351, %v3521
      %3540 = vst.msk [vmem:[%s3525 + $0x70] sm:$0xff] %vm3351, %v3522
      %3541 = vst.msk [vmem:[%s3525 + $0x78] sm:$0xff] %vm3351, %v3523
      %v3542 = vld [vmem:[#allocation2 + $0x20] sm:$0xff]
      %v3543 = vld [vmem:[#allocation2 + $0x60] sm:$0xff]
      %v3544 = vld [vmem:[#allocation2 + $0xa0] sm:$0xff]
      %v3545 = vld [vmem:[#allocation2 + $0xe0] sm:$0xff]
      %v3546 = vld [vmem:[#allocation2 + $0x120] sm:$0xff]
      %v3547 = vld [vmem:[#allocation2 + $0x160] sm:$0xff]
      %v3548 = vld [vmem:[#allocation2 + $0x1a0] sm:$0xff]
      %v3549 = vld [vmem:[#allocation2 + $0x1e0] sm:$0xff]
      %3550 = vxpose.xlu0.b32.start [1/16] %v3542, 128
      %3551 = vxpose.xlu0.b32.cont [2/16] %v3543, 128
      %3552 = vxpose.xlu0.b32.cont [3/16] %v3544, 128
      %3553 = vxpose.xlu0.b32.cont [4/16] %v3545, 128
      %3554 = vxpose.xlu0.b32.cont [5/16] %v3546, 128
      %3555 = vxpose.xlu0.b32.cont [6/16] %v3547, 128
      %3556 = vxpose.xlu0.b32.cont [7/16] %v3548, 128
      %3557 = vxpose.xlu0.b32.cont [8/16] %v3549, 128
      %3558 = vxpose.xlu0.b32.cont [9/16] 0.0, 128
      %3559 = vxpose.xlu0.b32.cont [10/16] 0.0, 128
      %3560 = vxpose.xlu0.b32.cont [11/16] 0.0, 128
      %3561 = vxpose.xlu0.b32.cont [12/16] 0.0, 128
      %3562 = vxpose.xlu0.b32.cont [13/16] 0.0, 128
      %3563 = vxpose.xlu0.b32.cont [14/16] 0.0, 128
      %3564 = vxpose.xlu0.b32.cont [15/16] 0.0, 128
      %3565 = vxpose.xlu0.b32.end [16/16] 0.0, 128
      %v3566 = vpop.trf.xlu0
      %v3567 = vpop.trf.xlu0
      %v3568 = vpop.trf.xlu0
      %v3569 = vpop.trf.xlu0
      %v3570 = vpop.trf.xlu0
      %v3571 = vpop.trf.xlu0
      %v3572 = vpop.trf.xlu0
      %v3573 = vpop.trf.xlu0
      %v3574 = vpop.trf.xlu0
      %v3575 = vpop.trf.xlu0
      %v3576 = vpop.trf.xlu0
      %v3577 = vpop.trf.xlu0
      %v3578 = vpop.trf.xlu0
      %v3579 = vpop.trf.xlu0
      %v3580 = vpop.trf.xlu0
      %v3581 = vpop.trf.xlu0
      %s3582 = sadd.s32 %s29, 512
      %s3583 = scalar_lea.vmem %s1, %s3582
      %3584 = vst.msk [vmem:[%s3583] sm:$0xff] %vm3351, %v3566
      %3585 = vst.msk [vmem:[%s3583 + $0x8] sm:$0xff] %vm3351, %v3567
      %3586 = vst.msk [vmem:[%s3583 + $0x10] sm:$0xff] %vm3351, %v3568
      %3587 = vst.msk [vmem:[%s3583 + $0x18] sm:$0xff] %vm3351, %v3569
      %3588 = vst.msk [vmem:[%s3583 + $0x20] sm:$0xff] %vm3351, %v3570
      %3589 = vst.msk [vmem:[%s3583 + $0x28] sm:$0xff] %vm3351, %v3571
      %3590 = vst.msk [vmem:[%s3583 + $0x30] sm:$0xff] %vm3351, %v3572
      %3591 = vst.msk [vmem:[%s3583 + $0x38] sm:$0xff] %vm3351, %v3573
      %3592 = vst.msk [vmem:[%s3583 + $0x40] sm:$0xff] %vm3351, %v3574
      %3593 = vst.msk [vmem:[%s3583 + $0x48] sm:$0xff] %vm3351, %v3575
      %3594 = vst.msk [vmem:[%s3583 + $0x50] sm:$0xff] %vm3351, %v3576
      %3595 = vst.msk [vmem:[%s3583 + $0x58] sm:$0xff] %vm3351, %v3577
      %3596 = vst.msk [vmem:[%s3583 + $0x60] sm:$0xff] %vm3351, %v3578
      %3597 = vst.msk [vmem:[%s3583 + $0x68] sm:$0xff] %vm3351, %v3579
      %3598 = vst.msk [vmem:[%s3583 + $0x70] sm:$0xff] %vm3351, %v3580
      %3599 = vst.msk [vmem:[%s3583 + $0x78] sm:$0xff] %vm3351, %v3581
      %v3600 = vld [vmem:[#allocation2 + $0x28] sm:$0xff]
      %v3601 = vld [vmem:[#allocation2 + $0x68] sm:$0xff]
      %v3602 = vld [vmem:[#allocation2 + $0xa8] sm:$0xff]
      %v3603 = vld [vmem:[#allocation2 + $0xe8] sm:$0xff]
      %v3604 = vld [vmem:[#allocation2 + $0x128] sm:$0xff]
      %v3605 = vld [vmem:[#allocation2 + $0x168] sm:$0xff]
      %v3606 = vld [vmem:[#allocation2 + $0x1a8] sm:$0xff]
      %v3607 = vld [vmem:[#allocation2 + $0x1e8] sm:$0xff]
      %3608 = vxpose.xlu0.b32.start [1/16] %v3600, 128
      %3609 = vxpose.xlu0.b32.cont [2/16] %v3601, 128
      %3610 = vxpose.xlu0.b32.cont [3/16] %v3602, 128
      %3611 = vxpose.xlu0.b32.cont [4/16] %v3603, 128
      %3612 = vxpose.xlu0.b32.cont [5/16] %v3604, 128
      %3613 = vxpose.xlu0.b32.cont [6/16] %v3605, 128
      %3614 = vxpose.xlu0.b32.cont [7/16] %v3606, 128
      %3615 = vxpose.xlu0.b32.cont [8/16] %v3607, 128
      %3616 = vxpose.xlu0.b32.cont [9/16] 0.0, 128
      %3617 = vxpose.xlu0.b32.cont [10/16] 0.0, 128
      %3618 = vxpose.xlu0.b32.cont [11/16] 0.0, 128
      %3619 = vxpose.xlu0.b32.cont [12/16] 0.0, 128
      %3620 = vxpose.xlu0.b32.cont [13/16] 0.0, 128
      %3621 = vxpose.xlu0.b32.cont [14/16] 0.0, 128
      %3622 = vxpose.xlu0.b32.cont [15/16] 0.0, 128
      %3623 = vxpose.xlu0.b32.end [16/16] 0.0, 128
      %v3624 = vpop.trf.xlu0
      %v3625 = vpop.trf.xlu0
      %v3626 = vpop.trf.xlu0
      %v3627 = vpop.trf.xlu0
      %v3628 = vpop.trf.xlu0
      %v3629 = vpop.trf.xlu0
      %v3630 = vpop.trf.xlu0
      %v3631 = vpop.trf.xlu0
      %v3632 = vpop.trf.xlu0
      %v3633 = vpop.trf.xlu0
      %v3634 = vpop.trf.xlu0
      %v3635 = vpop.trf.xlu0
      %v3636 = vpop.trf.xlu0
      %v3637 = vpop.trf.xlu0
      %v3638 = vpop.trf.xlu0
      %v3639 = vpop.trf.xlu0
      %s3640 = sadd.s32 %s29, 640
      %s3641 = scalar_lea.vmem %s1, %s3640
      %3642 = vst.msk [vmem:[%s3641] sm:$0xff] %vm3351, %v3624
      %3643 = vst.msk [vmem:[%s3641 + $0x8] sm:$0xff] %vm3351, %v3625
      %3644 = vst.msk [vmem:[%s3641 + $0x10] sm:$0xff] %vm3351, %v3626
      %3645 = vst.msk [vmem:[%s3641 + $0x18] sm:$0xff] %vm3351, %v3627
      %3646 = vst.msk [vmem:[%s3641 + $0x20] sm:$0xff] %vm3351, %v3628
      %3647 = vst.msk [vmem:[%s3641 + $0x28] sm:$0xff] %vm3351, %v3629
      %3648 = vst.msk [vmem:[%s3641 + $0x30] sm:$0xff] %vm3351, %v3630
      %3649 = vst.msk [vmem:[%s3641 + $0x38] sm:$0xff] %vm3351, %v3631
      %3650 = vst.msk [vmem:[%s3641 + $0x40] sm:$0xff] %vm3351, %v3632
      %3651 = vst.msk [vmem:[%s3641 + $0x48] sm:$0xff] %vm3351, %v3633
      %3652 = vst.msk [vmem:[%s3641 + $0x50] sm:$0xff] %vm3351, %v3634
      %3653 = vst.msk [vmem:[%s3641 + $0x58] sm:$0xff] %vm3351, %v3635
      %3654 = vst.msk [vmem:[%s3641 + $0x60] sm:$0xff] %vm3351, %v3636
      %3655 = vst.msk [vmem:[%s3641 + $0x68] sm:$0xff] %vm3351, %v3637
      %3656 = vst.msk [vmem:[%s3641 + $0x70] sm:$0xff] %vm3351, %v3638
      %3657 = vst.msk [vmem:[%s3641 + $0x78] sm:$0xff] %vm3351, %v3639
      %v3658 = vld [vmem:[#allocation2 + $0x30] sm:$0xff]
      %v3659 = vld [vmem:[#allocation2 + $0x70] sm:$0xff]
      %v3660 = vld [vmem:[#allocation2 + $0xb0] sm:$0xff]
      %v3661 = vld [vmem:[#allocation2 + $0xf0] sm:$0xff]
      %v3662 = vld [vmem:[#allocation2 + $0x130] sm:$0xff]
      %v3663 = vld [vmem:[#allocation2 + $0x170] sm:$0xff]
      %v3664 = vld [vmem:[#allocation2 + $0x1b0] sm:$0xff]
      %v3665 = vld [vmem:[#allocation2 + $0x1f0] sm:$0xff]
      %3666 = vxpose.xlu0.b32.start [1/16] %v3658, 128
      %3667 = vxpose.xlu0.b32.cont [2/16] %v3659, 128
      %3668 = vxpose.xlu0.b32.cont [3/16] %v3660, 128
      %3669 = vxpose.xlu0.b32.cont [4/16] %v3661, 128
      %3670 = vxpose.xlu0.b32.cont [5/16] %v3662, 128
      %3671 = vxpose.xlu0.b32.cont [6/16] %v3663, 128
      %3672 = vxpose.xlu0.b32.cont [7/16] %v3664, 128
      %3673 = vxpose.xlu0.b32.cont [8/16] %v3665, 128
      %3674 = vxpose.xlu0.b32.cont [9/16] 0.0, 128
      %3675 = vxpose.xlu0.b32.cont [10/16] 0.0, 128
      %3676 = vxpose.xlu0.b32.cont [11/16] 0.0, 128
      %3677 = vxpose.xlu0.b32.cont [12/16] 0.0, 128
      %3678 = vxpose.xlu0.b32.cont [13/16] 0.0, 128
      %3679 = vxpose.xlu0.b32.cont [14/16] 0.0, 128
      %3680 = vxpose.xlu0.b32.cont [15/16] 0.0, 128
      %3681 = vxpose.xlu0.b32.end [16/16] 0.0, 128
      %v3682 = vpop.trf.xlu0
      %v3683 = vpop.trf.xlu0
      %v3684 = vpop.trf.xlu0
      %v3685 = vpop.trf.xlu0
      %v3686 = vpop.trf.xlu0
      %v3687 = vpop.trf.xlu0
      %v3688 = vpop.trf.xlu0
      %v3689 = vpop.trf.xlu0
      %v3690 = vpop.trf.xlu0
      %v3691 = vpop.trf.xlu0
      %v3692 = vpop.trf.xlu0
      %v3693 = vpop.trf.xlu0
      %v3694 = vpop.trf.xlu0
      %v3695 = vpop.trf.xlu0
      %v3696 = vpop.trf.xlu0
      %v3697 = vpop.trf.xlu0
      %s3698 = sadd.s32 %s29, 768
      %s3699 = scalar_lea.vmem %s1, %s3698
      %3700 = vst.msk [vmem:[%s3699] sm:$0xff] %vm3351, %v3682
      %3701 = vst.msk [vmem:[%s3699 + $0x8] sm:$0xff] %vm3351, %v3683
      %3702 = vst.msk [vmem:[%s3699 + $0x10] sm:$0xff] %vm3351, %v3684
      %3703 = vst.msk [vmem:[%s3699 + $0x18] sm:$0xff] %vm3351, %v3685
      %3704 = vst.msk [vmem:[%s3699 + $0x20] sm:$0xff] %vm3351, %v3686
      %3705 = vst.msk [vmem:[%s3699 + $0x28] sm:$0xff] %vm3351, %v3687
      %3706 = vst.msk [vmem:[%s3699 + $0x30] sm:$0xff] %vm3351, %v3688
      %3707 = vst.msk [vmem:[%s3699 + $0x38] sm:$0xff] %vm3351, %v3689
      %3708 = vst.msk [vmem:[%s3699 + $0x40] sm:$0xff] %vm3351, %v3690
      %3709 = vst.msk [vmem:[%s3699 + $0x48] sm:$0xff] %vm3351, %v3691
      %3710 = vst.msk [vmem:[%s3699 + $0x50] sm:$0xff] %vm3351, %v3692
      %3711 = vst.msk [vmem:[%s3699 + $0x58] sm:$0xff] %vm3351, %v3693
      %3712 = vst.msk [vmem:[%s3699 + $0x60] sm:$0xff] %vm3351, %v3694
      %3713 = vst.msk [vmem:[%s3699 + $0x68] sm:$0xff] %vm3351, %v3695
      %3714 = vst.msk [vmem:[%s3699 + $0x70] sm:$0xff] %vm3351, %v3696
      %3715 = vst.msk [vmem:[%s3699 + $0x78] sm:$0xff] %vm3351, %v3697
      %v3716 = vld [vmem:[#allocation2 + $0x38] sm:$0xff]
      %v3717 = vld [vmem:[#allocation2 + $0x78] sm:$0xff]
      %v3718 = vld [vmem:[#allocation2 + $0xb8] sm:$0xff]
      %v3719 = vld [vmem:[#allocation2 + $0xf8] sm:$0xff]
      %v3720 = vld [vmem:[#allocation2 + $0x138] sm:$0xff]
      %v3721 = vld [vmem:[#allocation2 + $0x178] sm:$0xff]
      %v3722 = vld [vmem:[#allocation2 + $0x1b8] sm:$0xff]
      %v3723 = vld [vmem:[#allocation2 + $0x1f8] sm:$0xff]
      %3724 = vxpose.xlu0.b32.start [1/16] %v3716, 128
      %3725 = vxpose.xlu0.b32.cont [2/16] %v3717, 128
      %3726 = vxpose.xlu0.b32.cont [3/16] %v3718, 128
      %3727 = vxpose.xlu0.b32.cont [4/16] %v3719, 128
      %3728 = vxpose.xlu0.b32.cont [5/16] %v3720, 128
      %3729 = vxpose.xlu0.b32.cont [6/16] %v3721, 128
      %3730 = vxpose.xlu0.b32.cont [7/16] %v3722, 128
      %3731 = vxpose.xlu0.b32.cont [8/16] %v3723, 128
      %3732 = vxpose.xlu0.b32.cont [9/16] 0.0, 128
      %3733 = vxpose.xlu0.b32.cont [10/16] 0.0, 128
      %3734 = vxpose.xlu0.b32.cont [11/16] 0.0, 128
      %3735 = vxpose.xlu0.b32.cont [12/16] 0.0, 128
      %3736 = vxpose.xlu0.b32.cont [13/16] 0.0, 128
      %3737 = vxpose.xlu0.b32.cont [14/16] 0.0, 128
      %3738 = vxpose.xlu0.b32.cont [15/16] 0.0, 128
      %3739 = vxpose.xlu0.b32.end [16/16] 0.0, 128
      %v3740 = vpop.trf.xlu0
      %v3741 = vpop.trf.xlu0
      %v3742 = vpop.trf.xlu0
      %v3743 = vpop.trf.xlu0
      %v3744 = vpop.trf.xlu0
      %v3745 = vpop.trf.xlu0
      %v3746 = vpop.trf.xlu0
      %v3747 = vpop.trf.xlu0
      %v3748 = vpop.trf.xlu0
      %v3749 = vpop.trf.xlu0
      %v3750 = vpop.trf.xlu0
      %v3751 = vpop.trf.xlu0
      %v3752 = vpop.trf.xlu0
      %v3753 = vpop.trf.xlu0
      %v3754 = vpop.trf.xlu0
      %v3755 = vpop.trf.xlu0
      %s3756 = sadd.s32 %s29, 896
      %s3757 = scalar_lea.vmem %s1, %s3756
      %3758 = vst.msk [vmem:[%s3757] sm:$0xff] %vm3351, %v3740
      %3759 = vst.msk [vmem:[%s3757 + $0x8] sm:$0xff] %vm3351, %v3741
      %3760 = vst.msk [vmem:[%s3757 + $0x10] sm:$0xff] %vm3351, %v3742
      %3761 = vst.msk [vmem:[%s3757 + $0x18] sm:$0xff] %vm3351, %v3743
      %3762 = vst.msk [vmem:[%s3757 + $0x20] sm:$0xff] %vm3351, %v3744
      %3763 = vst.msk [vmem:[%s3757 + $0x28] sm:$0xff] %vm3351, %v3745
      %3764 = vst.msk [vmem:[%s3757 + $0x30] sm:$0xff] %vm3351, %v3746
      %3765 = vst.msk [vmem:[%s3757 + $0x38] sm:$0xff] %vm3351, %v3747
      %3766 = vst.msk [vmem:[%s3757 + $0x40] sm:$0xff] %vm3351, %v3748
      %3767 = vst.msk [vmem:[%s3757 + $0x48] sm:$0xff] %vm3351, %v3749
      %3768 = vst.msk [vmem:[%s3757 + $0x50] sm:$0xff] %vm3351, %v3750
      %3769 = vst.msk [vmem:[%s3757 + $0x58] sm:$0xff] %vm3351, %v3751
      %3770 = vst.msk [vmem:[%s3757 + $0x60] sm:$0xff] %vm3351, %v3752
      %3771 = vst.msk [vmem:[%s3757 + $0x68] sm:$0xff] %vm3351, %v3753
      %3772 = vst.msk [vmem:[%s3757 + $0x70] sm:$0xff] %vm3351, %v3754
      %3773 = vst.msk [vmem:[%s3757 + $0x78] sm:$0xff] %vm3351, %v3755
    $region14: #{tpu_custom_call.1} parent=1 // loop_footer
      %s28 = sadd.s32 1, %s24
    $region15: #{tpu_custom_call.1} parent=1 // loop_footer_branch
      %23 = sbr.rel target = $region11
    $region16: #{tpu_custom_call.1} parent=1 // loop_exit
      _
    // Predicated region
    $region17: #{tpu_custom_call.1} parent=1 // pred_check
      _
    $region18: #{tpu_custom_call.1} parent=1 // pred_check_branch
      %3775 = sbr.rel (0) target = $region20
    $region19: #{tpu_custom_call.1} parent=1 // pred_region
      _
    $region20: #{tpu_custom_call.1} parent=1 // pred_fallthru
      _
    // Predicated region
    $region21: #{tpu_custom_call.1} parent=1 // pred_check
      _
    $region22: #{tpu_custom_call.1} parent=1 // pred_check_branch
      %3777 = sbr.rel (0) target = $region24
    $region23: #{tpu_custom_call.1} parent=1 // pred_region
      _
    $region24: #{tpu_custom_call.1} parent=1 // pred_fallthru
      _
    %3778 = vsyncpa [#allocation4], 1

</llo_original>
